<compile_context>
chip_gen: v5e
topology: v5e:2x2
jax: 0.10.0
libtpu: 0.0.40
codegen_flags: <defaults>
</compile_context>

<pallas_src>
import functools

import jax
import jax.numpy as jnp
from jax.experimental import pallas as pl
from jax.experimental.pallas import tpu as pltpu


def bilstm_kernel(x12_ref, h0_ref, c0_ref, w_ih_ref, w_hh_ref, b_ref,
                  w_lin_ref, b_lin_ref, out_ref, hs_ref, *, T, Bp, H):
    H2 = 2 * H            # both streams packed along lanes
    G = 8 * H             # 4 gate blocks x 2 streams
    HIGH = jax.lax.Precision.HIGHEST

    # ---- hoisted input projection: one (T*Bp, 2I) @ (2I, 8H) MXU matmul ----
    p = jnp.dot(x12_ref[...], w_ih_ref[...],
                preferred_element_type=jnp.float32,
                precision=HIGH) + b_ref[...]                       # (T*Bp, 8H)

    # Hoist loop-invariant W_hh row broadcasts out of the recurrence.
    w_hh = w_hh_ref[...]                                           # (2H, 8H)
    w_rows = tuple(jnp.broadcast_to(w_hh[k:k + 1, :], (Bp, G)) for k in range(H2))

    h = h0_ref[...]       # (Bp, 2H) = [h1 | h2]
    c = c0_ref[...]       # (Bp, 2H) = [c1 | c2]

    def recur_matvec(hv):
        # h @ W_hh with K = 2H tiny: outer-product FMAs on the VPU (MXU micro
        # matmul is latency-bound on v5e/v6e); pairwise tree-sum keeps the
        # add-chain depth ~log2(2H) instead of 2H.
        terms = [hv[:, k:k + 1] * w_rows[k] for k in range(H2)]
        while len(terms) > 1:
            terms = [terms[i] + terms[i + 1] if i + 1 < len(terms) else terms[i]
                     for i in range(0, len(terms), 2)]
        return terms[0]                                            # (Bp, 8H)

    for t in range(T):    # fully unrolled; the recurrence is inherently serial
        gates = recur_matvec(h) + p[t * Bp:(t + 1) * Bp, :]        # (Bp, 8H)
        # Gate blocks packed [i | f | o | g]: fuse the three sigmoid gates
        # into one activation, tanh gate last.
        sig = jax.nn.sigmoid(gates[:, 0:3 * H2])                   # [i | f | o]
        g_g = jnp.tanh(gates[:, 3 * H2:4 * H2])                    # [g1 | g2]
        i_g = sig[:, 0 * H2:1 * H2]
        f_g = sig[:, 1 * H2:2 * H2]
        o_g = sig[:, 2 * H2:3 * H2]
        c = f_g * c + i_g * g_g
        h = o_g * jnp.tanh(c)
        # Sum the two streams; park in VMEM scratch (aligned write, bounds
        # live ranges, avoids an 8-way concat at the end).
        hs_ref[t * Bp:(t + 1) * Bp, :] = h[:, 0:H] + h[:, H:H2]

    # ---- Linear head: one (T*Bp, H) @ (H, O) matmul, single write-back ----
    out = jnp.dot(hs_ref[...], w_lin_ref[...],
                  preferred_element_type=jnp.float32,
                  precision=HIGH) + b_lin_ref[...]
    out_ref[...] = out.astype(out_ref.dtype)


def pack_bilstm_params(w_ih1, w_hh1, b_ih1, b_hh1,
                       w_ih2, w_hh2, b_ih2, b_hh2,
                       w_lin, b_lin):
    """Pack weights once (static per model); reused across forward calls."""
    H = w_hh1.shape[1]
    I = w_ih1.shape[1]
    O = w_lin.shape[0]
    f32 = jnp.float32
    # PyTorch gate row order is i, f, g, o; repack to i, f, o, g so the three
    # sigmoid gates are lane-contiguous and the tanh gate is last.
    perm = jnp.array([0, 1, 3, 2])

    def gate_blocks(w, in_dim):
        # (4H, in_dim) -> (4, in_dim, H), gate-reordered.
        return jnp.transpose(w.reshape(4, H, in_dim), (0, 2, 1)).astype(f32)[perm]

    def block_diag(wa, wb, k):
        # Two (4, k, H) gate stacks -> (2k, 8H); per-gate column blocks are
        # [stream1 (H) | stream2 (H)], gate blocks in order i, f, o, g.
        big = jnp.zeros((4, 2 * k, 2 * H), f32)
        big = big.at[:, :k, :H].set(wa).at[:, k:, H:].set(wb)
        return jnp.transpose(big, (1, 0, 2)).reshape(2 * k, 8 * H)

    w_ih_big = block_diag(gate_blocks(w_ih1, I), gate_blocks(w_ih2, I), I)  # (2I, 8H)
    w_hh_big = block_diag(gate_blocks(w_hh1, H), gate_blocks(w_hh2, H), H)  # (2H, 8H)

    b1 = (b_ih1 + b_hh1).reshape(4, H).astype(f32)[perm]
    b2 = (b_ih2 + b_hh2).reshape(4, H).astype(f32)[perm]
    b_big = jnp.concatenate([b1, b2], axis=1).reshape(1, 8 * H)             # (1, 8H)

    w_lin_t = w_lin.T.astype(f32)                                           # (H, O)
    b_lin_2d = b_lin.reshape(1, O).astype(f32)
    return w_ih_big, w_hh_big, b_big, w_lin_t, b_lin_2d


def bidirectional_lstm_forward(x1, x2, h1_0, c1_0, h2_0, c2_0, packed):
    """x1, x2: (T, B, I). packed: pack_bilstm_params(...). Returns (T*B, O),
    matching the PyTorch module's final .view(-1, outputDim)."""
    w_ih_big, w_hh_big, b_big, w_lin_t, b_lin_2d = packed
    T, B, I = x1.shape
    H = h1_0.shape[-1]
    O = w_lin_t.shape[1]
    f32 = jnp.float32

    # Pad batch to a sublane multiple so every per-step slice / scratch write
    # is tile-aligned (padded rows are independent and discarded at the end).
    Bp = max(8, ((B + 7) // 8) * 8)
    pad_b = ((0, Bp - B), (0, 0))

    x12 = jnp.concatenate([x1, x2], axis=-1).astype(f32)                   # (T, B, 2I)
    x12 = jnp.pad(x12, ((0, 0), (0, Bp - B), (0, 0))).reshape(T * Bp, 2 * I)
    h0 = jnp.pad(jnp.concatenate([h1_0, h2_0], axis=-1).astype(f32), pad_b)  # (Bp, 2H)
    c0 = jnp.pad(jnp.concatenate([c1_0, c2_0], axis=-1).astype(f32), pad_b)  # (Bp, 2H)

    vmem = pl.BlockSpec(memory_space=pltpu.MemorySpace.VMEM)  # whole arrays in VMEM

    out = pl.pallas_call(
        functools.partial(bilstm_kernel, T=T, Bp=Bp, H=H),
        out_shape=jax.ShapeDtypeStruct((T * Bp, O), f32),
        in_specs=[vmem] * 8,
        out_specs=vmem,
        scratch_shapes=[pltpu.VMEM((T * Bp, H), f32)],
    )(x12, h0, c0, w_ih_big, w_hh_big, b_big, w_lin_t, b_lin_2d)

    # Drop the padded batch rows: (T*Bp, O) -> (T*B, O).
    return out.reshape(T, Bp, O)[:, :B, :].reshape(T * B, O)


# ----- pure-JAX reference (for correctness check) -----
def _lstm_ref(x_seq, h0, c0, w_ih, w_hh, b_ih, b_hh):
    def step(carry, x):
        h, c = carry
        gates = x @ w_ih.T + h @ w_hh.T + b_ih + b_hh
        i, f, g, o = jnp.split(gates, 4, axis=-1)
        i = jax.nn.sigmoid(i)
        f = jax.nn.sigmoid(f)
        g = jnp.tanh(g)
        o = jax.nn.sigmoid(o)
        c = f * c + i * g
        h = o * jnp.tanh(c)
        return (h, c), h

    _, hs = jax.lax.scan(step, (h0, c0), x_seq)
    return hs


def reference_forward(x1, x2, h1_0, c1_0, h2_0, c2_0,
                      w_ih1, w_hh1, b_ih1, b_hh1,
                      w_ih2, w_hh2, b_ih2, b_hh2,
                      w_lin, b_lin):
    hs1 = _lstm_ref(x1, h1_0, c1_0, w_ih1, w_hh1, b_ih1, b_hh1)
    hs2 = _lstm_ref(x2, h2_0, c2_0, w_ih2, w_hh2, b_ih2, b_hh2)
    out = (hs1 + hs2) @ w_lin.T + b_lin
    T, B, O = out.shape
    return out.reshape(T * B, O)


if __name__ == "__main__":
    # Module hyper-params (from the PyTorch file): inputDim=3, hiddenDim=3,
    # outputDim=2, batch_size=10. Sequence length T=8 (small).
    I, H, O, B, T = 3, 3, 2, 10, 8

    key = jax.random.PRNGKey(0)
    keys = jax.random.split(key, 16)

    # Deterministic "nn.LSTM"/"nn.Linear"-style init: U(-1/sqrt(H), 1/sqrt(H)).
    k = 1.0 / jnp.sqrt(jnp.float32(H))
    u = lambda kk, shape: jax.random.uniform(kk, shape, jnp.float32, -k, k)

    w_ih1, w_hh1 = u(keys[0], (4 * H, I)), u(keys[1], (4 * H, H))
    b_ih1, b_hh1 = u(keys[2], (4 * H,)), u(keys[3], (4 * H,))
    w_ih2, w_hh2 = u(keys[4], (4 * H, I)), u(keys[5], (4 * H, H))
    b_ih2, b_hh2 = u(keys[6], (4 * H,)), u(keys[7], (4 * H,))
    w_lin, b_lin = u(keys[8], (O, H)), u(keys[9], (O,))

    # Initial states (PyTorch used randn / rand; deterministic here).
    h1_0 = jax.random.normal(keys[10], (B, H), jnp.float32)
    c1_0 = jax.random.uniform(keys[11], (B, H), jnp.float32)
    h2_0 = jax.random.normal(keys[12], (B, H), jnp.float32)
    c2_0 = jax.random.normal(keys[13], (B, H), jnp.float32)

    # Inputs: two streams, each (T, B, I), time-major like nn.LSTM.
    x1 = jax.random.normal(keys[14], (T, B, I), jnp.float32)
    x2 = jax.random.normal(keys[15], (T, B, I), jnp.float32)

    # Pack weights once (hoisted out of the per-call path).
    packed = jax.tree_util.tree_map(
        jax.block_until_ready,
        pack_bilstm_params(w_ih1, w_hh1, b_ih1, b_hh1,
                           w_ih2, w_hh2, b_ih2, b_hh2,
                           w_lin, b_lin))

    fwd = jax.jit(bidirectional_lstm_forward)
    out = fwd(x1, x2, h1_0, c1_0, h2_0, c2_0, packed)
    out = jax.block_until_ready(out)

    ref = reference_forward(
        x1, x2, h1_0, c1_0, h2_0, c2_0,
        w_ih1, w_hh1, b_ih1, b_hh1,
        w_ih2, w_hh2, b_ih2, b_hh2,
        w_lin, b_lin,
    )
    assert out.shape == (T * B, O), out.shape
    assert jnp.allclose(out, ref, rtol=1e-5, atol=1e-5), (
        float(jnp.max(jnp.abs(out - ref)))
    )
    print("KERNEL_OK")
</pallas_src>

<mosaic_0001>
module attributes {stable_mosaic.version = 11 : i64} {
  func.func @bilstm_kernel(%arg0: memref<128x6xf32, #tpu.memory_space<vmem>>, %arg1: memref<16x6xf32, #tpu.memory_space<vmem>>, %arg2: memref<16x6xf32, #tpu.memory_space<vmem>>, %arg3: memref<6x24xf32, #tpu.memory_space<vmem>>, %arg4: memref<6x24xf32, #tpu.memory_space<vmem>>, %arg5: memref<1x24xf32, #tpu.memory_space<vmem>>, %arg6: memref<3x2xf32, #tpu.memory_space<vmem>>, %arg7: memref<1x2xf32, #tpu.memory_space<vmem>>, %arg8: memref<128x2xf32, #tpu.memory_space<vmem>>, %arg9: memref<128x3xf32, #tpu.memory_space<vmem>>) attributes {dimension_semantics = [], scalar_prefetch = 0 : i64, scratch_operands = 1 : i64, tpu.core_type = #tpu.core_type<tc>} {
    %c0 = arith.constant 0 : index
    %c0_0 = arith.constant 0 : index
    %0 = vector.load %arg0[%c0, %c0_0] : memref<128x6xf32, #tpu.memory_space<vmem>>, vector<128x6xf32>
    %c0_1 = arith.constant 0 : index
    %c0_2 = arith.constant 0 : index
    %1 = vector.load %arg3[%c0_1, %c0_2] : memref<6x24xf32, #tpu.memory_space<vmem>>, vector<6x24xf32>
    %cst = arith.constant dense<0.000000e+00> : vector<128x24xf32>
    %2 = tpu.matmul %0, %1, %cst {dimension_numbers = #tpu.dot_dimension_numbers<[1], [0], [0], [1], [0, 0, 1, 1], [], []>, precision = #tpu.contract_precision<fp32>} : vector<128x6xf32>, vector<6x24xf32>, vector<128x24xf32> -> vector<128x24xf32>
    %c0_3 = arith.constant 0 : index
    %c0_4 = arith.constant 0 : index
    %3 = vector.load %arg5[%c0_3, %c0_4] : memref<1x24xf32, #tpu.memory_space<vmem>>, vector<1x24xf32>
    %4 = vector.broadcast %3 : vector<1x24xf32> to vector<128x24xf32>
    %5 = arith.addf %2, %4 : vector<128x24xf32>
    %c0_5 = arith.constant 0 : index
    %c0_6 = arith.constant 0 : index
    %6 = vector.load %arg4[%c0_5, %c0_6] : memref<6x24xf32, #tpu.memory_space<vmem>>, vector<6x24xf32>
    %7 = vector.extract_strided_slice %6 {offsets = [0, 0], sizes = [1, 24], strides = [1, 1]} : vector<6x24xf32> to vector<1x24xf32>
    %8 = vector.shape_cast %7 : vector<1x24xf32> to vector<1x24xf32>
    %9 = vector.broadcast %8 : vector<1x24xf32> to vector<16x24xf32>
    %10 = vector.extract_strided_slice %6 {offsets = [1, 0], sizes = [1, 24], strides = [1, 1]} : vector<6x24xf32> to vector<1x24xf32>
    %11 = vector.shape_cast %10 : vector<1x24xf32> to vector<1x24xf32>
    %12 = vector.broadcast %11 : vector<1x24xf32> to vector<16x24xf32>
    %13 = vector.extract_strided_slice %6 {offsets = [2, 0], sizes = [1, 24], strides = [1, 1]} : vector<6x24xf32> to vector<1x24xf32>
    %14 = vector.shape_cast %13 : vector<1x24xf32> to vector<1x24xf32>
    %15 = vector.broadcast %14 : vector<1x24xf32> to vector<16x24xf32>
    %16 = vector.extract_strided_slice %6 {offsets = [3, 0], sizes = [1, 24], strides = [1, 1]} : vector<6x24xf32> to vector<1x24xf32>
    %17 = vector.shape_cast %16 : vector<1x24xf32> to vector<1x24xf32>
    %18 = vector.broadcast %17 : vector<1x24xf32> to vector<16x24xf32>
    %19 = vector.extract_strided_slice %6 {offsets = [4, 0], sizes = [1, 24], strides = [1, 1]} : vector<6x24xf32> to vector<1x24xf32>
    %20 = vector.shape_cast %19 : vector<1x24xf32> to vector<1x24xf32>
    %21 = vector.broadcast %20 : vector<1x24xf32> to vector<16x24xf32>
    %22 = vector.extract_strided_slice %6 {offsets = [5, 0], sizes = [1, 24], strides = [1, 1]} : vector<6x24xf32> to vector<1x24xf32>
    %23 = vector.shape_cast %22 : vector<1x24xf32> to vector<1x24xf32>
    %24 = vector.broadcast %23 : vector<1x24xf32> to vector<16x24xf32>
    %c0_7 = arith.constant 0 : index
    %c0_8 = arith.constant 0 : index
    %25 = vector.load %arg1[%c0_7, %c0_8] : memref<16x6xf32, #tpu.memory_space<vmem>>, vector<16x6xf32>
    %c0_9 = arith.constant 0 : index
    %c0_10 = arith.constant 0 : index
    %26 = vector.load %arg2[%c0_9, %c0_10] : memref<16x6xf32, #tpu.memory_space<vmem>>, vector<16x6xf32>
    %27 = vector.extract_strided_slice %25 {offsets = [0, 0], sizes = [16, 1], strides = [1, 1]} : vector<16x6xf32> to vector<16x1xf32>
    %28 = vector.broadcast %27 : vector<16x1xf32> to vector<16x24xf32>
    %29 = arith.mulf %28, %9 : vector<16x24xf32>
    %30 = vector.extract_strided_slice %25 {offsets = [0, 1], sizes = [16, 1], strides = [1, 1]} : vector<16x6xf32> to vector<16x1xf32>
    %31 = vector.broadcast %30 : vector<16x1xf32> to vector<16x24xf32>
    %32 = arith.mulf %31, %12 : vector<16x24xf32>
    %33 = vector.extract_strided_slice %25 {offsets = [0, 2], sizes = [16, 1], strides = [1, 1]} : vector<16x6xf32> to vector<16x1xf32>
    %34 = vector.broadcast %33 : vector<16x1xf32> to vector<16x24xf32>
    %35 = arith.mulf %34, %15 : vector<16x24xf32>
    %36 = vector.extract_strided_slice %25 {offsets = [0, 3], sizes = [16, 1], strides = [1, 1]} : vector<16x6xf32> to vector<16x1xf32>
    %37 = vector.broadcast %36 : vector<16x1xf32> to vector<16x24xf32>
    %38 = arith.mulf %37, %18 : vector<16x24xf32>
    %39 = vector.extract_strided_slice %25 {offsets = [0, 4], sizes = [16, 1], strides = [1, 1]} : vector<16x6xf32> to vector<16x1xf32>
    %40 = vector.broadcast %39 : vector<16x1xf32> to vector<16x24xf32>
    %41 = arith.mulf %40, %21 : vector<16x24xf32>
    %42 = vector.extract_strided_slice %25 {offsets = [0, 5], sizes = [16, 1], strides = [1, 1]} : vector<16x6xf32> to vector<16x1xf32>
    %43 = vector.broadcast %42 : vector<16x1xf32> to vector<16x24xf32>
    %44 = arith.mulf %43, %24 : vector<16x24xf32>
    %45 = arith.addf %29, %32 : vector<16x24xf32>
    %46 = arith.addf %35, %38 : vector<16x24xf32>
    %47 = arith.addf %41, %44 : vector<16x24xf32>
    %48 = arith.addf %45, %46 : vector<16x24xf32>
    %49 = arith.addf %48, %47 : vector<16x24xf32>
    %50 = vector.extract_strided_slice %5 {offsets = [0, 0], sizes = [16, 24], strides = [1, 1]} : vector<128x24xf32> to vector<16x24xf32>
    %51 = arith.addf %49, %50 : vector<16x24xf32>
    %52 = vector.extract_strided_slice %51 {offsets = [0, 0], sizes = [16, 18], strides = [1, 1]} : vector<16x24xf32> to vector<16x18xf32>
    %53 = arith.negf %52 : vector<16x18xf32>
    %54 = math.exp %53 : vector<16x18xf32>
    %cst_11 = arith.constant 1.000000e+00 : f32
    %55 = vector.broadcast %cst_11 : f32 to vector<16x18xf32>
    %56 = arith.addf %55, %54 : vector<16x18xf32>
    %57 = arith.divf %55, %56 : vector<16x18xf32>
    %58 = vector.extract_strided_slice %51 {offsets = [0, 18], sizes = [16, 6], strides = [1, 1]} : vector<16x24xf32> to vector<16x6xf32>
    %59 = math.tanh %58 : vector<16x6xf32>
    %60 = vector.extract_strided_slice %57 {offsets = [0, 0], sizes = [16, 6], strides = [1, 1]} : vector<16x18xf32> to vector<16x6xf32>
    %61 = vector.extract_strided_slice %57 {offsets = [0, 6], sizes = [16, 6], strides = [1, 1]} : vector<16x18xf32> to vector<16x6xf32>
    %62 = vector.extract_strided_slice %57 {offsets = [0, 12], sizes = [16, 6], strides = [1, 1]} : vector<16x18xf32> to vector<16x6xf32>
    %63 = arith.mulf %61, %26 : vector<16x6xf32>
    %64 = arith.mulf %60, %59 : vector<16x6xf32>
    %65 = arith.addf %63, %64 : vector<16x6xf32>
    %66 = math.tanh %65 : vector<16x6xf32>
    %67 = arith.mulf %62, %66 : vector<16x6xf32>
    %68 = vector.extract_strided_slice %67 {offsets = [0, 0], sizes = [16, 3], strides = [1, 1]} : vector<16x6xf32> to vector<16x3xf32>
    %69 = vector.extract_strided_slice %67 {offsets = [0, 3], sizes = [16, 3], strides = [1, 1]} : vector<16x6xf32> to vector<16x3xf32>
    %70 = arith.addf %68, %69 : vector<16x3xf32>
    %c0_12 = arith.constant 0 : index
    %c0_13 = arith.constant 0 : index
    %71 = vector.load %arg9[%c0_12, %c0_13] : memref<128x3xf32, #tpu.memory_space<vmem>>, vector<16x3xf32>
    tpu.vector_store %arg9[%c0_12, %c0_13], %70 {strides = array<i32>} : memref<128x3xf32, #tpu.memory_space<vmem>>, vector<16x3xf32>,
    %72 = vector.extract_strided_slice %67 {offsets = [0, 0], sizes = [16, 1], strides = [1, 1]} : vector<16x6xf32> to vector<16x1xf32>
    %73 = vector.broadcast %72 : vector<16x1xf32> to vector<16x24xf32>
    %74 = arith.mulf %73, %9 : vector<16x24xf32>
    %75 = vector.extract_strided_slice %67 {offsets = [0, 1], sizes = [16, 1], strides = [1, 1]} : vector<16x6xf32> to vector<16x1xf32>
    %76 = vector.broadcast %75 : vector<16x1xf32> to vector<16x24xf32>
    %77 = arith.mulf %76, %12 : vector<16x24xf32>
    %78 = vector.extract_strided_slice %67 {offsets = [0, 2], sizes = [16, 1], strides = [1, 1]} : vector<16x6xf32> to vector<16x1xf32>
    %79 = vector.broadcast %78 : vector<16x1xf32> to vector<16x24xf32>
    %80 = arith.mulf %79, %15 : vector<16x24xf32>
    %81 = vector.extract_strided_slice %67 {offsets = [0, 3], sizes = [16, 1], strides = [1, 1]} : vector<16x6xf32> to vector<16x1xf32>
    %82 = vector.broadcast %81 : vector<16x1xf32> to vector<16x24xf32>
    %83 = arith.mulf %82, %18 : vector<16x24xf32>
    %84 = vector.extract_strided_slice %67 {offsets = [0, 4], sizes = [16, 1], strides = [1, 1]} : vector<16x6xf32> to vector<16x1xf32>
    %85 = vector.broadcast %84 : vector<16x1xf32> to vector<16x24xf32>
    %86 = arith.mulf %85, %21 : vector<16x24xf32>
    %87 = vector.extract_strided_slice %67 {offsets = [0, 5], sizes = [16, 1], strides = [1, 1]} : vector<16x6xf32> to vector<16x1xf32>
    %88 = vector.broadcast %87 : vector<16x1xf32> to vector<16x24xf32>
    %89 = arith.mulf %88, %24 : vector<16x24xf32>
    %90 = arith.addf %74, %77 : vector<16x24xf32>
    %91 = arith.addf %80, %83 : vector<16x24xf32>
    %92 = arith.addf %86, %89 : vector<16x24xf32>
    %93 = arith.addf %90, %91 : vector<16x24xf32>
    %94 = arith.addf %93, %92 : vector<16x24xf32>
    %95 = vector.extract_strided_slice %5 {offsets = [16, 0], sizes = [16, 24], strides = [1, 1]} : vector<128x24xf32> to vector<16x24xf32>
    %96 = arith.addf %94, %95 : vector<16x24xf32>
    %97 = vector.extract_strided_slice %96 {offsets = [0, 0], sizes = [16, 18], strides = [1, 1]} : vector<16x24xf32> to vector<16x18xf32>
    %98 = arith.negf %97 : vector<16x18xf32>
    %99 = math.exp %98 : vector<16x18xf32>
    %cst_14 = arith.constant 1.000000e+00 : f32
    %100 = vector.broadcast %cst_14 : f32 to vector<16x18xf32>
    %101 = arith.addf %100, %99 : vector<16x18xf32>
    %102 = arith.divf %100, %101 : vector<16x18xf32>
    %103 = vector.extract_strided_slice %96 {offsets = [0, 18], sizes = [16, 6], strides = [1, 1]} : vector<16x24xf32> to vector<16x6xf32>
    %104 = math.tanh %103 : vector<16x6xf32>
    %105 = vector.extract_strided_slice %102 {offsets = [0, 0], sizes = [16, 6], strides = [1, 1]} : vector<16x18xf32> to vector<16x6xf32>
    %106 = vector.extract_strided_slice %102 {offsets = [0, 6], sizes = [16, 6], strides = [1, 1]} : vector<16x18xf32> to vector<16x6xf32>
    %107 = vector.extract_strided_slice %102 {offsets = [0, 12], sizes = [16, 6], strides = [1, 1]} : vector<16x18xf32> to vector<16x6xf32>
    %108 = arith.mulf %106, %65 : vector<16x6xf32>
    %109 = arith.mulf %105, %104 : vector<16x6xf32>
    %110 = arith.addf %108, %109 : vector<16x6xf32>
    %111 = math.tanh %110 : vector<16x6xf32>
    %112 = arith.mulf %107, %111 : vector<16x6xf32>
    %113 = vector.extract_strided_slice %112 {offsets = [0, 0], sizes = [16, 3], strides = [1, 1]} : vector<16x6xf32> to vector<16x3xf32>
    %114 = vector.extract_strided_slice %112 {offsets = [0, 3], sizes = [16, 3], strides = [1, 1]} : vector<16x6xf32> to vector<16x3xf32>
    %115 = arith.addf %113, %114 : vector<16x3xf32>
    %c16 = arith.constant 16 : index
    %c0_15 = arith.constant 0 : index
    %116 = vector.load %arg9[%c16, %c0_15] : memref<128x3xf32, #tpu.memory_space<vmem>>, vector<16x3xf32>
    tpu.vector_store %arg9[%c16, %c0_15], %115 {strides = array<i32>} : memref<128x3xf32, #tpu.memory_space<vmem>>, vector<16x3xf32>,
    %117 = vector.extract_strided_slice %112 {offsets = [0, 0], sizes = [16, 1], strides = [1, 1]} : vector<16x6xf32> to vector<16x1xf32>
    %118 = vector.broadcast %117 : vector<16x1xf32> to vector<16x24xf32>
    %119 = arith.mulf %118, %9 : vector<16x24xf32>
    %120 = vector.extract_strided_slice %112 {offsets = [0, 1], sizes = [16, 1], strides = [1, 1]} : vector<16x6xf32> to vector<16x1xf32>
    %121 = vector.broadcast %120 : vector<16x1xf32> to vector<16x24xf32>
    %122 = arith.mulf %121, %12 : vector<16x24xf32>
    %123 = vector.extract_strided_slice %112 {offsets = [0, 2], sizes = [16, 1], strides = [1, 1]} : vector<16x6xf32> to vector<16x1xf32>
    %124 = vector.broadcast %123 : vector<16x1xf32> to vector<16x24xf32>
    %125 = arith.mulf %124, %15 : vector<16x24xf32>
    %126 = vector.extract_strided_slice %112 {offsets = [0, 3], sizes = [16, 1], strides = [1, 1]} : vector<16x6xf32> to vector<16x1xf32>
    %127 = vector.broadcast %126 : vector<16x1xf32> to vector<16x24xf32>
    %128 = arith.mulf %127, %18 : vector<16x24xf32>
    %129 = vector.extract_strided_slice %112 {offsets = [0, 4], sizes = [16, 1], strides = [1, 1]} : vector<16x6xf32> to vector<16x1xf32>
    %130 = vector.broadcast %129 : vector<16x1xf32> to vector<16x24xf32>
    %131 = arith.mulf %130, %21 : vector<16x24xf32>
    %132 = vector.extract_strided_slice %112 {offsets = [0, 5], sizes = [16, 1], strides = [1, 1]} : vector<16x6xf32> to vector<16x1xf32>
    %133 = vector.broadcast %132 : vector<16x1xf32> to vector<16x24xf32>
    %134 = arith.mulf %133, %24 : vector<16x24xf32>
    %135 = arith.addf %119, %122 : vector<16x24xf32>
    %136 = arith.addf %125, %128 : vector<16x24xf32>
    %137 = arith.addf %131, %134 : vector<16x24xf32>
    %138 = arith.addf %135, %136 : vector<16x24xf32>
    %139 = arith.addf %138, %137 : vector<16x24xf32>
    %140 = vector.extract_strided_slice %5 {offsets = [32, 0], sizes = [16, 24], strides = [1, 1]} : vector<128x24xf32> to vector<16x24xf32>
    %141 = arith.addf %139, %140 : vector<16x24xf32>
    %142 = vector.extract_strided_slice %141 {offsets = [0, 0], sizes = [16, 18], strides = [1, 1]} : vector<16x24xf32> to vector<16x18xf32>
    %143 = arith.negf %142 : vector<16x18xf32>
    %144 = math.exp %143 : vector<16x18xf32>
    %cst_16 = arith.constant 1.000000e+00 : f32
    %145 = vector.broadcast %cst_16 : f32 to vector<16x18xf32>
    %146 = arith.addf %145, %144 : vector<16x18xf32>
    %147 = arith.divf %145, %146 : vector<16x18xf32>
    %148 = vector.extract_strided_slice %141 {offsets = [0, 18], sizes = [16, 6], strides = [1, 1]} : vector<16x24xf32> to vector<16x6xf32>
    %149 = math.tanh %148 : vector<16x6xf32>
    %150 = vector.extract_strided_slice %147 {offsets = [0, 0], sizes = [16, 6], strides = [1, 1]} : vector<16x18xf32> to vector<16x6xf32>
    %151 = vector.extract_strided_slice %147 {offsets = [0, 6], sizes = [16, 6], strides = [1, 1]} : vector<16x18xf32> to vector<16x6xf32>
    %152 = vector.extract_strided_slice %147 {offsets = [0, 12], sizes = [16, 6], strides = [1, 1]} : vector<16x18xf32> to vector<16x6xf32>
    %153 = arith.mulf %151, %110 : vector<16x6xf32>
    %154 = arith.mulf %150, %149 : vector<16x6xf32>
    %155 = arith.addf %153, %154 : vector<16x6xf32>
    %156 = math.tanh %155 : vector<16x6xf32>
    %157 = arith.mulf %152, %156 : vector<16x6xf32>
    %158 = vector.extract_strided_slice %157 {offsets = [0, 0], sizes = [16, 3], strides = [1, 1]} : vector<16x6xf32> to vector<16x3xf32>
    %159 = vector.extract_strided_slice %157 {offsets = [0, 3], sizes = [16, 3], strides = [1, 1]} : vector<16x6xf32> to vector<16x3xf32>
    %160 = arith.addf %158, %159 : vector<16x3xf32>
    %c32 = arith.constant 32 : index
    %c0_17 = arith.constant 0 : index
    %161 = vector.load %arg9[%c32, %c0_17] : memref<128x3xf32, #tpu.memory_space<vmem>>, vector<16x3xf32>
    tpu.vector_store %arg9[%c32, %c0_17], %160 {strides = array<i32>} : memref<128x3xf32, #tpu.memory_space<vmem>>, vector<16x3xf32>,
    %162 = vector.extract_strided_slice %157 {offsets = [0, 0], sizes = [16, 1], strides = [1, 1]} : vector<16x6xf32> to vector<16x1xf32>
    %163 = vector.broadcast %162 : vector<16x1xf32> to vector<16x24xf32>
    %164 = arith.mulf %163, %9 : vector<16x24xf32>
    %165 = vector.extract_strided_slice %157 {offsets = [0, 1], sizes = [16, 1], strides = [1, 1]} : vector<16x6xf32> to vector<16x1xf32>
    %166 = vector.broadcast %165 : vector<16x1xf32> to vector<16x24xf32>
    %167 = arith.mulf %166, %12 : vector<16x24xf32>
    %168 = vector.extract_strided_slice %157 {offsets = [0, 2], sizes = [16, 1], strides = [1, 1]} : vector<16x6xf32> to vector<16x1xf32>
    %169 = vector.broadcast %168 : vector<16x1xf32> to vector<16x24xf32>
    %170 = arith.mulf %169, %15 : vector<16x24xf32>
    %171 = vector.extract_strided_slice %157 {offsets = [0, 3], sizes = [16, 1], strides = [1, 1]} : vector<16x6xf32> to vector<16x1xf32>
    %172 = vector.broadcast %171 : vector<16x1xf32> to vector<16x24xf32>
    %173 = arith.mulf %172, %18 : vector<16x24xf32>
    %174 = vector.extract_strided_slice %157 {offsets = [0, 4], sizes = [16, 1], strides = [1, 1]} : vector<16x6xf32> to vector<16x1xf32>
    %175 = vector.broadcast %174 : vector<16x1xf32> to vector<16x24xf32>
    %176 = arith.mulf %175, %21 : vector<16x24xf32>
    %177 = vector.extract_strided_slice %157 {offsets = [0, 5], sizes = [16, 1], strides = [1, 1]} : vector<16x6xf32> to vector<16x1xf32>
    %178 = vector.broadcast %177 : vector<16x1xf32> to vector<16x24xf32>
    %179 = arith.mulf %178, %24 : vector<16x24xf32>
    %180 = arith.addf %164, %167 : vector<16x24xf32>
    %181 = arith.addf %170, %173 : vector<16x24xf32>
    %182 = arith.addf %176, %179 : vector<16x24xf32>
    %183 = arith.addf %180, %181 : vector<16x24xf32>
    %184 = arith.addf %183, %182 : vector<16x24xf32>
    %185 = vector.extract_strided_slice %5 {offsets = [48, 0], sizes = [16, 24], strides = [1, 1]} : vector<128x24xf32> to vector<16x24xf32>
    %186 = arith.addf %184, %185 : vector<16x24xf32>
    %187 = vector.extract_strided_slice %186 {offsets = [0, 0], sizes = [16, 18], strides = [1, 1]} : vector<16x24xf32> to vector<16x18xf32>
    %188 = arith.negf %187 : vector<16x18xf32>
    %189 = math.exp %188 : vector<16x18xf32>
    %cst_18 = arith.constant 1.000000e+00 : f32
    %190 = vector.broadcast %cst_18 : f32 to vector<16x18xf32>
    %191 = arith.addf %190, %189 : vector<16x18xf32>
    %192 = arith.divf %190, %191 : vector<16x18xf32>
    %193 = vector.extract_strided_slice %186 {offsets = [0, 18], sizes = [16, 6], strides = [1, 1]} : vector<16x24xf32> to vector<16x6xf32>
    %194 = math.tanh %193 : vector<16x6xf32>
    %195 = vector.extract_strided_slice %192 {offsets = [0, 0], sizes = [16, 6], strides = [1, 1]} : vector<16x18xf32> to vector<16x6xf32>
    %196 = vector.extract_strided_slice %192 {offsets = [0, 6], sizes = [16, 6], strides = [1, 1]} : vector<16x18xf32> to vector<16x6xf32>
    %197 = vector.extract_strided_slice %192 {offsets = [0, 12], sizes = [16, 6], strides = [1, 1]} : vector<16x18xf32> to vector<16x6xf32>
    %198 = arith.mulf %196, %155 : vector<16x6xf32>
    %199 = arith.mulf %195, %194 : vector<16x6xf32>
    %200 = arith.addf %198, %199 : vector<16x6xf32>
    %201 = math.tanh %200 : vector<16x6xf32>
    %202 = arith.mulf %197, %201 : vector<16x6xf32>
    %203 = vector.extract_strided_slice %202 {offsets = [0, 0], sizes = [16, 3], strides = [1, 1]} : vector<16x6xf32> to vector<16x3xf32>
    %204 = vector.extract_strided_slice %202 {offsets = [0, 3], sizes = [16, 3], strides = [1, 1]} : vector<16x6xf32> to vector<16x3xf32>
    %205 = arith.addf %203, %204 : vector<16x3xf32>
    %c48 = arith.constant 48 : index
    %c0_19 = arith.constant 0 : index
    %206 = vector.load %arg9[%c48, %c0_19] : memref<128x3xf32, #tpu.memory_space<vmem>>, vector<16x3xf32>
    tpu.vector_store %arg9[%c48, %c0_19], %205 {strides = array<i32>} : memref<128x3xf32, #tpu.memory_space<vmem>>, vector<16x3xf32>,
    %207 = vector.extract_strided_slice %202 {offsets = [0, 0], sizes = [16, 1], strides = [1, 1]} : vector<16x6xf32> to vector<16x1xf32>
    %208 = vector.broadcast %207 : vector<16x1xf32> to vector<16x24xf32>
    %209 = arith.mulf %208, %9 : vector<16x24xf32>
    %210 = vector.extract_strided_slice %202 {offsets = [0, 1], sizes = [16, 1], strides = [1, 1]} : vector<16x6xf32> to vector<16x1xf32>
    %211 = vector.broadcast %210 : vector<16x1xf32> to vector<16x24xf32>
    %212 = arith.mulf %211, %12 : vector<16x24xf32>
    %213 = vector.extract_strided_slice %202 {offsets = [0, 2], sizes = [16, 1], strides = [1, 1]} : vector<16x6xf32> to vector<16x1xf32>
    %214 = vector.broadcast %213 : vector<16x1xf32> to vector<16x24xf32>
    %215 = arith.mulf %214, %15 : vector<16x24xf32>
    %216 = vector.extract_strided_slice %202 {offsets = [0, 3], sizes = [16, 1], strides = [1, 1]} : vector<16x6xf32> to vector<16x1xf32>
    %217 = vector.broadcast %216 : vector<16x1xf32> to vector<16x24xf32>
    %218 = arith.mulf %217, %18 : vector<16x24xf32>
    %219 = vector.extract_strided_slice %202 {offsets = [0, 4], sizes = [16, 1], strides = [1, 1]} : vector<16x6xf32> to vector<16x1xf32>
    %220 = vector.broadcast %219 : vector<16x1xf32> to vector<16x24xf32>
    %221 = arith.mulf %220, %21 : vector<16x24xf32>
    %222 = vector.extract_strided_slice %202 {offsets = [0, 5], sizes = [16, 1], strides = [1, 1]} : vector<16x6xf32> to vector<16x1xf32>
    %223 = vector.broadcast %222 : vector<16x1xf32> to vector<16x24xf32>
    %224 = arith.mulf %223, %24 : vector<16x24xf32>
    %225 = arith.addf %209, %212 : vector<16x24xf32>
    %226 = arith.addf %215, %218 : vector<16x24xf32>
    %227 = arith.addf %221, %224 : vector<16x24xf32>
    %228 = arith.addf %225, %226 : vector<16x24xf32>
    %229 = arith.addf %228, %227 : vector<16x24xf32>
    %230 = vector.extract_strided_slice %5 {offsets = [64, 0], sizes = [16, 24], strides = [1, 1]} : vector<128x24xf32> to vector<16x24xf32>
    %231 = arith.addf %229, %230 : vector<16x24xf32>
    %232 = vector.extract_strided_slice %231 {offsets = [0, 0], sizes = [16, 18], strides = [1, 1]} : vector<16x24xf32> to vector<16x18xf32>
    %233 = arith.negf %232 : vector<16x18xf32>
    %234 = math.exp %233 : vector<16x18xf32>
    %cst_20 = arith.constant 1.000000e+00 : f32
    %235 = vector.broadcast %cst_20 : f32 to vector<16x18xf32>
    %236 = arith.addf %235, %234 : vector<16x18xf32>
    %237 = arith.divf %235, %236 : vector<16x18xf32>
    %238 = vector.extract_strided_slice %231 {offsets = [0, 18], sizes = [16, 6], strides = [1, 1]} : vector<16x24xf32> to vector<16x6xf32>
    %239 = math.tanh %238 : vector<16x6xf32>
    %240 = vector.extract_strided_slice %237 {offsets = [0, 0], sizes = [16, 6], strides = [1, 1]} : vector<16x18xf32> to vector<16x6xf32>
    %241 = vector.extract_strided_slice %237 {offsets = [0, 6], sizes = [16, 6], strides = [1, 1]} : vector<16x18xf32> to vector<16x6xf32>
    %242 = vector.extract_strided_slice %237 {offsets = [0, 12], sizes = [16, 6], strides = [1, 1]} : vector<16x18xf32> to vector<16x6xf32>
    %243 = arith.mulf %241, %200 : vector<16x6xf32>
    %244 = arith.mulf %240, %239 : vector<16x6xf32>
    %245 = arith.addf %243, %244 : vector<16x6xf32>
    %246 = math.tanh %245 : vector<16x6xf32>
    %247 = arith.mulf %242, %246 : vector<16x6xf32>
    %248 = vector.extract_strided_slice %247 {offsets = [0, 0], sizes = [16, 3], strides = [1, 1]} : vector<16x6xf32> to vector<16x3xf32>
    %249 = vector.extract_strided_slice %247 {offsets = [0, 3], sizes = [16, 3], strides = [1, 1]} : vector<16x6xf32> to vector<16x3xf32>
    %250 = arith.addf %248, %249 : vector<16x3xf32>
    %c64 = arith.constant 64 : index
    %c0_21 = arith.constant 0 : index
    %251 = vector.load %arg9[%c64, %c0_21] : memref<128x3xf32, #tpu.memory_space<vmem>>, vector<16x3xf32>
    tpu.vector_store %arg9[%c64, %c0_21], %250 {strides = array<i32>} : memref<128x3xf32, #tpu.memory_space<vmem>>, vector<16x3xf32>,
    %252 = vector.extract_strided_slice %247 {offsets = [0, 0], sizes = [16, 1], strides = [1, 1]} : vector<16x6xf32> to vector<16x1xf32>
    %253 = vector.broadcast %252 : vector<16x1xf32> to vector<16x24xf32>
    %254 = arith.mulf %253, %9 : vector<16x24xf32>
    %255 = vector.extract_strided_slice %247 {offsets = [0, 1], sizes = [16, 1], strides = [1, 1]} : vector<16x6xf32> to vector<16x1xf32>
    %256 = vector.broadcast %255 : vector<16x1xf32> to vector<16x24xf32>
    %257 = arith.mulf %256, %12 : vector<16x24xf32>
    %258 = vector.extract_strided_slice %247 {offsets = [0, 2], sizes = [16, 1], strides = [1, 1]} : vector<16x6xf32> to vector<16x1xf32>
    %259 = vector.broadcast %258 : vector<16x1xf32> to vector<16x24xf32>
    %260 = arith.mulf %259, %15 : vector<16x24xf32>
    %261 = vector.extract_strided_slice %247 {offsets = [0, 3], sizes = [16, 1], strides = [1, 1]} : vector<16x6xf32> to vector<16x1xf32>
    %262 = vector.broadcast %261 : vector<16x1xf32> to vector<16x24xf32>
    %263 = arith.mulf %262, %18 : vector<16x24xf32>
    %264 = vector.extract_strided_slice %247 {offsets = [0, 4], sizes = [16, 1], strides = [1, 1]} : vector<16x6xf32> to vector<16x1xf32>
    %265 = vector.broadcast %264 : vector<16x1xf32> to vector<16x24xf32>
    %266 = arith.mulf %265, %21 : vector<16x24xf32>
    %267 = vector.extract_strided_slice %247 {offsets = [0, 5], sizes = [16, 1], strides = [1, 1]} : vector<16x6xf32> to vector<16x1xf32>
    %268 = vector.broadcast %267 : vector<16x1xf32> to vector<16x24xf32>
    %269 = arith.mulf %268, %24 : vector<16x24xf32>
    %270 = arith.addf %254, %257 : vector<16x24xf32>
    %271 = arith.addf %260, %263 : vector<16x24xf32>
    %272 = arith.addf %266, %269 : vector<16x24xf32>
    %273 = arith.addf %270, %271 : vector<16x24xf32>
    %274 = arith.addf %273, %272 : vector<16x24xf32>
    %275 = vector.extract_strided_slice %5 {offsets = [80, 0], sizes = [16, 24], strides = [1, 1]} : vector<128x24xf32> to vector<16x24xf32>
    %276 = arith.addf %274, %275 : vector<16x24xf32>
    %277 = vector.extract_strided_slice %276 {offsets = [0, 0], sizes = [16, 18], strides = [1, 1]} : vector<16x24xf32> to vector<16x18xf32>
    %278 = arith.negf %277 : vector<16x18xf32>
    %279 = math.exp %278 : vector<16x18xf32>
    %cst_22 = arith.constant 1.000000e+00 : f32
    %280 = vector.broadcast %cst_22 : f32 to vector<16x18xf32>
    %281 = arith.addf %280, %279 : vector<16x18xf32>
    %282 = arith.divf %280, %281 : vector<16x18xf32>
    %283 = vector.extract_strided_slice %276 {offsets = [0, 18], sizes = [16, 6], strides = [1, 1]} : vector<16x24xf32> to vector<16x6xf32>
    %284 = math.tanh %283 : vector<16x6xf32>
    %285 = vector.extract_strided_slice %282 {offsets = [0, 0], sizes = [16, 6], strides = [1, 1]} : vector<16x18xf32> to vector<16x6xf32>
    %286 = vector.extract_strided_slice %282 {offsets = [0, 6], sizes = [16, 6], strides = [1, 1]} : vector<16x18xf32> to vector<16x6xf32>
    %287 = vector.extract_strided_slice %282 {offsets = [0, 12], sizes = [16, 6], strides = [1, 1]} : vector<16x18xf32> to vector<16x6xf32>
    %288 = arith.mulf %286, %245 : vector<16x6xf32>
    %289 = arith.mulf %285, %284 : vector<16x6xf32>
    %290 = arith.addf %288, %289 : vector<16x6xf32>
    %291 = math.tanh %290 : vector<16x6xf32>
    %292 = arith.mulf %287, %291 : vector<16x6xf32>
    %293 = vector.extract_strided_slice %292 {offsets = [0, 0], sizes = [16, 3], strides = [1, 1]} : vector<16x6xf32> to vector<16x3xf32>
    %294 = vector.extract_strided_slice %292 {offsets = [0, 3], sizes = [16, 3], strides = [1, 1]} : vector<16x6xf32> to vector<16x3xf32>
    %295 = arith.addf %293, %294 : vector<16x3xf32>
    %c80 = arith.constant 80 : index
    %c0_23 = arith.constant 0 : index
    %296 = vector.load %arg9[%c80, %c0_23] : memref<128x3xf32, #tpu.memory_space<vmem>>, vector<16x3xf32>
    tpu.vector_store %arg9[%c80, %c0_23], %295 {strides = array<i32>} : memref<128x3xf32, #tpu.memory_space<vmem>>, vector<16x3xf32>,
    %297 = vector.extract_strided_slice %292 {offsets = [0, 0], sizes = [16, 1], strides = [1, 1]} : vector<16x6xf32> to vector<16x1xf32>
    %298 = vector.broadcast %297 : vector<16x1xf32> to vector<16x24xf32>
    %299 = arith.mulf %298, %9 : vector<16x24xf32>
    %300 = vector.extract_strided_slice %292 {offsets = [0, 1], sizes = [16, 1], strides = [1, 1]} : vector<16x6xf32> to vector<16x1xf32>
    %301 = vector.broadcast %300 : vector<16x1xf32> to vector<16x24xf32>
    %302 = arith.mulf %301, %12 : vector<16x24xf32>
    %303 = vector.extract_strided_slice %292 {offsets = [0, 2], sizes = [16, 1], strides = [1, 1]} : vector<16x6xf32> to vector<16x1xf32>
    %304 = vector.broadcast %303 : vector<16x1xf32> to vector<16x24xf32>
    %305 = arith.mulf %304, %15 : vector<16x24xf32>
    %306 = vector.extract_strided_slice %292 {offsets = [0, 3], sizes = [16, 1], strides = [1, 1]} : vector<16x6xf32> to vector<16x1xf32>
    %307 = vector.broadcast %306 : vector<16x1xf32> to vector<16x24xf32>
    %308 = arith.mulf %307, %18 : vector<16x24xf32>
    %309 = vector.extract_strided_slice %292 {offsets = [0, 4], sizes = [16, 1], strides = [1, 1]} : vector<16x6xf32> to vector<16x1xf32>
    %310 = vector.broadcast %309 : vector<16x1xf32> to vector<16x24xf32>
    %311 = arith.mulf %310, %21 : vector<16x24xf32>
    %312 = vector.extract_strided_slice %292 {offsets = [0, 5], sizes = [16, 1], strides = [1, 1]} : vector<16x6xf32> to vector<16x1xf32>
    %313 = vector.broadcast %312 : vector<16x1xf32> to vector<16x24xf32>
    %314 = arith.mulf %313, %24 : vector<16x24xf32>
    %315 = arith.addf %299, %302 : vector<16x24xf32>
    %316 = arith.addf %305, %308 : vector<16x24xf32>
    %317 = arith.addf %311, %314 : vector<16x24xf32>
    %318 = arith.addf %315, %316 : vector<16x24xf32>
    %319 = arith.addf %318, %317 : vector<16x24xf32>
    %320 = vector.extract_strided_slice %5 {offsets = [96, 0], sizes = [16, 24], strides = [1, 1]} : vector<128x24xf32> to vector<16x24xf32>
    %321 = arith.addf %319, %320 : vector<16x24xf32>
    %322 = vector.extract_strided_slice %321 {offsets = [0, 0], sizes = [16, 18], strides = [1, 1]} : vector<16x24xf32> to vector<16x18xf32>
    %323 = arith.negf %322 : vector<16x18xf32>
    %324 = math.exp %323 : vector<16x18xf32>
    %cst_24 = arith.constant 1.000000e+00 : f32
    %325 = vector.broadcast %cst_24 : f32 to vector<16x18xf32>
    %326 = arith.addf %325, %324 : vector<16x18xf32>
    %327 = arith.divf %325, %326 : vector<16x18xf32>
    %328 = vector.extract_strided_slice %321 {offsets = [0, 18], sizes = [16, 6], strides = [1, 1]} : vector<16x24xf32> to vector<16x6xf32>
    %329 = math.tanh %328 : vector<16x6xf32>
    %330 = vector.extract_strided_slice %327 {offsets = [0, 0], sizes = [16, 6], strides = [1, 1]} : vector<16x18xf32> to vector<16x6xf32>
    %331 = vector.extract_strided_slice %327 {offsets = [0, 6], sizes = [16, 6], strides = [1, 1]} : vector<16x18xf32> to vector<16x6xf32>
    %332 = vector.extract_strided_slice %327 {offsets = [0, 12], sizes = [16, 6], strides = [1, 1]} : vector<16x18xf32> to vector<16x6xf32>
    %333 = arith.mulf %331, %290 : vector<16x6xf32>
    %334 = arith.mulf %330, %329 : vector<16x6xf32>
    %335 = arith.addf %333, %334 : vector<16x6xf32>
    %336 = math.tanh %335 : vector<16x6xf32>
    %337 = arith.mulf %332, %336 : vector<16x6xf32>
    %338 = vector.extract_strided_slice %337 {offsets = [0, 0], sizes = [16, 3], strides = [1, 1]} : vector<16x6xf32> to vector<16x3xf32>
    %339 = vector.extract_strided_slice %337 {offsets = [0, 3], sizes = [16, 3], strides = [1, 1]} : vector<16x6xf32> to vector<16x3xf32>
    %340 = arith.addf %338, %339 : vector<16x3xf32>
    %c96 = arith.constant 96 : index
    %c0_25 = arith.constant 0 : index
    %341 = vector.load %arg9[%c96, %c0_25] : memref<128x3xf32, #tpu.memory_space<vmem>>, vector<16x3xf32>
    tpu.vector_store %arg9[%c96, %c0_25], %340 {strides = array<i32>} : memref<128x3xf32, #tpu.memory_space<vmem>>, vector<16x3xf32>,
    %342 = vector.extract_strided_slice %337 {offsets = [0, 0], sizes = [16, 1], strides = [1, 1]} : vector<16x6xf32> to vector<16x1xf32>
    %343 = vector.broadcast %342 : vector<16x1xf32> to vector<16x24xf32>
    %344 = arith.mulf %343, %9 : vector<16x24xf32>
    %345 = vector.extract_strided_slice %337 {offsets = [0, 1], sizes = [16, 1], strides = [1, 1]} : vector<16x6xf32> to vector<16x1xf32>
    %346 = vector.broadcast %345 : vector<16x1xf32> to vector<16x24xf32>
    %347 = arith.mulf %346, %12 : vector<16x24xf32>
    %348 = vector.extract_strided_slice %337 {offsets = [0, 2], sizes = [16, 1], strides = [1, 1]} : vector<16x6xf32> to vector<16x1xf32>
    %349 = vector.broadcast %348 : vector<16x1xf32> to vector<16x24xf32>
    %350 = arith.mulf %349, %15 : vector<16x24xf32>
    %351 = vector.extract_strided_slice %337 {offsets = [0, 3], sizes = [16, 1], strides = [1, 1]} : vector<16x6xf32> to vector<16x1xf32>
    %352 = vector.broadcast %351 : vector<16x1xf32> to vector<16x24xf32>
    %353 = arith.mulf %352, %18 : vector<16x24xf32>
    %354 = vector.extract_strided_slice %337 {offsets = [0, 4], sizes = [16, 1], strides = [1, 1]} : vector<16x6xf32> to vector<16x1xf32>
    %355 = vector.broadcast %354 : vector<16x1xf32> to vector<16x24xf32>
    %356 = arith.mulf %355, %21 : vector<16x24xf32>
    %357 = vector.extract_strided_slice %337 {offsets = [0, 5], sizes = [16, 1], strides = [1, 1]} : vector<16x6xf32> to vector<16x1xf32>
    %358 = vector.broadcast %357 : vector<16x1xf32> to vector<16x24xf32>
    %359 = arith.mulf %358, %24 : vector<16x24xf32>
    %360 = arith.addf %344, %347 : vector<16x24xf32>
    %361 = arith.addf %350, %353 : vector<16x24xf32>
    %362 = arith.addf %356, %359 : vector<16x24xf32>
    %363 = arith.addf %360, %361 : vector<16x24xf32>
    %364 = arith.addf %363, %362 : vector<16x24xf32>
    %365 = vector.extract_strided_slice %5 {offsets = [112, 0], sizes = [16, 24], strides = [1, 1]} : vector<128x24xf32> to vector<16x24xf32>
    %366 = arith.addf %364, %365 : vector<16x24xf32>
    %367 = vector.extract_strided_slice %366 {offsets = [0, 0], sizes = [16, 18], strides = [1, 1]} : vector<16x24xf32> to vector<16x18xf32>
    %368 = arith.negf %367 : vector<16x18xf32>
    %369 = math.exp %368 : vector<16x18xf32>
    %cst_26 = arith.constant 1.000000e+00 : f32
    %370 = vector.broadcast %cst_26 : f32 to vector<16x18xf32>
    %371 = arith.addf %370, %369 : vector<16x18xf32>
    %372 = arith.divf %370, %371 : vector<16x18xf32>
    %373 = vector.extract_strided_slice %366 {offsets = [0, 18], sizes = [16, 6], strides = [1, 1]} : vector<16x24xf32> to vector<16x6xf32>
    %374 = math.tanh %373 : vector<16x6xf32>
    %375 = vector.extract_strided_slice %372 {offsets = [0, 0], sizes = [16, 6], strides = [1, 1]} : vector<16x18xf32> to vector<16x6xf32>
    %376 = vector.extract_strided_slice %372 {offsets = [0, 6], sizes = [16, 6], strides = [1, 1]} : vector<16x18xf32> to vector<16x6xf32>
    %377 = vector.extract_strided_slice %372 {offsets = [0, 12], sizes = [16, 6], strides = [1, 1]} : vector<16x18xf32> to vector<16x6xf32>
    %378 = arith.mulf %376, %335 : vector<16x6xf32>
    %379 = arith.mulf %375, %374 : vector<16x6xf32>
    %380 = arith.addf %378, %379 : vector<16x6xf32>
    %381 = math.tanh %380 : vector<16x6xf32>
    %382 = arith.mulf %377, %381 : vector<16x6xf32>
    %383 = vector.extract_strided_slice %382 {offsets = [0, 0], sizes = [16, 3], strides = [1, 1]} : vector<16x6xf32> to vector<16x3xf32>
    %384 = vector.extract_strided_slice %382 {offsets = [0, 3], sizes = [16, 3], strides = [1, 1]} : vector<16x6xf32> to vector<16x3xf32>
    %385 = arith.addf %383, %384 : vector<16x3xf32>
    %c112 = arith.constant 112 : index
    %c0_27 = arith.constant 0 : index
    %386 = vector.load %arg9[%c112, %c0_27] : memref<128x3xf32, #tpu.memory_space<vmem>>, vector<16x3xf32>
    tpu.vector_store %arg9[%c112, %c0_27], %385 {strides = array<i32>} : memref<128x3xf32, #tpu.memory_space<vmem>>, vector<16x3xf32>,
    %c0_28 = arith.constant 0 : index
    %c0_29 = arith.constant 0 : index
    %387 = vector.load %arg9[%c0_28, %c0_29] : memref<128x3xf32, #tpu.memory_space<vmem>>, vector<128x3xf32>
    %c0_30 = arith.constant 0 : index
    %c0_31 = arith.constant 0 : index
    %388 = vector.load %arg6[%c0_30, %c0_31] : memref<3x2xf32, #tpu.memory_space<vmem>>, vector<3x2xf32>
    %cst_32 = arith.constant dense<0.000000e+00> : vector<128x2xf32>
    %389 = tpu.matmul %387, %388, %cst_32 {dimension_numbers = #tpu.dot_dimension_numbers<[1], [0], [0], [1], [0, 0, 1, 1], [], []>, precision = #tpu.contract_precision<fp32>} : vector<128x3xf32>, vector<3x2xf32>, vector<128x2xf32> -> vector<128x2xf32>
    %c0_33 = arith.constant 0 : index
    %c0_34 = arith.constant 0 : index
    %390 = vector.load %arg7[%c0_33, %c0_34] : memref<1x2xf32, #tpu.memory_space<vmem>>, vector<1x2xf32>
    %391 = vector.broadcast %390 : vector<1x2xf32> to vector<128x2xf32>
    %392 = arith.addf %389, %391 : vector<128x2xf32>
    %c0_35 = arith.constant 0 : index
    %c0_36 = arith.constant 0 : index
    %393 = vector.load %arg8[%c0_35, %c0_36] : memref<128x2xf32, #tpu.memory_space<vmem>>, vector<128x2xf32>
    tpu.vector_store %arg8[%c0_35, %c0_36], %392 {strides = array<i32>} : memref<128x2xf32, #tpu.memory_space<vmem>>, vector<128x2xf32>,
    return
  }
}

</mosaic_0001>

<llo_original>
// kernel: bidirectional_lstm_forward.1
$region0: #{bidirectional_lstm_forward.1}
  #allocation0 [shape = 'u32[]', space=smem, size = 0x4, offset = 0x4, fixed_abs, tag = 'smem constant byte address 0x4 - core index']
  #allocation1 [shape = 'u32[72,128]{1,0:T(1,128)}', space=vmem, size = 0x9000, scoped, tag = 'internal scratch']
  #allocation2 [shape = 'f32[128,3]{1,0:T(8,128)}', space=vmem, size = 0x10000, scoped, tag = 'scratch operand']
  %s0 = inlined_call_operand.vmem [shape: f32[128,6], index: 0, kind: input, shape index: {}]
  %s1 = inlined_call_operand.vmem [shape: f32[16,6], index: 1, kind: input, shape index: {}]
  %s2 = inlined_call_operand.vmem [shape: f32[16,6], index: 2, kind: input, shape index: {}]
  %s3 = inlined_call_operand.vmem [shape: f32[6,24], index: 3, kind: input, shape index: {}]
  %s4 = inlined_call_operand.vmem [shape: f32[6,24], index: 4, kind: input, shape index: {}]
  %s5 = inlined_call_operand.vmem [shape: f32[1,24], index: 5, kind: input, shape index: {}]
  %s6 = inlined_call_operand.vmem [shape: f32[3,2], index: 6, kind: input, shape index: {}]
  %s7 = inlined_call_operand.vmem [shape: f32[1,2], index: 7, kind: input, shape index: {}]
  %s8 = inlined_call_operand.vmem [shape: f32[128,2], index: 8, kind: output, shape index: {}]
  %s9 = sld [smem:[#allocation0]]
  $region42: #{bidirectional_lstm_forward.1} parent=0
    _
  %s11 = ssub.s32 1, %s9
  %s12 = scalar_select 0, %s11, %s9
  // Predicated region
  $region2: #{bidirectional_lstm_forward.1} parent=0 // pred_check
    _
  $region3: #{bidirectional_lstm_forward.1} parent=0 // pred_check_branch
    %14 = sbr.rel (0) target = $region5
  $region4: #{bidirectional_lstm_forward.1} parent=0 // pred_region
    _
  $region5: #{bidirectional_lstm_forward.1} parent=0 // pred_fallthru
    _
  // Predicated region
  $region6: #{bidirectional_lstm_forward.1} parent=0 // pred_check
    _
  $region7: #{bidirectional_lstm_forward.1} parent=0 // pred_check_branch
    %16 = sbr.rel (0) target = $region9
  $region8: #{bidirectional_lstm_forward.1} parent=0 // pred_region
    _
  $region9: #{bidirectional_lstm_forward.1} parent=0 // pred_fallthru
    _
  // Predicated region
  $region10: #{bidirectional_lstm_forward.1} parent=0 // pred_check
    _
  $region11: #{bidirectional_lstm_forward.1} parent=0 // pred_check_branch
    %18 = sbr.rel (0) target = $region13
  $region12: #{bidirectional_lstm_forward.1} parent=0 // pred_region
    _
  $region13: #{bidirectional_lstm_forward.1} parent=0 // pred_fallthru
    _
  // Predicated region
  $region14: #{bidirectional_lstm_forward.1} parent=0 // pred_check
    _
  $region15: #{bidirectional_lstm_forward.1} parent=0 // pred_check_branch
    %20 = sbr.rel (0) target = $region17
  $region16: #{bidirectional_lstm_forward.1} parent=0 // pred_region
    _
  $region17: #{bidirectional_lstm_forward.1} parent=0 // pred_fallthru
    _
  // Predicated region
  $region18: #{bidirectional_lstm_forward.1} parent=0 // pred_check
    _
  $region19: #{bidirectional_lstm_forward.1} parent=0 // pred_check_branch
    %22 = sbr.rel (0) target = $region21
  $region20: #{bidirectional_lstm_forward.1} parent=0 // pred_region
    _
  $region21: #{bidirectional_lstm_forward.1} parent=0 // pred_fallthru
    _
  // Predicated region
  $region22: #{bidirectional_lstm_forward.1} parent=0 // pred_check
    _
  $region23: #{bidirectional_lstm_forward.1} parent=0 // pred_check_branch
    %24 = sbr.rel (0) target = $region25
  $region24: #{bidirectional_lstm_forward.1} parent=0 // pred_region
    _
  $region25: #{bidirectional_lstm_forward.1} parent=0 // pred_fallthru
    _
  // Predicated region
  $region26: #{bidirectional_lstm_forward.1} parent=0 // pred_check
    _
  $region27: #{bidirectional_lstm_forward.1} parent=0 // pred_check_branch
    %26 = sbr.rel (0) target = $region29
  $region28: #{bidirectional_lstm_forward.1} parent=0 // pred_region
    _
  $region29: #{bidirectional_lstm_forward.1} parent=0 // pred_fallthru
    _
  // Predicated region
  $region30: #{bidirectional_lstm_forward.1} parent=0 // pred_check
    _
  $region31: #{bidirectional_lstm_forward.1} parent=0 // pred_check_branch
    %28 = sbr.rel (0) target = $region33
  $region32: #{bidirectional_lstm_forward.1} parent=0 // pred_region
    _
  $region33: #{bidirectional_lstm_forward.1} parent=0 // pred_fallthru
    _
  %v29 = vld [vmem:[%s0] sm:$0xff]
  %v30 = vld [vmem:[%s0 + $0x8] sm:$0xff]
  %v31 = vld [vmem:[%s0 + $0x10] sm:$0xff]
  %v32 = vld [vmem:[%s0 + $0x18] sm:$0xff]
  %v33 = vld [vmem:[%s0 + $0x20] sm:$0xff]
  %v34 = vld [vmem:[%s0 + $0x28] sm:$0xff]
  %v35 = vld [vmem:[%s0 + $0x30] sm:$0xff]
  %v36 = vld [vmem:[%s0 + $0x38] sm:$0xff]
  %v37 = vld [vmem:[%s0 + $0x40] sm:$0xff]
  %v38 = vld [vmem:[%s0 + $0x48] sm:$0xff]
  %v39 = vld [vmem:[%s0 + $0x50] sm:$0xff]
  %v40 = vld [vmem:[%s0 + $0x58] sm:$0xff]
  %v41 = vld [vmem:[%s0 + $0x60] sm:$0xff]
  %v42 = vld [vmem:[%s0 + $0x68] sm:$0xff]
  %v43 = vld [vmem:[%s0 + $0x70] sm:$0xff]
  %v44 = vld [vmem:[%s0 + $0x78] sm:$0xff]
  %v45 = vld [vmem:[%s3] sm:$0x3f]
  %v46 = vld [vmem:[%s5] sm:$0x1]
  %v48 = vperm.slane %v46, 0
  %vm50 = vcmask 48128
  %v52 = vsel %vm50, %v29, 0
  %v55 = vsel %vm50, %v30, 0
  %v58 = vsel %vm50, %v31, 0
  %v61 = vsel %vm50, %v32, 0
  %v64 = vsel %vm50, %v33, 0
  %v67 = vsel %vm50, %v34, 0
  %v70 = vsel %vm50, %v35, 0
  %v73 = vsel %vm50, %v36, 0
  %v76 = vsel %vm50, %v37, 0
  %v79 = vsel %vm50, %v38, 0
  %v82 = vsel %vm50, %v39, 0
  %v85 = vsel %vm50, %v40, 0
  %v88 = vsel %vm50, %v41, 0
  %v91 = vsel %vm50, %v42, 0
  %v94 = vsel %vm50, %v43, 0
  %v97 = vsel %vm50, %v44, 0
  %vm99 = vcmask 1045504
  %v101 = vsel %vm99, %v45, 0
  %103 = vmatpush.msra.mxu0 0.0
  %104 = vmatpush.msra.mxu0 0.0
  %105 = vmatpush.msra.mxu0 0.0
  %106 = vmatpush.msra.mxu0 0.0
  %107 = vmatpush.msra.mxu0 0.0
  %108 = vmatpush.msra.mxu0 0.0
  %109 = vmatpush.msra.mxu0 0.0
  %110 = vmatpush.msra.mxu0 0.0
  %111 = vmatpush.msra.mxu0 0.0
  %112 = vmatpush.msra.mxu0 0.0
  %113 = vmatpush.msra.mxu0 0.0
  %114 = vmatpush.msra.mxu0 0.0
  %115 = vmatpush.msra.mxu0 0.0
  %116 = vmatpush.msra.mxu0 0.0
  %117 = vmatpush.msra.mxu0 0.0
  %v118 = vand.u32 %v101, 4294901760
  %119 = vmatpush.msra.mxu0 %v118
  %v120 = vand.u32 %v52, 4294901760
  %v121 = vsub.f32 %v52, %v120
  %v122 = vand.u32 %v121, 4294901760
  %v123 = vsub.f32 %v121, %v122
  %v124 = vand.u32 %v123, 4294901760
  %125 = vmatmul.f32.gmra.mxu0 %v124
  %v126 = vpop.f32.mrf.mxu0
  %v127 = vadd.f32 %v48, %v126
  %v128 = vand.u32 %v55, 4294901760
  %v129 = vsub.f32 %v55, %v128
  %v130 = vand.u32 %v129, 4294901760
  %v131 = vsub.f32 %v129, %v130
  %v132 = vand.u32 %v131, 4294901760
  %133 = vmatmul.f32.gmra.mxu0 %v132
  %v134 = vpop.f32.mrf.mxu0
  %v135 = vadd.f32 %v48, %v134
  %v136 = vand.u32 %v58, 4294901760
  %v137 = vsub.f32 %v58, %v136
  %v138 = vand.u32 %v137, 4294901760
  %v139 = vsub.f32 %v137, %v138
  %v140 = vand.u32 %v139, 4294901760
  %141 = vmatmul.f32.gmra.mxu0 %v140
  %v142 = vpop.f32.mrf.mxu0
  %v143 = vadd.f32 %v48, %v142
  %v144 = vand.u32 %v61, 4294901760
  %v145 = vsub.f32 %v61, %v144
  %v146 = vand.u32 %v145, 4294901760
  %v147 = vsub.f32 %v145, %v146
  %v148 = vand.u32 %v147, 4294901760
  %149 = vmatmul.f32.gmra.mxu0 %v148
  %v150 = vpop.f32.mrf.mxu0
  %v151 = vadd.f32 %v48, %v150
  %v152 = vand.u32 %v64, 4294901760
  %v153 = vsub.f32 %v64, %v152
  %v154 = vand.u32 %v153, 4294901760
  %v155 = vsub.f32 %v153, %v154
  %v156 = vand.u32 %v155, 4294901760
  %157 = vmatmul.f32.gmra.mxu0 %v156
  %v158 = vpop.f32.mrf.mxu0
  %v159 = vadd.f32 %v48, %v158
  %v160 = vand.u32 %v67, 4294901760
  %v161 = vsub.f32 %v67, %v160
  %v162 = vand.u32 %v161, 4294901760
  %v163 = vsub.f32 %v161, %v162
  %v164 = vand.u32 %v163, 4294901760
  %165 = vmatmul.f32.gmra.mxu0 %v164
  %v166 = vpop.f32.mrf.mxu0
  %v167 = vadd.f32 %v48, %v166
  %v168 = vand.u32 %v70, 4294901760
  %v169 = vsub.f32 %v70, %v168
  %v170 = vand.u32 %v169, 4294901760
  %v171 = vsub.f32 %v169, %v170
  %v172 = vand.u32 %v171, 4294901760
  %173 = vmatmul.f32.gmra.mxu0 %v172
  %v174 = vpop.f32.mrf.mxu0
  %v175 = vadd.f32 %v48, %v174
  %v176 = vand.u32 %v73, 4294901760
  %v177 = vsub.f32 %v73, %v176
  %v178 = vand.u32 %v177, 4294901760
  %v179 = vsub.f32 %v177, %v178
  %v180 = vand.u32 %v179, 4294901760
  %181 = vmatmul.f32.gmra.mxu0 %v180
  %v182 = vpop.f32.mrf.mxu0
  %v183 = vadd.f32 %v48, %v182
  %v184 = vand.u32 %v76, 4294901760
  %v185 = vsub.f32 %v76, %v184
  %v186 = vand.u32 %v185, 4294901760
  %v187 = vsub.f32 %v185, %v186
  %v188 = vand.u32 %v187, 4294901760
  %189 = vmatmul.f32.gmra.mxu0 %v188
  %v190 = vpop.f32.mrf.mxu0
  %v191 = vadd.f32 %v48, %v190
  %v192 = vand.u32 %v79, 4294901760
  %v193 = vsub.f32 %v79, %v192
  %v194 = vand.u32 %v193, 4294901760
  %v195 = vsub.f32 %v193, %v194
  %v196 = vand.u32 %v195, 4294901760
  %197 = vmatmul.f32.gmra.mxu0 %v196
  %v198 = vpop.f32.mrf.mxu0
  %v199 = vadd.f32 %v48, %v198
  %v200 = vand.u32 %v82, 4294901760
  %v201 = vsub.f32 %v82, %v200
  %v202 = vand.u32 %v201, 4294901760
  %v203 = vsub.f32 %v201, %v202
  %v204 = vand.u32 %v203, 4294901760
  %205 = vmatmul.f32.gmra.mxu0 %v204
  %v206 = vpop.f32.mrf.mxu0
  %v207 = vadd.f32 %v48, %v206
  %v208 = vand.u32 %v85, 4294901760
  %v209 = vsub.f32 %v85, %v208
  %v210 = vand.u32 %v209, 4294901760
  %v211 = vsub.f32 %v209, %v210
  %v212 = vand.u32 %v211, 4294901760
  %213 = vmatmul.f32.gmra.mxu0 %v212
  %v214 = vpop.f32.mrf.mxu0
  %v215 = vadd.f32 %v48, %v214
  %v216 = vand.u32 %v88, 4294901760
  %v217 = vsub.f32 %v88, %v216
  %v218 = vand.u32 %v217, 4294901760
  %v219 = vsub.f32 %v217, %v218
  %v220 = vand.u32 %v219, 4294901760
  %221 = vmatmul.f32.gmra.mxu0 %v220
  %v222 = vpop.f32.mrf.mxu0
  %v223 = vadd.f32 %v48, %v222
  %v224 = vand.u32 %v91, 4294901760
  %v225 = vsub.f32 %v91, %v224
  %v226 = vand.u32 %v225, 4294901760
  %v227 = vsub.f32 %v225, %v226
  %v228 = vand.u32 %v227, 4294901760
  %229 = vmatmul.f32.gmra.mxu0 %v228
  %v230 = vpop.f32.mrf.mxu0
  %v231 = vadd.f32 %v48, %v230
  %v232 = vand.u32 %v94, 4294901760
  %v233 = vsub.f32 %v94, %v232
  %v234 = vand.u32 %v233, 4294901760
  %v235 = vsub.f32 %v233, %v234
  %v236 = vand.u32 %v235, 4294901760
  %237 = vmatmul.f32.gmra.mxu0 %v236
  %v238 = vpop.f32.mrf.mxu0
  %v239 = vadd.f32 %v48, %v238
  %v240 = vand.u32 %v97, 4294901760
  %v241 = vsub.f32 %v97, %v240
  %v242 = vand.u32 %v241, 4294901760
  %v243 = vsub.f32 %v241, %v242
  %v244 = vand.u32 %v243, 4294901760
  %245 = vmatmul.f32.gmra.mxu0 %v244
  %v246 = vpop.f32.mrf.mxu0
  %v247 = vadd.f32 %v48, %v246
  %248 = vdwg.mxu0
  %249 = vmatpush.msra.mxu0 0.0
  %250 = vmatpush.msra.mxu0 0.0
  %251 = vmatpush.msra.mxu0 0.0
  %252 = vmatpush.msra.mxu0 0.0
  %253 = vmatpush.msra.mxu0 0.0
  %254 = vmatpush.msra.mxu0 0.0
  %255 = vmatpush.msra.mxu0 0.0
  %256 = vmatpush.msra.mxu0 0.0
  %257 = vmatpush.msra.mxu0 0.0
  %258 = vmatpush.msra.mxu0 0.0
  %259 = vmatpush.msra.mxu0 0.0
  %260 = vmatpush.msra.mxu0 0.0
  %261 = vmatpush.msra.mxu0 0.0
  %262 = vmatpush.msra.mxu0 0.0
  %263 = vmatpush.msra.mxu0 0.0
  %v264 = vand.u32 %v101, 4294901760
  %v265 = vsub.f32 %v101, %v264
  %v266 = vand.u32 %v265, 4294901760
  %v267 = vsub.f32 %v265, %v266
  %v268 = vand.u32 %v267, 4294901760
  %269 = vmatpush.msra.mxu0 %v268
  %v270 = vand.u32 %v52, 4294901760
  %271 = vmatmul.f32.gmra.mxu0 %v270
  %v272 = vpop.f32.mrf.mxu0
  %v273 = vadd.f32 %v127, %v272
  %v274 = vand.u32 %v55, 4294901760
  %275 = vmatmul.f32.gmra.mxu0 %v274
  %v276 = vpop.f32.mrf.mxu0
  %v277 = vadd.f32 %v135, %v276
  %v278 = vand.u32 %v58, 4294901760
  %279 = vmatmul.f32.gmra.mxu0 %v278
  %v280 = vpop.f32.mrf.mxu0
  %v281 = vadd.f32 %v143, %v280
  %v282 = vand.u32 %v61, 4294901760
  %283 = vmatmul.f32.gmra.mxu0 %v282
  %v284 = vpop.f32.mrf.mxu0
  %v285 = vadd.f32 %v151, %v284
  %v286 = vand.u32 %v64, 4294901760
  %287 = vmatmul.f32.gmra.mxu0 %v286
  %v288 = vpop.f32.mrf.mxu0
  %v289 = vadd.f32 %v159, %v288
  %v290 = vand.u32 %v67, 4294901760
  %291 = vmatmul.f32.gmra.mxu0 %v290
  %v292 = vpop.f32.mrf.mxu0
  %v293 = vadd.f32 %v167, %v292
  %v294 = vand.u32 %v70, 4294901760
  %295 = vmatmul.f32.gmra.mxu0 %v294
  %v296 = vpop.f32.mrf.mxu0
  %v297 = vadd.f32 %v175, %v296
  %v298 = vand.u32 %v73, 4294901760
  %299 = vmatmul.f32.gmra.mxu0 %v298
  %v300 = vpop.f32.mrf.mxu0
  %v301 = vadd.f32 %v183, %v300
  %v302 = vand.u32 %v76, 4294901760
  %303 = vmatmul.f32.gmra.mxu0 %v302
  %v304 = vpop.f32.mrf.mxu0
  %v305 = vadd.f32 %v191, %v304
  %v306 = vand.u32 %v79, 4294901760
  %307 = vmatmul.f32.gmra.mxu0 %v306
  %v308 = vpop.f32.mrf.mxu0
  %v309 = vadd.f32 %v199, %v308
  %v310 = vand.u32 %v82, 4294901760
  %311 = vmatmul.f32.gmra.mxu0 %v310
  %v312 = vpop.f32.mrf.mxu0
  %v313 = vadd.f32 %v207, %v312
  %v314 = vand.u32 %v85, 4294901760
  %315 = vmatmul.f32.gmra.mxu0 %v314
  %v316 = vpop.f32.mrf.mxu0
  %v317 = vadd.f32 %v215, %v316
  %v318 = vand.u32 %v88, 4294901760
  %319 = vmatmul.f32.gmra.mxu0 %v318
  %v320 = vpop.f32.mrf.mxu0
  %v321 = vadd.f32 %v223, %v320
  %v322 = vand.u32 %v91, 4294901760
  %323 = vmatmul.f32.gmra.mxu0 %v322
  %v324 = vpop.f32.mrf.mxu0
  %v325 = vadd.f32 %v231, %v324
  %v326 = vand.u32 %v94, 4294901760
  %327 = vmatmul.f32.gmra.mxu0 %v326
  %v328 = vpop.f32.mrf.mxu0
  %v329 = vadd.f32 %v239, %v328
  %v330 = vand.u32 %v97, 4294901760
  %331 = vmatmul.f32.gmra.mxu0 %v330
  %v332 = vpop.f32.mrf.mxu0
  %v333 = vadd.f32 %v247, %v332
  %334 = vdwg.mxu0
  %335 = vmatpush.msra.mxu0 0.0
  %336 = vmatpush.msra.mxu0 0.0
  %337 = vmatpush.msra.mxu0 0.0
  %338 = vmatpush.msra.mxu0 0.0
  %339 = vmatpush.msra.mxu0 0.0
  %340 = vmatpush.msra.mxu0 0.0
  %341 = vmatpush.msra.mxu0 0.0
  %342 = vmatpush.msra.mxu0 0.0
  %343 = vmatpush.msra.mxu0 0.0
  %344 = vmatpush.msra.mxu0 0.0
  %345 = vmatpush.msra.mxu0 0.0
  %346 = vmatpush.msra.mxu0 0.0
  %347 = vmatpush.msra.mxu0 0.0
  %348 = vmatpush.msra.mxu0 0.0
  %349 = vmatpush.msra.mxu0 0.0
  %v350 = vand.u32 %v101, 4294901760
  %v351 = vsub.f32 %v101, %v350
  %352 = vmatpush.msra.mxu0 %v351
  %v353 = vand.u32 %v52, 4294901760
  %v354 = vsub.f32 %v52, %v353
  %355 = vmatmul.f32.gmra.mxu0 %v354
  %v356 = vpop.f32.mrf.mxu0
  %v357 = vadd.f32 %v273, %v356
  %v358 = vand.u32 %v55, 4294901760
  %v359 = vsub.f32 %v55, %v358
  %360 = vmatmul.f32.gmra.mxu0 %v359
  %v361 = vpop.f32.mrf.mxu0
  %v362 = vadd.f32 %v277, %v361
  %v363 = vand.u32 %v58, 4294901760
  %v364 = vsub.f32 %v58, %v363
  %365 = vmatmul.f32.gmra.mxu0 %v364
  %v366 = vpop.f32.mrf.mxu0
  %v367 = vadd.f32 %v281, %v366
  %v368 = vand.u32 %v61, 4294901760
  %v369 = vsub.f32 %v61, %v368
  %370 = vmatmul.f32.gmra.mxu0 %v369
  %v371 = vpop.f32.mrf.mxu0
  %v372 = vadd.f32 %v285, %v371
  %v373 = vand.u32 %v64, 4294901760
  %v374 = vsub.f32 %v64, %v373
  %375 = vmatmul.f32.gmra.mxu0 %v374
  %v376 = vpop.f32.mrf.mxu0
  %v377 = vadd.f32 %v289, %v376
  %v378 = vand.u32 %v67, 4294901760
  %v379 = vsub.f32 %v67, %v378
  %380 = vmatmul.f32.gmra.mxu0 %v379
  %v381 = vpop.f32.mrf.mxu0
  %v382 = vadd.f32 %v293, %v381
  %v383 = vand.u32 %v70, 4294901760
  %v384 = vsub.f32 %v70, %v383
  %385 = vmatmul.f32.gmra.mxu0 %v384
  %v386 = vpop.f32.mrf.mxu0
  %v387 = vadd.f32 %v297, %v386
  %v388 = vand.u32 %v73, 4294901760
  %v389 = vsub.f32 %v73, %v388
  %390 = vmatmul.f32.gmra.mxu0 %v389
  %v391 = vpop.f32.mrf.mxu0
  %v392 = vadd.f32 %v301, %v391
  %v393 = vand.u32 %v76, 4294901760
  %v394 = vsub.f32 %v76, %v393
  %395 = vmatmul.f32.gmra.mxu0 %v394
  %v396 = vpop.f32.mrf.mxu0
  %v397 = vadd.f32 %v305, %v396
  %v398 = vand.u32 %v79, 4294901760
  %v399 = vsub.f32 %v79, %v398
  %400 = vmatmul.f32.gmra.mxu0 %v399
  %v401 = vpop.f32.mrf.mxu0
  %v402 = vadd.f32 %v309, %v401
  %v403 = vand.u32 %v82, 4294901760
  %v404 = vsub.f32 %v82, %v403
  %405 = vmatmul.f32.gmra.mxu0 %v404
  %v406 = vpop.f32.mrf.mxu0
  %v407 = vadd.f32 %v313, %v406
  %v408 = vand.u32 %v85, 4294901760
  %v409 = vsub.f32 %v85, %v408
  %410 = vmatmul.f32.gmra.mxu0 %v409
  %v411 = vpop.f32.mrf.mxu0
  %v412 = vadd.f32 %v317, %v411
  %v413 = vand.u32 %v88, 4294901760
  %v414 = vsub.f32 %v88, %v413
  %415 = vmatmul.f32.gmra.mxu0 %v414
  %v416 = vpop.f32.mrf.mxu0
  %v417 = vadd.f32 %v321, %v416
  %v418 = vand.u32 %v91, 4294901760
  %v419 = vsub.f32 %v91, %v418
  %420 = vmatmul.f32.gmra.mxu0 %v419
  %v421 = vpop.f32.mrf.mxu0
  %v422 = vadd.f32 %v325, %v421
  %v423 = vand.u32 %v94, 4294901760
  %v424 = vsub.f32 %v94, %v423
  %425 = vmatmul.f32.gmra.mxu0 %v424
  %v426 = vpop.f32.mrf.mxu0
  %v427 = vadd.f32 %v329, %v426
  %v428 = vand.u32 %v97, 4294901760
  %v429 = vsub.f32 %v97, %v428
  %430 = vmatmul.f32.gmra.mxu0 %v429
  %v431 = vpop.f32.mrf.mxu0
  %v432 = vadd.f32 %v333, %v431
  %433 = vdwg.mxu0
  %434 = vmatpush.msra.mxu0 0.0
  %435 = vmatpush.msra.mxu0 0.0
  %436 = vmatpush.msra.mxu0 0.0
  %437 = vmatpush.msra.mxu0 0.0
  %438 = vmatpush.msra.mxu0 0.0
  %439 = vmatpush.msra.mxu0 0.0
  %440 = vmatpush.msra.mxu0 0.0
  %441 = vmatpush.msra.mxu0 0.0
  %442 = vmatpush.msra.mxu0 0.0
  %443 = vmatpush.msra.mxu0 0.0
  %444 = vmatpush.msra.mxu0 0.0
  %445 = vmatpush.msra.mxu0 0.0
  %446 = vmatpush.msra.mxu0 0.0
  %447 = vmatpush.msra.mxu0 0.0
  %448 = vmatpush.msra.mxu0 0.0
  %v449 = vand.u32 %v101, 4294901760
  %450 = vmatpush.msra.mxu0 %v449
  %v451 = vand.u32 %v52, 4294901760
  %v452 = vsub.f32 %v52, %v451
  %v453 = vand.u32 %v452, 4294901760
  %454 = vmatmul.f32.gmra.mxu0 %v453
  %v455 = vpop.f32.mrf.mxu0
  %v456 = vadd.f32 %v357, %v455
  %v457 = vand.u32 %v55, 4294901760
  %v458 = vsub.f32 %v55, %v457
  %v459 = vand.u32 %v458, 4294901760
  %460 = vmatmul.f32.gmra.mxu0 %v459
  %v461 = vpop.f32.mrf.mxu0
  %v462 = vadd.f32 %v362, %v461
  %v463 = vand.u32 %v58, 4294901760
  %v464 = vsub.f32 %v58, %v463
  %v465 = vand.u32 %v464, 4294901760
  %466 = vmatmul.f32.gmra.mxu0 %v465
  %v467 = vpop.f32.mrf.mxu0
  %v468 = vadd.f32 %v367, %v467
  %v469 = vand.u32 %v61, 4294901760
  %v470 = vsub.f32 %v61, %v469
  %v471 = vand.u32 %v470, 4294901760
  %472 = vmatmul.f32.gmra.mxu0 %v471
  %v473 = vpop.f32.mrf.mxu0
  %v474 = vadd.f32 %v372, %v473
  %v475 = vand.u32 %v64, 4294901760
  %v476 = vsub.f32 %v64, %v475
  %v477 = vand.u32 %v476, 4294901760
  %478 = vmatmul.f32.gmra.mxu0 %v477
  %v479 = vpop.f32.mrf.mxu0
  %v480 = vadd.f32 %v377, %v479
  %v481 = vand.u32 %v67, 4294901760
  %v482 = vsub.f32 %v67, %v481
  %v483 = vand.u32 %v482, 4294901760
  %484 = vmatmul.f32.gmra.mxu0 %v483
  %v485 = vpop.f32.mrf.mxu0
  %v486 = vadd.f32 %v382, %v485
  %v487 = vand.u32 %v70, 4294901760
  %v488 = vsub.f32 %v70, %v487
  %v489 = vand.u32 %v488, 4294901760
  %490 = vmatmul.f32.gmra.mxu0 %v489
  %v491 = vpop.f32.mrf.mxu0
  %v492 = vadd.f32 %v387, %v491
  %v493 = vand.u32 %v73, 4294901760
  %v494 = vsub.f32 %v73, %v493
  %v495 = vand.u32 %v494, 4294901760
  %496 = vmatmul.f32.gmra.mxu0 %v495
  %v497 = vpop.f32.mrf.mxu0
  %v498 = vadd.f32 %v392, %v497
  %v499 = vand.u32 %v76, 4294901760
  %v500 = vsub.f32 %v76, %v499
  %v501 = vand.u32 %v500, 4294901760
  %502 = vmatmul.f32.gmra.mxu0 %v501
  %v503 = vpop.f32.mrf.mxu0
  %v504 = vadd.f32 %v397, %v503
  %v505 = vand.u32 %v79, 4294901760
  %v506 = vsub.f32 %v79, %v505
  %v507 = vand.u32 %v506, 4294901760
  %508 = vmatmul.f32.gmra.mxu0 %v507
  %v509 = vpop.f32.mrf.mxu0
  %v510 = vadd.f32 %v402, %v509
  %v511 = vand.u32 %v82, 4294901760
  %v512 = vsub.f32 %v82, %v511
  %v513 = vand.u32 %v512, 4294901760
  %514 = vmatmul.f32.gmra.mxu0 %v513
  %v515 = vpop.f32.mrf.mxu0
  %v516 = vadd.f32 %v407, %v515
  %v517 = vand.u32 %v85, 4294901760
  %v518 = vsub.f32 %v85, %v517
  %v519 = vand.u32 %v518, 4294901760
  %520 = vmatmul.f32.gmra.mxu0 %v519
  %v521 = vpop.f32.mrf.mxu0
  %v522 = vadd.f32 %v412, %v521
  %v523 = vand.u32 %v88, 4294901760
  %v524 = vsub.f32 %v88, %v523
  %v525 = vand.u32 %v524, 4294901760
  %526 = vmatmul.f32.gmra.mxu0 %v525
  %v527 = vpop.f32.mrf.mxu0
  %v528 = vadd.f32 %v417, %v527
  %v529 = vand.u32 %v91, 4294901760
  %v530 = vsub.f32 %v91, %v529
  %v531 = vand.u32 %v530, 4294901760
  %532 = vmatmul.f32.gmra.mxu0 %v531
  %v533 = vpop.f32.mrf.mxu0
  %v534 = vadd.f32 %v422, %v533
  %v535 = vand.u32 %v94, 4294901760
  %v536 = vsub.f32 %v94, %v535
  %v537 = vand.u32 %v536, 4294901760
  %538 = vmatmul.f32.gmra.mxu0 %v537
  %v539 = vpop.f32.mrf.mxu0
  %v540 = vadd.f32 %v427, %v539
  %v541 = vand.u32 %v97, 4294901760
  %v542 = vsub.f32 %v97, %v541
  %v543 = vand.u32 %v542, 4294901760
  %544 = vmatmul.f32.gmra.mxu0 %v543
  %v545 = vpop.f32.mrf.mxu0
  %v546 = vadd.f32 %v432, %v545
  %547 = vdwg.mxu0
  %548 = vmatpush.msra.mxu0 0.0
  %549 = vmatpush.msra.mxu0 0.0
  %550 = vmatpush.msra.mxu0 0.0
  %551 = vmatpush.msra.mxu0 0.0
  %552 = vmatpush.msra.mxu0 0.0
  %553 = vmatpush.msra.mxu0 0.0
  %554 = vmatpush.msra.mxu0 0.0
  %555 = vmatpush.msra.mxu0 0.0
  %556 = vmatpush.msra.mxu0 0.0
  %557 = vmatpush.msra.mxu0 0.0
  %558 = vmatpush.msra.mxu0 0.0
  %559 = vmatpush.msra.mxu0 0.0
  %560 = vmatpush.msra.mxu0 0.0
  %561 = vmatpush.msra.mxu0 0.0
  %562 = vmatpush.msra.mxu0 0.0
  %v563 = vand.u32 %v101, 4294901760
  %v564 = vsub.f32 %v101, %v563
  %v565 = vand.u32 %v564, 4294901760
  %566 = vmatpush.msra.mxu0 %v565
  %v567 = vand.u32 %v52, 4294901760
  %568 = vmatmul.f32.gmra.mxu0 %v567
  %v569 = vpop.f32.mrf.mxu0
  %v570 = vadd.f32 %v456, %v569
  %v571 = vand.u32 %v55, 4294901760
  %572 = vmatmul.f32.gmra.mxu0 %v571
  %v573 = vpop.f32.mrf.mxu0
  %v574 = vadd.f32 %v462, %v573
  %v575 = vand.u32 %v58, 4294901760
  %576 = vmatmul.f32.gmra.mxu0 %v575
  %v577 = vpop.f32.mrf.mxu0
  %v578 = vadd.f32 %v468, %v577
  %v579 = vand.u32 %v61, 4294901760
  %580 = vmatmul.f32.gmra.mxu0 %v579
  %v581 = vpop.f32.mrf.mxu0
  %v582 = vadd.f32 %v474, %v581
  %v583 = vand.u32 %v64, 4294901760
  %584 = vmatmul.f32.gmra.mxu0 %v583
  %v585 = vpop.f32.mrf.mxu0
  %v586 = vadd.f32 %v480, %v585
  %v587 = vand.u32 %v67, 4294901760
  %588 = vmatmul.f32.gmra.mxu0 %v587
  %v589 = vpop.f32.mrf.mxu0
  %v590 = vadd.f32 %v486, %v589
  %v591 = vand.u32 %v70, 4294901760
  %592 = vmatmul.f32.gmra.mxu0 %v591
  %v593 = vpop.f32.mrf.mxu0
  %v594 = vadd.f32 %v492, %v593
  %v595 = vand.u32 %v73, 4294901760
  %596 = vmatmul.f32.gmra.mxu0 %v595
  %v597 = vpop.f32.mrf.mxu0
  %v598 = vadd.f32 %v498, %v597
  %v599 = vand.u32 %v76, 4294901760
  %600 = vmatmul.f32.gmra.mxu0 %v599
  %v601 = vpop.f32.mrf.mxu0
  %v602 = vadd.f32 %v504, %v601
  %v603 = vand.u32 %v79, 4294901760
  %604 = vmatmul.f32.gmra.mxu0 %v603
  %v605 = vpop.f32.mrf.mxu0
  %v606 = vadd.f32 %v510, %v605
  %v607 = vand.u32 %v82, 4294901760
  %608 = vmatmul.f32.gmra.mxu0 %v607
  %v609 = vpop.f32.mrf.mxu0
  %v610 = vadd.f32 %v516, %v609
  %v611 = vand.u32 %v85, 4294901760
  %612 = vmatmul.f32.gmra.mxu0 %v611
  %v613 = vpop.f32.mrf.mxu0
  %v614 = vadd.f32 %v522, %v613
  %v615 = vand.u32 %v88, 4294901760
  %616 = vmatmul.f32.gmra.mxu0 %v615
  %v617 = vpop.f32.mrf.mxu0
  %v618 = vadd.f32 %v528, %v617
  %v619 = vand.u32 %v91, 4294901760
  %620 = vmatmul.f32.gmra.mxu0 %v619
  %v621 = vpop.f32.mrf.mxu0
  %v622 = vadd.f32 %v534, %v621
  %v623 = vand.u32 %v94, 4294901760
  %624 = vmatmul.f32.gmra.mxu0 %v623
  %v625 = vpop.f32.mrf.mxu0
  %v626 = vadd.f32 %v540, %v625
  %v627 = vand.u32 %v97, 4294901760
  %628 = vmatmul.f32.gmra.mxu0 %v627
  %v629 = vpop.f32.mrf.mxu0
  %v630 = vadd.f32 %v546, %v629
  %631 = vdwg.mxu0
  %632 = vmatpush.msra.mxu0 0.0
  %633 = vmatpush.msra.mxu0 0.0
  %634 = vmatpush.msra.mxu0 0.0
  %635 = vmatpush.msra.mxu0 0.0
  %636 = vmatpush.msra.mxu0 0.0
  %637 = vmatpush.msra.mxu0 0.0
  %638 = vmatpush.msra.mxu0 0.0
  %639 = vmatpush.msra.mxu0 0.0
  %640 = vmatpush.msra.mxu0 0.0
  %641 = vmatpush.msra.mxu0 0.0
  %642 = vmatpush.msra.mxu0 0.0
  %643 = vmatpush.msra.mxu0 0.0
  %644 = vmatpush.msra.mxu0 0.0
  %645 = vmatpush.msra.mxu0 0.0
  %646 = vmatpush.msra.mxu0 0.0
  %v647 = vand.u32 %v101, 4294901760
  %648 = vmatpush.msra.mxu0 %v647
  %v649 = vand.u32 %v52, 4294901760
  %650 = vmatmul.f32.gmra.mxu0 %v649
  %v651 = vpop.f32.mrf.mxu0
  %v652 = vadd.f32 %v570, %v651
  %v653 = vand.u32 %v55, 4294901760
  %654 = vmatmul.f32.gmra.mxu0 %v653
  %v655 = vpop.f32.mrf.mxu0
  %v656 = vadd.f32 %v574, %v655
  %v657 = vand.u32 %v58, 4294901760
  %658 = vmatmul.f32.gmra.mxu0 %v657
  %v659 = vpop.f32.mrf.mxu0
  %v660 = vadd.f32 %v578, %v659
  %v661 = vand.u32 %v61, 4294901760
  %662 = vmatmul.f32.gmra.mxu0 %v661
  %v663 = vpop.f32.mrf.mxu0
  %v664 = vadd.f32 %v582, %v663
  %v665 = vand.u32 %v64, 4294901760
  %666 = vmatmul.f32.gmra.mxu0 %v665
  %v667 = vpop.f32.mrf.mxu0
  %v668 = vadd.f32 %v586, %v667
  %v669 = vand.u32 %v67, 4294901760
  %670 = vmatmul.f32.gmra.mxu0 %v669
  %v671 = vpop.f32.mrf.mxu0
  %v672 = vadd.f32 %v590, %v671
  %v673 = vand.u32 %v70, 4294901760
  %674 = vmatmul.f32.gmra.mxu0 %v673
  %v675 = vpop.f32.mrf.mxu0
  %v676 = vadd.f32 %v594, %v675
  %v677 = vand.u32 %v73, 4294901760
  %678 = vmatmul.f32.gmra.mxu0 %v677
  %v679 = vpop.f32.mrf.mxu0
  %v680 = vadd.f32 %v598, %v679
  %v681 = vand.u32 %v76, 4294901760
  %682 = vmatmul.f32.gmra.mxu0 %v681
  %v683 = vpop.f32.mrf.mxu0
  %v684 = vadd.f32 %v602, %v683
  %v685 = vand.u32 %v79, 4294901760
  %686 = vmatmul.f32.gmra.mxu0 %v685
  %v687 = vpop.f32.mrf.mxu0
  %v688 = vadd.f32 %v606, %v687
  %v689 = vand.u32 %v82, 4294901760
  %690 = vmatmul.f32.gmra.mxu0 %v689
  %v691 = vpop.f32.mrf.mxu0
  %v692 = vadd.f32 %v610, %v691
  %v693 = vand.u32 %v85, 4294901760
  %694 = vmatmul.f32.gmra.mxu0 %v693
  %v695 = vpop.f32.mrf.mxu0
  %v696 = vadd.f32 %v614, %v695
  %v697 = vand.u32 %v88, 4294901760
  %698 = vmatmul.f32.gmra.mxu0 %v697
  %v699 = vpop.f32.mrf.mxu0
  %v700 = vadd.f32 %v618, %v699
  %v701 = vand.u32 %v91, 4294901760
  %702 = vmatmul.f32.gmra.mxu0 %v701
  %v703 = vpop.f32.mrf.mxu0
  %v704 = vadd.f32 %v622, %v703
  %v705 = vand.u32 %v94, 4294901760
  %706 = vmatmul.f32.gmra.mxu0 %v705
  %v707 = vpop.f32.mrf.mxu0
  %v708 = vadd.f32 %v626, %v707
  %v709 = vand.u32 %v97, 4294901760
  %710 = vmatmul.f32.gmra.mxu0 %v709
  %v711 = vpop.f32.mrf.mxu0
  %v712 = vadd.f32 %v630, %v711
  %713 = vdwg.mxu0
  %v714 = vld [vmem:[%s4] sm:$0x3f]
  %v715 = vperm.slane %v714, 0
  %v716 = vperm.slane %v714, 1
  %v717 = vperm.slane %v714, 2
  %v718 = vperm.slane %v714, 3
  %v719 = vperm.slane %v714, 4
  %v720 = vperm.slane %v714, 5
  %v721 = vld [vmem:[%s1] sm:$0xff]
  %v722 = vld [vmem:[%s1 + $0x8] sm:$0xff]
  %v723 = vld [vmem:[%s2] sm:$0xff]
  %v724 = vld [vmem:[%s2 + $0x8] sm:$0xff]
  %726 = vset.pattern.permute.xlu0 0
  %727 = vperm.xlu0 %726, %v721
  %v728 = vpop.permute.xlu0 %727
  %731 = vset.pattern.permute.xlu0 0
  %732 = vperm.xlu0 %731, %v722
  %v733 = vpop.permute.xlu0 %732
  %v735 = vmul.f32 %v728, %v715
  %v736 = vmul.f32 %v733, %v715
  %737 = vset.pattern.permute.xlu0 1
  %738 = vperm.xlu0 %737, %v721
  %v739 = vpop.permute.xlu0 %738
  %741 = vset.pattern.permute.xlu0 1
  %742 = vperm.xlu0 %741, %v722
  %v743 = vpop.permute.xlu0 %742
  %v745 = vmul.f32 %v739, %v716
  %v746 = vmul.f32 %v743, %v716
  %747 = vset.pattern.permute.xlu0 2
  %748 = vperm.xlu0 %747, %v721
  %v749 = vpop.permute.xlu0 %748
  %751 = vset.pattern.permute.xlu0 2
  %752 = vperm.xlu0 %751, %v722
  %v753 = vpop.permute.xlu0 %752
  %v755 = vmul.f32 %v749, %v717
  %v756 = vmul.f32 %v753, %v717
  %757 = vset.pattern.permute.xlu0 3
  %758 = vperm.xlu0 %757, %v721
  %v759 = vpop.permute.xlu0 %758
  %761 = vset.pattern.permute.xlu0 3
  %762 = vperm.xlu0 %761, %v722
  %v763 = vpop.permute.xlu0 %762
  %v765 = vmul.f32 %v759, %v718
  %v766 = vmul.f32 %v763, %v718
  %767 = vset.pattern.permute.xlu0 4
  %768 = vperm.xlu0 %767, %v721
  %v769 = vpop.permute.xlu0 %768
  %771 = vset.pattern.permute.xlu0 4
  %772 = vperm.xlu0 %771, %v722
  %v773 = vpop.permute.xlu0 %772
  %v775 = vmul.f32 %v769, %v719
  %v776 = vmul.f32 %v773, %v719
  %777 = vset.pattern.permute.xlu0 5
  %778 = vperm.xlu0 %777, %v721
  %v779 = vpop.permute.xlu0 %778
  %781 = vset.pattern.permute.xlu0 5
  %782 = vperm.xlu0 %781, %v722
  %v783 = vpop.permute.xlu0 %782
  %v785 = vmul.f32 %v779, %v720
  %v786 = vmul.f32 %v783, %v720
  %v787 = vadd.f32 %v735, %v745
  %v788 = vadd.f32 %v736, %v746
  %v789 = vadd.f32 %v755, %v765
  %v790 = vadd.f32 %v756, %v766
  %v791 = vadd.f32 %v775, %v785
  %v792 = vadd.f32 %v776, %v786
  %v793 = vadd.f32 %v787, %v789
  %v794 = vadd.f32 %v788, %v790
  %v795 = vadd.f32 %v793, %v791
  %v796 = vadd.f32 %v794, %v792
  %v797 = vadd.f32 %v795, %v652
  %v798 = vadd.f32 %v796, %v656
  %v799 = vxor.u32 %v797, 2147483648
  %v800 = vxor.u32 %v798, 2147483648
  %v801 = vmul.f32 %v799, 1.442695
  %v802 = vpow.pop %v801
  %v803 = vmul.f32 %v800, 1.442695
  %v804 = vpow.pop %v803
  %v805 = vadd.f32 %v802, 1.0
  %v806 = vadd.f32 %v804, 1.0
  %v807 = vrcp.pop %v805
  %v808 = vmul.f32 %v805, %v807
  %v809 = vsub.f32 1.0, %v808
  %v810 = vmul.f32 %v807, %v809
  %v811 = vadd.f32 %v807, %v810
  %vm812 = vweird.f32 %v805
  %vm813 = vweird.f32 %v807
  %vm814 = vmor %vm812, %vm813
  %v815 = vsel %vm814, %v807, %v811
  %v816 = vand.u32 2147483647, %v805
  %vm817 = vcmp.eq.f32.partialorder %v816, 8.507059e+37
  %v818 = vand.u32 %v805, 2147483648
  %v819 = vor.u32 1.1754944e-38, %v818
  %v820 = vsel %vm817, %v819, %v815
  %v821 = vmul.f32 1.0, %v820
  %v822 = vrcp.pop %v806
  %v823 = vmul.f32 %v806, %v822
  %v824 = vsub.f32 1.0, %v823
  %v825 = vmul.f32 %v822, %v824
  %v826 = vadd.f32 %v822, %v825
  %vm827 = vweird.f32 %v806
  %vm828 = vweird.f32 %v822
  %vm829 = vmor %vm827, %vm828
  %v830 = vsel %vm829, %v822, %v826
  %v831 = vand.u32 2147483647, %v806
  %vm832 = vcmp.eq.f32.partialorder %v831, 8.507059e+37
  %v833 = vand.u32 %v806, 2147483648
  %v834 = vor.u32 1.1754944e-38, %v833
  %v835 = vsel %vm832, %v834, %v830
  %v836 = vmul.f32 1.0, %v835
  %v837 = vtanh.pop %v797
  %v838 = vtanh.pop %v798
  %841 = vrot.lane.b32.xlu0 %v723, 6
  %v842 = vpop.permute.xlu0 %841
  %843 = vrot.lane.b32.xlu0 %v724, 6
  %v844 = vpop.permute.xlu0 %843
  %v847 = vmul.f32 %v821, %v842
  %v848 = vmul.f32 %v836, %v844
  %851 = vrot.lane.b32.xlu0 %v837, 110
  %v852 = vpop.permute.xlu0 %851
  %853 = vrot.lane.b32.xlu0 %v838, 110
  %v854 = vpop.permute.xlu0 %853
  %v857 = vmul.f32 %v821, %v852
  %v858 = vmul.f32 %v836, %v854
  %861 = vrot.lane.b32.xlu0 %v857, 6
  %v862 = vpop.permute.xlu0 %861
  %863 = vrot.lane.b32.xlu0 %v858, 6
  %v864 = vpop.permute.xlu0 %863
  %v867 = vadd.f32 %v847, %v862
  %v868 = vadd.f32 %v848, %v864
  %v869 = vtanh.pop %v867
  %v870 = vtanh.pop %v868
  %873 = vrot.lane.b32.xlu0 %v869, 6
  %v874 = vpop.permute.xlu0 %873
  %875 = vrot.lane.b32.xlu0 %v870, 6
  %v876 = vpop.permute.xlu0 %875
  %v879 = vmul.f32 %v821, %v874
  %v880 = vmul.f32 %v836, %v876
  %883 = vrot.lane.b32.xlu0 %v879, 125
  %v884 = vpop.permute.xlu0 %883
  %885 = vrot.lane.b32.xlu0 %v880, 125
  %v886 = vpop.permute.xlu0 %885
  %v889 = vadd.f32 %v879, %v884
  %v890 = vadd.f32 %v880, %v886
  %893 = vrot.lane.b32.xlu0 %v889, 116
  %v894 = vpop.permute.xlu0 %893
  %895 = vrot.lane.b32.xlu0 %v890, 116
  %v896 = vpop.permute.xlu0 %895
  %vm899 = vcmask 23552
  %900 = vst.msk [vmem:[#allocation2] sm:$0xff] %vm899, %v894
  %901 = vst.msk [vmem:[#allocation2 + $0x8] sm:$0xff] %vm899, %v896
  %902 = vset.pattern.permute.xlu0 12
  %903 = vperm.xlu0 %902, %v879
  %v904 = vpop.permute.xlu0 %903
  %906 = vset.pattern.permute.xlu0 12
  %907 = vperm.xlu0 %906, %v880
  %v908 = vpop.permute.xlu0 %907
  %v910 = vmul.f32 %v904, %v715
  %v911 = vmul.f32 %v908, %v715
  %912 = vset.pattern.permute.xlu0 13
  %913 = vperm.xlu0 %912, %v879
  %v914 = vpop.permute.xlu0 %913
  %916 = vset.pattern.permute.xlu0 13
  %917 = vperm.xlu0 %916, %v880
  %v918 = vpop.permute.xlu0 %917
  %v920 = vmul.f32 %v914, %v716
  %v921 = vmul.f32 %v918, %v716
  %922 = vset.pattern.permute.xlu0 14
  %923 = vperm.xlu0 %922, %v879
  %v924 = vpop.permute.xlu0 %923
  %926 = vset.pattern.permute.xlu0 14
  %927 = vperm.xlu0 %926, %v880
  %v928 = vpop.permute.xlu0 %927
  %v930 = vmul.f32 %v924, %v717
  %v931 = vmul.f32 %v928, %v717
  %932 = vset.pattern.permute.xlu0 15
  %933 = vperm.xlu0 %932, %v879
  %v934 = vpop.permute.xlu0 %933
  %936 = vset.pattern.permute.xlu0 15
  %937 = vperm.xlu0 %936, %v880
  %v938 = vpop.permute.xlu0 %937
  %v940 = vmul.f32 %v934, %v718
  %v941 = vmul.f32 %v938, %v718
  %942 = vset.pattern.permute.xlu0 16
  %943 = vperm.xlu0 %942, %v879
  %v944 = vpop.permute.xlu0 %943
  %946 = vset.pattern.permute.xlu0 16
  %947 = vperm.xlu0 %946, %v880
  %v948 = vpop.permute.xlu0 %947
  %v950 = vmul.f32 %v944, %v719
  %v951 = vmul.f32 %v948, %v719
  %952 = vset.pattern.permute.xlu0 17
  %953 = vperm.xlu0 %952, %v879
  %v954 = vpop.permute.xlu0 %953
  %956 = vset.pattern.permute.xlu0 17
  %957 = vperm.xlu0 %956, %v880
  %v958 = vpop.permute.xlu0 %957
  %v960 = vmul.f32 %v954, %v720
  %v961 = vmul.f32 %v958, %v720
  %v962 = vadd.f32 %v910, %v920
  %v963 = vadd.f32 %v911, %v921
  %v964 = vadd.f32 %v930, %v940
  %v965 = vadd.f32 %v931, %v941
  %v966 = vadd.f32 %v950, %v960
  %v967 = vadd.f32 %v951, %v961
  %v968 = vadd.f32 %v962, %v964
  %v969 = vadd.f32 %v963, %v965
  %v970 = vadd.f32 %v968, %v966
  %v971 = vadd.f32 %v969, %v967
  %v972 = vadd.f32 %v970, %v660
  %v973 = vadd.f32 %v971, %v664
  %v974 = vxor.u32 %v972, 2147483648
  %v975 = vxor.u32 %v973, 2147483648
  %v976 = vmul.f32 %v974, 1.442695
  %v977 = vpow.pop %v976
  %v978 = vmul.f32 %v975, 1.442695
  %v979 = vpow.pop %v978
  %v980 = vadd.f32 %v977, 1.0
  %v981 = vadd.f32 %v979, 1.0
  %v982 = vrcp.pop %v980
  %v983 = vmul.f32 %v980, %v982
  %v984 = vsub.f32 1.0, %v983
  %v985 = vmul.f32 %v982, %v984
  %v986 = vadd.f32 %v982, %v985
  %vm987 = vweird.f32 %v980
  %vm988 = vweird.f32 %v982
  %vm989 = vmor %vm987, %vm988
  %v990 = vsel %vm989, %v982, %v986
  %v991 = vand.u32 2147483647, %v980
  %vm992 = vcmp.eq.f32.partialorder %v991, 8.507059e+37
  %v993 = vand.u32 %v980, 2147483648
  %v994 = vor.u32 1.1754944e-38, %v993
  %v995 = vsel %vm992, %v994, %v990
  %v996 = vmul.f32 1.0, %v995
  %v997 = vrcp.pop %v981
  %v998 = vmul.f32 %v981, %v997
  %v999 = vsub.f32 1.0, %v998
  %v1000 = vmul.f32 %v997, %v999
  %v1001 = vadd.f32 %v997, %v1000
  %vm1002 = vweird.f32 %v981
  %vm1003 = vweird.f32 %v997
  %vm1004 = vmor %vm1002, %vm1003
  %v1005 = vsel %vm1004, %v997, %v1001
  %v1006 = vand.u32 2147483647, %v981
  %vm1007 = vcmp.eq.f32.partialorder %v1006, 8.507059e+37
  %v1008 = vand.u32 %v981, 2147483648
  %v1009 = vor.u32 1.1754944e-38, %v1008
  %v1010 = vsel %vm1007, %v1009, %v1005
  %v1011 = vmul.f32 1.0, %v1010
  %v1012 = vtanh.pop %v972
  %v1013 = vtanh.pop %v973
  %v1014 = vmul.f32 %v996, %v867
  %v1015 = vmul.f32 %v1011, %v868
  %1018 = vrot.lane.b32.xlu0 %v1012, 110
  %v1019 = vpop.permute.xlu0 %1018
  %1020 = vrot.lane.b32.xlu0 %v1013, 110
  %v1021 = vpop.permute.xlu0 %1020
  %v1024 = vmul.f32 %v996, %v1019
  %v1025 = vmul.f32 %v1011, %v1021
  %1028 = vrot.lane.b32.xlu0 %v1024, 6
  %v1029 = vpop.permute.xlu0 %1028
  %1030 = vrot.lane.b32.xlu0 %v1025, 6
  %v1031 = vpop.permute.xlu0 %1030
  %v1034 = vadd.f32 %v1014, %v1029
  %v1035 = vadd.f32 %v1015, %v1031
  %v1036 = vtanh.pop %v1034
  %v1037 = vtanh.pop %v1035
  %1040 = vrot.lane.b32.xlu0 %v1036, 6
  %v1041 = vpop.permute.xlu0 %1040
  %1042 = vrot.lane.b32.xlu0 %v1037, 6
  %v1043 = vpop.permute.xlu0 %1042
  %v1046 = vmul.f32 %v996, %v1041
  %v1047 = vmul.f32 %v1011, %v1043
  %1050 = vrot.lane.b32.xlu0 %v1046, 125
  %v1051 = vpop.permute.xlu0 %1050
  %1052 = vrot.lane.b32.xlu0 %v1047, 125
  %v1053 = vpop.permute.xlu0 %1052
  %v1056 = vadd.f32 %v1046, %v1051
  %v1057 = vadd.f32 %v1047, %v1053
  %1060 = vrot.lane.b32.xlu0 %v1056, 116
  %v1061 = vpop.permute.xlu0 %1060
  %1062 = vrot.lane.b32.xlu0 %v1057, 116
  %v1063 = vpop.permute.xlu0 %1062
  %1066 = vst.msk [vmem:[#allocation2 + $0x10] sm:$0xff] %vm899, %v1061
  %1067 = vst.msk [vmem:[#allocation2 + $0x18] sm:$0xff] %vm899, %v1063
  %1068 = vset.pattern.permute.xlu0 12
  %1069 = vperm.xlu0 %1068, %v1046
  %v1070 = vpop.permute.xlu0 %1069
  %1072 = vset.pattern.permute.xlu0 12
  %1073 = vperm.xlu0 %1072, %v1047
  %v1074 = vpop.permute.xlu0 %1073
  %v1076 = vmul.f32 %v1070, %v715
  %v1077 = vmul.f32 %v1074, %v715
  %1078 = vset.pattern.permute.xlu0 13
  %1079 = vperm.xlu0 %1078, %v1046
  %v1080 = vpop.permute.xlu0 %1079
  %1082 = vset.pattern.permute.xlu0 13
  %1083 = vperm.xlu0 %1082, %v1047
  %v1084 = vpop.permute.xlu0 %1083
  %v1086 = vmul.f32 %v1080, %v716
  %v1087 = vmul.f32 %v1084, %v716
  %1088 = vset.pattern.permute.xlu0 14
  %1089 = vperm.xlu0 %1088, %v1046
  %v1090 = vpop.permute.xlu0 %1089
  %1092 = vset.pattern.permute.xlu0 14
  %1093 = vperm.xlu0 %1092, %v1047
  %v1094 = vpop.permute.xlu0 %1093
  %v1096 = vmul.f32 %v1090, %v717
  %v1097 = vmul.f32 %v1094, %v717
  %1098 = vset.pattern.permute.xlu0 15
  %1099 = vperm.xlu0 %1098, %v1046
  %v1100 = vpop.permute.xlu0 %1099
  %1102 = vset.pattern.permute.xlu0 15
  %1103 = vperm.xlu0 %1102, %v1047
  %v1104 = vpop.permute.xlu0 %1103
  %v1106 = vmul.f32 %v1100, %v718
  %v1107 = vmul.f32 %v1104, %v718
  %1108 = vset.pattern.permute.xlu0 16
  %1109 = vperm.xlu0 %1108, %v1046
  %v1110 = vpop.permute.xlu0 %1109
  %1112 = vset.pattern.permute.xlu0 16
  %1113 = vperm.xlu0 %1112, %v1047
  %v1114 = vpop.permute.xlu0 %1113
  %v1116 = vmul.f32 %v1110, %v719
  %v1117 = vmul.f32 %v1114, %v719
  %1118 = vset.pattern.permute.xlu0 17
  %1119 = vperm.xlu0 %1118, %v1046
  %v1120 = vpop.permute.xlu0 %1119
  %1122 = vset.pattern.permute.xlu0 17
  %1123 = vperm.xlu0 %1122, %v1047
  %v1124 = vpop.permute.xlu0 %1123
  %v1126 = vmul.f32 %v1120, %v720
  %v1127 = vmul.f32 %v1124, %v720
  %v1128 = vadd.f32 %v1076, %v1086
  %v1129 = vadd.f32 %v1077, %v1087
  %v1130 = vadd.f32 %v1096, %v1106
  %v1131 = vadd.f32 %v1097, %v1107
  %v1132 = vadd.f32 %v1116, %v1126
  %v1133 = vadd.f32 %v1117, %v1127
  %v1134 = vadd.f32 %v1128, %v1130
  %v1135 = vadd.f32 %v1129, %v1131
  %v1136 = vadd.f32 %v1134, %v1132
  %v1137 = vadd.f32 %v1135, %v1133
  %v1138 = vadd.f32 %v1136, %v668
  %v1139 = vadd.f32 %v1137, %v672
  %v1140 = vxor.u32 %v1138, 2147483648
  %v1141 = vxor.u32 %v1139, 2147483648
  %v1142 = vmul.f32 %v1140, 1.442695
  %v1143 = vpow.pop %v1142
  %v1144 = vmul.f32 %v1141, 1.442695
  %v1145 = vpow.pop %v1144
  %v1146 = vadd.f32 %v1143, 1.0
  %v1147 = vadd.f32 %v1145, 1.0
  %v1148 = vrcp.pop %v1146
  %v1149 = vmul.f32 %v1146, %v1148
  %v1150 = vsub.f32 1.0, %v1149
  %v1151 = vmul.f32 %v1148, %v1150
  %v1152 = vadd.f32 %v1148, %v1151
  %vm1153 = vweird.f32 %v1146
  %vm1154 = vweird.f32 %v1148
  %vm1155 = vmor %vm1153, %vm1154
  %v1156 = vsel %vm1155, %v1148, %v1152
  %v1157 = vand.u32 2147483647, %v1146
  %vm1158 = vcmp.eq.f32.partialorder %v1157, 8.507059e+37
  %v1159 = vand.u32 %v1146, 2147483648
  %v1160 = vor.u32 1.1754944e-38, %v1159
  %v1161 = vsel %vm1158, %v1160, %v1156
  %v1162 = vmul.f32 1.0, %v1161
  %v1163 = vrcp.pop %v1147
  %v1164 = vmul.f32 %v1147, %v1163
  %v1165 = vsub.f32 1.0, %v1164
  %v1166 = vmul.f32 %v1163, %v1165
  %v1167 = vadd.f32 %v1163, %v1166
  %vm1168 = vweird.f32 %v1147
  %vm1169 = vweird.f32 %v1163
  %vm1170 = vmor %vm1168, %vm1169
  %v1171 = vsel %vm1170, %v1163, %v1167
  %v1172 = vand.u32 2147483647, %v1147
  %vm1173 = vcmp.eq.f32.partialorder %v1172, 8.507059e+37
  %v1174 = vand.u32 %v1147, 2147483648
  %v1175 = vor.u32 1.1754944e-38, %v1174
  %v1176 = vsel %vm1173, %v1175, %v1171
  %v1177 = vmul.f32 1.0, %v1176
  %v1178 = vtanh.pop %v1138
  %v1179 = vtanh.pop %v1139
  %v1180 = vmul.f32 %v1162, %v1034
  %v1181 = vmul.f32 %v1177, %v1035
  %1184 = vrot.lane.b32.xlu0 %v1178, 110
  %v1185 = vpop.permute.xlu0 %1184
  %1186 = vrot.lane.b32.xlu0 %v1179, 110
  %v1187 = vpop.permute.xlu0 %1186
  %v1190 = vmul.f32 %v1162, %v1185
  %v1191 = vmul.f32 %v1177, %v1187
  %1194 = vrot.lane.b32.xlu0 %v1190, 6
  %v1195 = vpop.permute.xlu0 %1194
  %1196 = vrot.lane.b32.xlu0 %v1191, 6
  %v1197 = vpop.permute.xlu0 %1196
  %v1200 = vadd.f32 %v1180, %v1195
  %v1201 = vadd.f32 %v1181, %v1197
  %v1202 = vtanh.pop %v1200
  %v1203 = vtanh.pop %v1201
  %1206 = vrot.lane.b32.xlu0 %v1202, 6
  %v1207 = vpop.permute.xlu0 %1206
  %1208 = vrot.lane.b32.xlu0 %v1203, 6
  %v1209 = vpop.permute.xlu0 %1208
  %v1212 = vmul.f32 %v1162, %v1207
  %v1213 = vmul.f32 %v1177, %v1209
  %1216 = vrot.lane.b32.xlu0 %v1212, 125
  %v1217 = vpop.permute.xlu0 %1216
  %1218 = vrot.lane.b32.xlu0 %v1213, 125
  %v1219 = vpop.permute.xlu0 %1218
  %v1222 = vadd.f32 %v1212, %v1217
  %v1223 = vadd.f32 %v1213, %v1219
  %1226 = vrot.lane.b32.xlu0 %v1222, 116
  %v1227 = vpop.permute.xlu0 %1226
  %1228 = vrot.lane.b32.xlu0 %v1223, 116
  %v1229 = vpop.permute.xlu0 %1228
  %1232 = vst.msk [vmem:[#allocation2 + $0x20] sm:$0xff] %vm899, %v1227
  %1233 = vst.msk [vmem:[#allocation2 + $0x28] sm:$0xff] %vm899, %v1229
  %1234 = vset.pattern.permute.xlu0 12
  %1235 = vperm.xlu0 %1234, %v1212
  %v1236 = vpop.permute.xlu0 %1235
  %1238 = vset.pattern.permute.xlu0 12
  %1239 = vperm.xlu0 %1238, %v1213
  %v1240 = vpop.permute.xlu0 %1239
  %v1242 = vmul.f32 %v1236, %v715
  %v1243 = vmul.f32 %v1240, %v715
  %1244 = vset.pattern.permute.xlu0 13
  %1245 = vperm.xlu0 %1244, %v1212
  %v1246 = vpop.permute.xlu0 %1245
  %1248 = vset.pattern.permute.xlu0 13
  %1249 = vperm.xlu0 %1248, %v1213
  %v1250 = vpop.permute.xlu0 %1249
  %v1252 = vmul.f32 %v1246, %v716
  %v1253 = vmul.f32 %v1250, %v716
  %1254 = vset.pattern.permute.xlu0 14
  %1255 = vperm.xlu0 %1254, %v1212
  %v1256 = vpop.permute.xlu0 %1255
  %1258 = vset.pattern.permute.xlu0 14
  %1259 = vperm.xlu0 %1258, %v1213
  %v1260 = vpop.permute.xlu0 %1259
  %v1262 = vmul.f32 %v1256, %v717
  %v1263 = vmul.f32 %v1260, %v717
  %1264 = vset.pattern.permute.xlu0 15
  %1265 = vperm.xlu0 %1264, %v1212
  %v1266 = vpop.permute.xlu0 %1265
  %1268 = vset.pattern.permute.xlu0 15
  %1269 = vperm.xlu0 %1268, %v1213
  %v1270 = vpop.permute.xlu0 %1269
  %v1272 = vmul.f32 %v1266, %v718
  %v1273 = vmul.f32 %v1270, %v718
  %1274 = vset.pattern.permute.xlu0 16
  %1275 = vperm.xlu0 %1274, %v1212
  %v1276 = vpop.permute.xlu0 %1275
  %1278 = vset.pattern.permute.xlu0 16
  %1279 = vperm.xlu0 %1278, %v1213
  %v1280 = vpop.permute.xlu0 %1279
  %v1282 = vmul.f32 %v1276, %v719
  %v1283 = vmul.f32 %v1280, %v719
  %1284 = vset.pattern.permute.xlu0 17
  %1285 = vperm.xlu0 %1284, %v1212
  %v1286 = vpop.permute.xlu0 %1285
  %1288 = vset.pattern.permute.xlu0 17
  %1289 = vperm.xlu0 %1288, %v1213
  %v1290 = vpop.permute.xlu0 %1289
  %v1292 = vmul.f32 %v1286, %v720
  %v1293 = vmul.f32 %v1290, %v720
  %v1294 = vadd.f32 %v1242, %v1252
  %v1295 = vadd.f32 %v1243, %v1253
  %v1296 = vadd.f32 %v1262, %v1272
  %v1297 = vadd.f32 %v1263, %v1273
  %v1298 = vadd.f32 %v1282, %v1292
  %v1299 = vadd.f32 %v1283, %v1293
  %v1300 = vadd.f32 %v1294, %v1296
  %v1301 = vadd.f32 %v1295, %v1297
  %v1302 = vadd.f32 %v1300, %v1298
  %v1303 = vadd.f32 %v1301, %v1299
  %v1304 = vadd.f32 %v1302, %v676
  %v1305 = vadd.f32 %v1303, %v680
  %v1306 = vxor.u32 %v1304, 2147483648
  %v1307 = vxor.u32 %v1305, 2147483648
  %v1308 = vmul.f32 %v1306, 1.442695
  %v1309 = vpow.pop %v1308
  %v1310 = vmul.f32 %v1307, 1.442695
  %v1311 = vpow.pop %v1310
  %v1312 = vadd.f32 %v1309, 1.0
  %v1313 = vadd.f32 %v1311, 1.0
  %v1314 = vrcp.pop %v1312
  %v1315 = vmul.f32 %v1312, %v1314
  %v1316 = vsub.f32 1.0, %v1315
  %v1317 = vmul.f32 %v1314, %v1316
  %v1318 = vadd.f32 %v1314, %v1317
  %vm1319 = vweird.f32 %v1312
  %vm1320 = vweird.f32 %v1314
  %vm1321 = vmor %vm1319, %vm1320
  %v1322 = vsel %vm1321, %v1314, %v1318
  %v1323 = vand.u32 2147483647, %v1312
  %vm1324 = vcmp.eq.f32.partialorder %v1323, 8.507059e+37
  %v1325 = vand.u32 %v1312, 2147483648
  %v1326 = vor.u32 1.1754944e-38, %v1325
  %v1327 = vsel %vm1324, %v1326, %v1322
  %v1328 = vmul.f32 1.0, %v1327
  %v1329 = vrcp.pop %v1313
  %v1330 = vmul.f32 %v1313, %v1329
  %v1331 = vsub.f32 1.0, %v1330
  %v1332 = vmul.f32 %v1329, %v1331
  %v1333 = vadd.f32 %v1329, %v1332
  %vm1334 = vweird.f32 %v1313
  %vm1335 = vweird.f32 %v1329
  %vm1336 = vmor %vm1334, %vm1335
  %v1337 = vsel %vm1336, %v1329, %v1333
  %v1338 = vand.u32 2147483647, %v1313
  %vm1339 = vcmp.eq.f32.partialorder %v1338, 8.507059e+37
  %v1340 = vand.u32 %v1313, 2147483648
  %v1341 = vor.u32 1.1754944e-38, %v1340
  %v1342 = vsel %vm1339, %v1341, %v1337
  %v1343 = vmul.f32 1.0, %v1342
  %v1344 = vtanh.pop %v1304
  %v1345 = vtanh.pop %v1305
  %v1346 = vmul.f32 %v1328, %v1200
  %v1347 = vmul.f32 %v1343, %v1201
  %1350 = vrot.lane.b32.xlu0 %v1344, 110
  %v1351 = vpop.permute.xlu0 %1350
  %1352 = vrot.lane.b32.xlu0 %v1345, 110
  %v1353 = vpop.permute.xlu0 %1352
  %v1356 = vmul.f32 %v1328, %v1351
  %v1357 = vmul.f32 %v1343, %v1353
  %1360 = vrot.lane.b32.xlu0 %v1356, 6
  %v1361 = vpop.permute.xlu0 %1360
  %1362 = vrot.lane.b32.xlu0 %v1357, 6
  %v1363 = vpop.permute.xlu0 %1362
  %v1366 = vadd.f32 %v1346, %v1361
  %v1367 = vadd.f32 %v1347, %v1363
  %v1368 = vtanh.pop %v1366
  %v1369 = vtanh.pop %v1367
  %1372 = vrot.lane.b32.xlu0 %v1368, 6
  %v1373 = vpop.permute.xlu0 %1372
  %1374 = vrot.lane.b32.xlu0 %v1369, 6
  %v1375 = vpop.permute.xlu0 %1374
  %v1378 = vmul.f32 %v1328, %v1373
  %v1379 = vmul.f32 %v1343, %v1375
  %1382 = vrot.lane.b32.xlu0 %v1378, 125
  %v1383 = vpop.permute.xlu0 %1382
  %1384 = vrot.lane.b32.xlu0 %v1379, 125
  %v1385 = vpop.permute.xlu0 %1384
  %v1388 = vadd.f32 %v1378, %v1383
  %v1389 = vadd.f32 %v1379, %v1385
  %1392 = vrot.lane.b32.xlu0 %v1388, 116
  %v1393 = vpop.permute.xlu0 %1392
  %1394 = vrot.lane.b32.xlu0 %v1389, 116
  %v1395 = vpop.permute.xlu0 %1394
  %1398 = vst.msk [vmem:[#allocation2 + $0x30] sm:$0xff] %vm899, %v1393
  %1399 = vst.msk [vmem:[#allocation2 + $0x38] sm:$0xff] %vm899, %v1395
  %1400 = vset.pattern.permute.xlu0 12
  %1401 = vperm.xlu0 %1400, %v1378
  %v1402 = vpop.permute.xlu0 %1401
  %1404 = vset.pattern.permute.xlu0 12
  %1405 = vperm.xlu0 %1404, %v1379
  %v1406 = vpop.permute.xlu0 %1405
  %v1408 = vmul.f32 %v1402, %v715
  %v1409 = vmul.f32 %v1406, %v715
  %1410 = vset.pattern.permute.xlu0 13
  %1411 = vperm.xlu0 %1410, %v1378
  %v1412 = vpop.permute.xlu0 %1411
  %1414 = vset.pattern.permute.xlu0 13
  %1415 = vperm.xlu0 %1414, %v1379
  %v1416 = vpop.permute.xlu0 %1415
  %v1418 = vmul.f32 %v1412, %v716
  %v1419 = vmul.f32 %v1416, %v716
  %1420 = vset.pattern.permute.xlu0 14
  %1421 = vperm.xlu0 %1420, %v1378
  %v1422 = vpop.permute.xlu0 %1421
  %1424 = vset.pattern.permute.xlu0 14
  %1425 = vperm.xlu0 %1424, %v1379
  %v1426 = vpop.permute.xlu0 %1425
  %v1428 = vmul.f32 %v1422, %v717
  %v1429 = vmul.f32 %v1426, %v717
  %1430 = vset.pattern.permute.xlu0 15
  %1431 = vperm.xlu0 %1430, %v1378
  %v1432 = vpop.permute.xlu0 %1431
  %1434 = vset.pattern.permute.xlu0 15
  %1435 = vperm.xlu0 %1434, %v1379
  %v1436 = vpop.permute.xlu0 %1435
  %v1438 = vmul.f32 %v1432, %v718
  %v1439 = vmul.f32 %v1436, %v718
  %1440 = vset.pattern.permute.xlu0 16
  %1441 = vperm.xlu0 %1440, %v1378
  %v1442 = vpop.permute.xlu0 %1441
  %1444 = vset.pattern.permute.xlu0 16
  %1445 = vperm.xlu0 %1444, %v1379
  %v1446 = vpop.permute.xlu0 %1445
  %v1448 = vmul.f32 %v1442, %v719
  %v1449 = vmul.f32 %v1446, %v719
  %1450 = vset.pattern.permute.xlu0 17
  %1451 = vperm.xlu0 %1450, %v1378
  %v1452 = vpop.permute.xlu0 %1451
  %1454 = vset.pattern.permute.xlu0 17
  %1455 = vperm.xlu0 %1454, %v1379
  %v1456 = vpop.permute.xlu0 %1455
  %v1458 = vmul.f32 %v1452, %v720
  %v1459 = vmul.f32 %v1456, %v720
  %v1460 = vadd.f32 %v1408, %v1418
  %v1461 = vadd.f32 %v1409, %v1419
  %v1462 = vadd.f32 %v1428, %v1438
  %v1463 = vadd.f32 %v1429, %v1439
  %v1464 = vadd.f32 %v1448, %v1458
  %v1465 = vadd.f32 %v1449, %v1459
  %v1466 = vadd.f32 %v1460, %v1462
  %v1467 = vadd.f32 %v1461, %v1463
  %v1468 = vadd.f32 %v1466, %v1464
  %v1469 = vadd.f32 %v1467, %v1465
  %v1470 = vadd.f32 %v1468, %v684
  %v1471 = vadd.f32 %v1469, %v688
  %v1472 = vxor.u32 %v1470, 2147483648
  %v1473 = vxor.u32 %v1471, 2147483648
  %v1474 = vmul.f32 %v1472, 1.442695
  %v1475 = vpow.pop %v1474
  %v1476 = vmul.f32 %v1473, 1.442695
  %v1477 = vpow.pop %v1476
  %v1478 = vadd.f32 %v1475, 1.0
  %v1479 = vadd.f32 %v1477, 1.0
  %v1480 = vrcp.pop %v1478
  %v1481 = vmul.f32 %v1478, %v1480
  %v1482 = vsub.f32 1.0, %v1481
  %v1483 = vmul.f32 %v1480, %v1482
  %v1484 = vadd.f32 %v1480, %v1483
  %vm1485 = vweird.f32 %v1478
  %vm1486 = vweird.f32 %v1480
  %vm1487 = vmor %vm1485, %vm1486
  %v1488 = vsel %vm1487, %v1480, %v1484
  %v1489 = vand.u32 2147483647, %v1478
  %vm1490 = vcmp.eq.f32.partialorder %v1489, 8.507059e+37
  %v1491 = vand.u32 %v1478, 2147483648
  %v1492 = vor.u32 1.1754944e-38, %v1491
  %v1493 = vsel %vm1490, %v1492, %v1488
  %v1494 = vmul.f32 1.0, %v1493
  %v1495 = vrcp.pop %v1479
  %v1496 = vmul.f32 %v1479, %v1495
  %v1497 = vsub.f32 1.0, %v1496
  %v1498 = vmul.f32 %v1495, %v1497
  %v1499 = vadd.f32 %v1495, %v1498
  %vm1500 = vweird.f32 %v1479
  %vm1501 = vweird.f32 %v1495
  %vm1502 = vmor %vm1500, %vm1501
  %v1503 = vsel %vm1502, %v1495, %v1499
  %v1504 = vand.u32 2147483647, %v1479
  %vm1505 = vcmp.eq.f32.partialorder %v1504, 8.507059e+37
  %v1506 = vand.u32 %v1479, 2147483648
  %v1507 = vor.u32 1.1754944e-38, %v1506
  %v1508 = vsel %vm1505, %v1507, %v1503
  %v1509 = vmul.f32 1.0, %v1508
  %v1510 = vtanh.pop %v1470
  %v1511 = vtanh.pop %v1471
  %v1512 = vmul.f32 %v1494, %v1366
  %v1513 = vmul.f32 %v1509, %v1367
  %1516 = vrot.lane.b32.xlu0 %v1510, 110
  %v1517 = vpop.permute.xlu0 %1516
  %1518 = vrot.lane.b32.xlu0 %v1511, 110
  %v1519 = vpop.permute.xlu0 %1518
  %v1522 = vmul.f32 %v1494, %v1517
  %v1523 = vmul.f32 %v1509, %v1519
  %1526 = vrot.lane.b32.xlu0 %v1522, 6
  %v1527 = vpop.permute.xlu0 %1526
  %1528 = vrot.lane.b32.xlu0 %v1523, 6
  %v1529 = vpop.permute.xlu0 %1528
  %v1532 = vadd.f32 %v1512, %v1527
  %v1533 = vadd.f32 %v1513, %v1529
  %v1534 = vtanh.pop %v1532
  %v1535 = vtanh.pop %v1533
  %1538 = vrot.lane.b32.xlu0 %v1534, 6
  %v1539 = vpop.permute.xlu0 %1538
  %1540 = vrot.lane.b32.xlu0 %v1535, 6
  %v1541 = vpop.permute.xlu0 %1540
  %v1544 = vmul.f32 %v1494, %v1539
  %v1545 = vmul.f32 %v1509, %v1541
  %1548 = vrot.lane.b32.xlu0 %v1544, 125
  %v1549 = vpop.permute.xlu0 %1548
  %1550 = vrot.lane.b32.xlu0 %v1545, 125
  %v1551 = vpop.permute.xlu0 %1550
  %v1554 = vadd.f32 %v1544, %v1549
  %v1555 = vadd.f32 %v1545, %v1551
  %1558 = vrot.lane.b32.xlu0 %v1554, 116
  %v1559 = vpop.permute.xlu0 %1558
  %1560 = vrot.lane.b32.xlu0 %v1555, 116
  %v1561 = vpop.permute.xlu0 %1560
  %1564 = vst.msk [vmem:[#allocation2 + $0x40] sm:$0xff] %vm899, %v1559
  %1565 = vst.msk [vmem:[#allocation2 + $0x48] sm:$0xff] %vm899, %v1561
  %1566 = vset.pattern.permute.xlu0 12
  %1567 = vperm.xlu0 %1566, %v1544
  %v1568 = vpop.permute.xlu0 %1567
  %1570 = vset.pattern.permute.xlu0 12
  %1571 = vperm.xlu0 %1570, %v1545
  %v1572 = vpop.permute.xlu0 %1571
  %v1574 = vmul.f32 %v1568, %v715
  %v1575 = vmul.f32 %v1572, %v715
  %1576 = vset.pattern.permute.xlu0 13
  %1577 = vperm.xlu0 %1576, %v1544
  %v1578 = vpop.permute.xlu0 %1577
  %1580 = vset.pattern.permute.xlu0 13
  %1581 = vperm.xlu0 %1580, %v1545
  %v1582 = vpop.permute.xlu0 %1581
  %v1584 = vmul.f32 %v1578, %v716
  %v1585 = vmul.f32 %v1582, %v716
  %1586 = vset.pattern.permute.xlu0 14
  %1587 = vperm.xlu0 %1586, %v1544
  %v1588 = vpop.permute.xlu0 %1587
  %1590 = vset.pattern.permute.xlu0 14
  %1591 = vperm.xlu0 %1590, %v1545
  %v1592 = vpop.permute.xlu0 %1591
  %v1594 = vmul.f32 %v1588, %v717
  %v1595 = vmul.f32 %v1592, %v717
  %1596 = vset.pattern.permute.xlu0 15
  %1597 = vperm.xlu0 %1596, %v1544
  %v1598 = vpop.permute.xlu0 %1597
  %1600 = vset.pattern.permute.xlu0 15
  %1601 = vperm.xlu0 %1600, %v1545
  %v1602 = vpop.permute.xlu0 %1601
  %v1604 = vmul.f32 %v1598, %v718
  %v1605 = vmul.f32 %v1602, %v718
  %1606 = vset.pattern.permute.xlu0 16
  %1607 = vperm.xlu0 %1606, %v1544
  %v1608 = vpop.permute.xlu0 %1607
  %1610 = vset.pattern.permute.xlu0 16
  %1611 = vperm.xlu0 %1610, %v1545
  %v1612 = vpop.permute.xlu0 %1611
  %v1614 = vmul.f32 %v1608, %v719
  %v1615 = vmul.f32 %v1612, %v719
  %1616 = vset.pattern.permute.xlu0 17
  %1617 = vperm.xlu0 %1616, %v1544
  %v1618 = vpop.permute.xlu0 %1617
  %1620 = vset.pattern.permute.xlu0 17
  %1621 = vperm.xlu0 %1620, %v1545
  %v1622 = vpop.permute.xlu0 %1621
  %v1624 = vmul.f32 %v1618, %v720
  %v1625 = vmul.f32 %v1622, %v720
  %v1626 = vadd.f32 %v1574, %v1584
  %v1627 = vadd.f32 %v1575, %v1585
  %v1628 = vadd.f32 %v1594, %v1604
  %v1629 = vadd.f32 %v1595, %v1605
  %v1630 = vadd.f32 %v1614, %v1624
  %v1631 = vadd.f32 %v1615, %v1625
  %v1632 = vadd.f32 %v1626, %v1628
  %v1633 = vadd.f32 %v1627, %v1629
  %v1634 = vadd.f32 %v1632, %v1630
  %v1635 = vadd.f32 %v1633, %v1631
  %v1636 = vadd.f32 %v1634, %v692
  %v1637 = vadd.f32 %v1635, %v696
  %v1638 = vxor.u32 %v1636, 2147483648
  %v1639 = vxor.u32 %v1637, 2147483648
  %v1640 = vmul.f32 %v1638, 1.442695
  %v1641 = vpow.pop %v1640
  %v1642 = vmul.f32 %v1639, 1.442695
  %v1643 = vpow.pop %v1642
  %v1644 = vadd.f32 %v1641, 1.0
  %v1645 = vadd.f32 %v1643, 1.0
  %v1646 = vrcp.pop %v1644
  %v1647 = vmul.f32 %v1644, %v1646
  %v1648 = vsub.f32 1.0, %v1647
  %v1649 = vmul.f32 %v1646, %v1648
  %v1650 = vadd.f32 %v1646, %v1649
  %vm1651 = vweird.f32 %v1644
  %vm1652 = vweird.f32 %v1646
  %vm1653 = vmor %vm1651, %vm1652
  %v1654 = vsel %vm1653, %v1646, %v1650
  %v1655 = vand.u32 2147483647, %v1644
  %vm1656 = vcmp.eq.f32.partialorder %v1655, 8.507059e+37
  %v1657 = vand.u32 %v1644, 2147483648
  %v1658 = vor.u32 1.1754944e-38, %v1657
  %v1659 = vsel %vm1656, %v1658, %v1654
  %v1660 = vmul.f32 1.0, %v1659
  %v1661 = vrcp.pop %v1645
  %v1662 = vmul.f32 %v1645, %v1661
  %v1663 = vsub.f32 1.0, %v1662
  %v1664 = vmul.f32 %v1661, %v1663
  %v1665 = vadd.f32 %v1661, %v1664
  %vm1666 = vweird.f32 %v1645
  %vm1667 = vweird.f32 %v1661
  %vm1668 = vmor %vm1666, %vm1667
  %v1669 = vsel %vm1668, %v1661, %v1665
  %v1670 = vand.u32 2147483647, %v1645
  %vm1671 = vcmp.eq.f32.partialorder %v1670, 8.507059e+37
  %v1672 = vand.u32 %v1645, 2147483648
  %v1673 = vor.u32 1.1754944e-38, %v1672
  %v1674 = vsel %vm1671, %v1673, %v1669
  %v1675 = vmul.f32 1.0, %v1674
  %v1676 = vtanh.pop %v1636
  %v1677 = vtanh.pop %v1637
  %v1678 = vmul.f32 %v1660, %v1532
  %v1679 = vmul.f32 %v1675, %v1533
  %1682 = vrot.lane.b32.xlu0 %v1676, 110
  %v1683 = vpop.permute.xlu0 %1682
  %1684 = vrot.lane.b32.xlu0 %v1677, 110
  %v1685 = vpop.permute.xlu0 %1684
  %v1688 = vmul.f32 %v1660, %v1683
  %v1689 = vmul.f32 %v1675, %v1685
  %1692 = vrot.lane.b32.xlu0 %v1688, 6
  %v1693 = vpop.permute.xlu0 %1692
  %1694 = vrot.lane.b32.xlu0 %v1689, 6
  %v1695 = vpop.permute.xlu0 %1694
  %v1698 = vadd.f32 %v1678, %v1693
  %v1699 = vadd.f32 %v1679, %v1695
  %v1700 = vtanh.pop %v1698
  %v1701 = vtanh.pop %v1699
  %1704 = vrot.lane.b32.xlu0 %v1700, 6
  %v1705 = vpop.permute.xlu0 %1704
  %1706 = vrot.lane.b32.xlu0 %v1701, 6
  %v1707 = vpop.permute.xlu0 %1706
  %v1710 = vmul.f32 %v1660, %v1705
  %v1711 = vmul.f32 %v1675, %v1707
  %1714 = vrot.lane.b32.xlu0 %v1710, 125
  %v1715 = vpop.permute.xlu0 %1714
  %1716 = vrot.lane.b32.xlu0 %v1711, 125
  %v1717 = vpop.permute.xlu0 %1716
  %v1720 = vadd.f32 %v1710, %v1715
  %v1721 = vadd.f32 %v1711, %v1717
  %1724 = vrot.lane.b32.xlu0 %v1720, 116
  %v1725 = vpop.permute.xlu0 %1724
  %1726 = vrot.lane.b32.xlu0 %v1721, 116
  %v1727 = vpop.permute.xlu0 %1726
  %1730 = vst.msk [vmem:[#allocation2 + $0x50] sm:$0xff] %vm899, %v1725
  %1731 = vst.msk [vmem:[#allocation2 + $0x58] sm:$0xff] %vm899, %v1727
  %1732 = vset.pattern.permute.xlu0 12
  %1733 = vperm.xlu0 %1732, %v1710
  %v1734 = vpop.permute.xlu0 %1733
  %1736 = vset.pattern.permute.xlu0 12
  %1737 = vperm.xlu0 %1736, %v1711
  %v1738 = vpop.permute.xlu0 %1737
  %v1740 = vmul.f32 %v1734, %v715
  %v1741 = vmul.f32 %v1738, %v715
  %1742 = vset.pattern.permute.xlu0 13
  %1743 = vperm.xlu0 %1742, %v1710
  %v1744 = vpop.permute.xlu0 %1743
  %1746 = vset.pattern.permute.xlu0 13
  %1747 = vperm.xlu0 %1746, %v1711
  %v1748 = vpop.permute.xlu0 %1747
  %v1750 = vmul.f32 %v1744, %v716
  %v1751 = vmul.f32 %v1748, %v716
  %1752 = vset.pattern.permute.xlu0 14
  %1753 = vperm.xlu0 %1752, %v1710
  %v1754 = vpop.permute.xlu0 %1753
  %1756 = vset.pattern.permute.xlu0 14
  %1757 = vperm.xlu0 %1756, %v1711
  %v1758 = vpop.permute.xlu0 %1757
  %v1760 = vmul.f32 %v1754, %v717
  %v1761 = vmul.f32 %v1758, %v717
  %1762 = vset.pattern.permute.xlu0 15
  %1763 = vperm.xlu0 %1762, %v1710
  %v1764 = vpop.permute.xlu0 %1763
  %1766 = vset.pattern.permute.xlu0 15
  %1767 = vperm.xlu0 %1766, %v1711
  %v1768 = vpop.permute.xlu0 %1767
  %v1770 = vmul.f32 %v1764, %v718
  %v1771 = vmul.f32 %v1768, %v718
  %1772 = vset.pattern.permute.xlu0 16
  %1773 = vperm.xlu0 %1772, %v1710
  %v1774 = vpop.permute.xlu0 %1773
  %1776 = vset.pattern.permute.xlu0 16
  %1777 = vperm.xlu0 %1776, %v1711
  %v1778 = vpop.permute.xlu0 %1777
  %v1780 = vmul.f32 %v1774, %v719
  %v1781 = vmul.f32 %v1778, %v719
  %1782 = vset.pattern.permute.xlu0 17
  %1783 = vperm.xlu0 %1782, %v1710
  %v1784 = vpop.permute.xlu0 %1783
  %1786 = vset.pattern.permute.xlu0 17
  %1787 = vperm.xlu0 %1786, %v1711
  %v1788 = vpop.permute.xlu0 %1787
  %v1790 = vmul.f32 %v1784, %v720
  %v1791 = vmul.f32 %v1788, %v720
  %v1792 = vadd.f32 %v1740, %v1750
  %v1793 = vadd.f32 %v1741, %v1751
  %v1794 = vadd.f32 %v1760, %v1770
  %v1795 = vadd.f32 %v1761, %v1771
  %v1796 = vadd.f32 %v1780, %v1790
  %v1797 = vadd.f32 %v1781, %v1791
  %v1798 = vadd.f32 %v1792, %v1794
  %v1799 = vadd.f32 %v1793, %v1795
  %v1800 = vadd.f32 %v1798, %v1796
  %v1801 = vadd.f32 %v1799, %v1797
  %v1802 = vadd.f32 %v1800, %v700
  %v1803 = vadd.f32 %v1801, %v704
  %v1804 = vxor.u32 %v1802, 2147483648
  %v1805 = vxor.u32 %v1803, 2147483648
  %v1806 = vmul.f32 %v1804, 1.442695
  %v1807 = vpow.pop %v1806
  %v1808 = vmul.f32 %v1805, 1.442695
  %v1809 = vpow.pop %v1808
  %v1810 = vadd.f32 %v1807, 1.0
  %v1811 = vadd.f32 %v1809, 1.0
  %v1812 = vrcp.pop %v1810
  %v1813 = vmul.f32 %v1810, %v1812
  %v1814 = vsub.f32 1.0, %v1813
  %v1815 = vmul.f32 %v1812, %v1814
  %v1816 = vadd.f32 %v1812, %v1815
  %vm1817 = vweird.f32 %v1810
  %vm1818 = vweird.f32 %v1812
  %vm1819 = vmor %vm1817, %vm1818
  %v1820 = vsel %vm1819, %v1812, %v1816
  %v1821 = vand.u32 2147483647, %v1810
  %vm1822 = vcmp.eq.f32.partialorder %v1821, 8.507059e+37
  %v1823 = vand.u32 %v1810, 2147483648
  %v1824 = vor.u32 1.1754944e-38, %v1823
  %v1825 = vsel %vm1822, %v1824, %v1820
  %v1826 = vmul.f32 1.0, %v1825
  %v1827 = vrcp.pop %v1811
  %v1828 = vmul.f32 %v1811, %v1827
  %v1829 = vsub.f32 1.0, %v1828
  %v1830 = vmul.f32 %v1827, %v1829
  %v1831 = vadd.f32 %v1827, %v1830
  %vm1832 = vweird.f32 %v1811
  %vm1833 = vweird.f32 %v1827
  %vm1834 = vmor %vm1832, %vm1833
  %v1835 = vsel %vm1834, %v1827, %v1831
  %v1836 = vand.u32 2147483647, %v1811
  %vm1837 = vcmp.eq.f32.partialorder %v1836, 8.507059e+37
  %v1838 = vand.u32 %v1811, 2147483648
  %v1839 = vor.u32 1.1754944e-38, %v1838
  %v1840 = vsel %vm1837, %v1839, %v1835
  %v1841 = vmul.f32 1.0, %v1840
  %v1842 = vtanh.pop %v1802
  %v1843 = vtanh.pop %v1803
  %v1844 = vmul.f32 %v1826, %v1698
  %v1845 = vmul.f32 %v1841, %v1699
  %1848 = vrot.lane.b32.xlu0 %v1842, 110
  %v1849 = vpop.permute.xlu0 %1848
  %1850 = vrot.lane.b32.xlu0 %v1843, 110
  %v1851 = vpop.permute.xlu0 %1850
  %v1854 = vmul.f32 %v1826, %v1849
  %v1855 = vmul.f32 %v1841, %v1851
  %1858 = vrot.lane.b32.xlu0 %v1854, 6
  %v1859 = vpop.permute.xlu0 %1858
  %1860 = vrot.lane.b32.xlu0 %v1855, 6
  %v1861 = vpop.permute.xlu0 %1860
  %v1864 = vadd.f32 %v1844, %v1859
  %v1865 = vadd.f32 %v1845, %v1861
  %v1866 = vtanh.pop %v1864
  %v1867 = vtanh.pop %v1865
  %1870 = vrot.lane.b32.xlu0 %v1866, 6
  %v1871 = vpop.permute.xlu0 %1870
  %1872 = vrot.lane.b32.xlu0 %v1867, 6
  %v1873 = vpop.permute.xlu0 %1872
  %v1876 = vmul.f32 %v1826, %v1871
  %v1877 = vmul.f32 %v1841, %v1873
  %1880 = vrot.lane.b32.xlu0 %v1876, 125
  %v1881 = vpop.permute.xlu0 %1880
  %1882 = vrot.lane.b32.xlu0 %v1877, 125
  %v1883 = vpop.permute.xlu0 %1882
  %v1886 = vadd.f32 %v1876, %v1881
  %v1887 = vadd.f32 %v1877, %v1883
  %1890 = vrot.lane.b32.xlu0 %v1886, 116
  %v1891 = vpop.permute.xlu0 %1890
  %1892 = vrot.lane.b32.xlu0 %v1887, 116
  %v1893 = vpop.permute.xlu0 %1892
  %1896 = vst.msk [vmem:[#allocation2 + $0x60] sm:$0xff] %vm899, %v1891
  %1897 = vst.msk [vmem:[#allocation2 + $0x68] sm:$0xff] %vm899, %v1893
  %1898 = vset.pattern.permute.xlu0 12
  %1899 = vperm.xlu0 %1898, %v1876
  %v1900 = vpop.permute.xlu0 %1899
  %1902 = vset.pattern.permute.xlu0 12
  %1903 = vperm.xlu0 %1902, %v1877
  %v1904 = vpop.permute.xlu0 %1903
  %v1906 = vmul.f32 %v1900, %v715
  %v1907 = vmul.f32 %v1904, %v715
  %1908 = vset.pattern.permute.xlu0 13
  %1909 = vperm.xlu0 %1908, %v1876
  %v1910 = vpop.permute.xlu0 %1909
  %1912 = vset.pattern.permute.xlu0 13
  %1913 = vperm.xlu0 %1912, %v1877
  %v1914 = vpop.permute.xlu0 %1913
  %v1916 = vmul.f32 %v1910, %v716
  %v1917 = vmul.f32 %v1914, %v716
  %1918 = vset.pattern.permute.xlu0 14
  %1919 = vperm.xlu0 %1918, %v1876
  %v1920 = vpop.permute.xlu0 %1919
  %1922 = vset.pattern.permute.xlu0 14
  %1923 = vperm.xlu0 %1922, %v1877
  %v1924 = vpop.permute.xlu0 %1923
  %v1926 = vmul.f32 %v1920, %v717
  %v1927 = vmul.f32 %v1924, %v717
  %1928 = vset.pattern.permute.xlu0 15
  %1929 = vperm.xlu0 %1928, %v1876
  %v1930 = vpop.permute.xlu0 %1929
  %1932 = vset.pattern.permute.xlu0 15
  %1933 = vperm.xlu0 %1932, %v1877
  %v1934 = vpop.permute.xlu0 %1933
  %v1936 = vmul.f32 %v1930, %v718
  %v1937 = vmul.f32 %v1934, %v718
  %1938 = vset.pattern.permute.xlu0 16
  %1939 = vperm.xlu0 %1938, %v1876
  %v1940 = vpop.permute.xlu0 %1939
  %1942 = vset.pattern.permute.xlu0 16
  %1943 = vperm.xlu0 %1942, %v1877
  %v1944 = vpop.permute.xlu0 %1943
  %v1946 = vmul.f32 %v1940, %v719
  %v1947 = vmul.f32 %v1944, %v719
  %1948 = vset.pattern.permute.xlu0 17
  %1949 = vperm.xlu0 %1948, %v1876
  %v1950 = vpop.permute.xlu0 %1949
  %1952 = vset.pattern.permute.xlu0 17
  %1953 = vperm.xlu0 %1952, %v1877
  %v1954 = vpop.permute.xlu0 %1953
  %v1956 = vmul.f32 %v1950, %v720
  %v1957 = vmul.f32 %v1954, %v720
  %v1958 = vadd.f32 %v1906, %v1916
  %v1959 = vadd.f32 %v1907, %v1917
  %v1960 = vadd.f32 %v1926, %v1936
  %v1961 = vadd.f32 %v1927, %v1937
  %v1962 = vadd.f32 %v1946, %v1956
  %v1963 = vadd.f32 %v1947, %v1957
  %v1964 = vadd.f32 %v1958, %v1960
  %v1965 = vadd.f32 %v1959, %v1961
  %v1966 = vadd.f32 %v1964, %v1962
  %v1967 = vadd.f32 %v1965, %v1963
  %v1968 = vadd.f32 %v1966, %v708
  %v1969 = vadd.f32 %v1967, %v712
  %v1970 = vxor.u32 %v1968, 2147483648
  %v1971 = vxor.u32 %v1969, 2147483648
  %v1972 = vmul.f32 %v1970, 1.442695
  %v1973 = vpow.pop %v1972
  %v1974 = vmul.f32 %v1971, 1.442695
  %v1975 = vpow.pop %v1974
  %v1976 = vadd.f32 %v1973, 1.0
  %v1977 = vadd.f32 %v1975, 1.0
  %v1978 = vrcp.pop %v1976
  %v1979 = vmul.f32 %v1976, %v1978
  %v1980 = vsub.f32 1.0, %v1979
  %v1981 = vmul.f32 %v1978, %v1980
  %v1982 = vadd.f32 %v1978, %v1981
  %vm1983 = vweird.f32 %v1976
  %vm1984 = vweird.f32 %v1978
  %vm1985 = vmor %vm1983, %vm1984
  %v1986 = vsel %vm1985, %v1978, %v1982
  %v1987 = vand.u32 2147483647, %v1976
  %vm1988 = vcmp.eq.f32.partialorder %v1987, 8.507059e+37
  %v1989 = vand.u32 %v1976, 2147483648
  %v1990 = vor.u32 1.1754944e-38, %v1989
  %v1991 = vsel %vm1988, %v1990, %v1986
  %v1992 = vmul.f32 1.0, %v1991
  %v1993 = vrcp.pop %v1977
  %v1994 = vmul.f32 %v1977, %v1993
  %v1995 = vsub.f32 1.0, %v1994
  %v1996 = vmul.f32 %v1993, %v1995
  %v1997 = vadd.f32 %v1993, %v1996
  %vm1998 = vweird.f32 %v1977
  %vm1999 = vweird.f32 %v1993
  %vm2000 = vmor %vm1998, %vm1999
  %v2001 = vsel %vm2000, %v1993, %v1997
  %v2002 = vand.u32 2147483647, %v1977
  %vm2003 = vcmp.eq.f32.partialorder %v2002, 8.507059e+37
  %v2004 = vand.u32 %v1977, 2147483648
  %v2005 = vor.u32 1.1754944e-38, %v2004
  %v2006 = vsel %vm2003, %v2005, %v2001
  %v2007 = vmul.f32 1.0, %v2006
  %v2008 = vtanh.pop %v1968
  %v2009 = vtanh.pop %v1969
  %v2010 = vmul.f32 %v1992, %v1864
  %v2011 = vmul.f32 %v2007, %v1865
  %2014 = vrot.lane.b32.xlu0 %v2008, 110
  %v2015 = vpop.permute.xlu0 %2014
  %2016 = vrot.lane.b32.xlu0 %v2009, 110
  %v2017 = vpop.permute.xlu0 %2016
  %v2020 = vmul.f32 %v1992, %v2015
  %v2021 = vmul.f32 %v2007, %v2017
  %2024 = vrot.lane.b32.xlu0 %v2020, 6
  %v2025 = vpop.permute.xlu0 %2024
  %2026 = vrot.lane.b32.xlu0 %v2021, 6
  %v2027 = vpop.permute.xlu0 %2026
  %v2030 = vadd.f32 %v2010, %v2025
  %v2031 = vadd.f32 %v2011, %v2027
  %v2032 = vtanh.pop %v2030
  %v2033 = vtanh.pop %v2031
  %2036 = vrot.lane.b32.xlu0 %v2032, 6
  %v2037 = vpop.permute.xlu0 %2036
  %2038 = vrot.lane.b32.xlu0 %v2033, 6
  %v2039 = vpop.permute.xlu0 %2038
  %v2042 = vmul.f32 %v1992, %v2037
  %v2043 = vmul.f32 %v2007, %v2039
  %2046 = vrot.lane.b32.xlu0 %v2042, 125
  %v2047 = vpop.permute.xlu0 %2046
  %2048 = vrot.lane.b32.xlu0 %v2043, 125
  %v2049 = vpop.permute.xlu0 %2048
  %v2052 = vadd.f32 %v2042, %v2047
  %v2053 = vadd.f32 %v2043, %v2049
  %2056 = vrot.lane.b32.xlu0 %v2052, 116
  %v2057 = vpop.permute.xlu0 %2056
  %2058 = vrot.lane.b32.xlu0 %v2053, 116
  %v2059 = vpop.permute.xlu0 %2058
  %2062 = vst.msk [vmem:[#allocation2 + $0x70] sm:$0xff] %vm899, %v2057
  %2063 = vst.msk [vmem:[#allocation2 + $0x78] sm:$0xff] %vm899, %v2059
  %v2064 = vld [vmem:[#allocation2] sm:$0xff]
  %v2065 = vld [vmem:[#allocation2 + $0x8] sm:$0xff]
  %v2066 = vld [vmem:[#allocation2 + $0x10] sm:$0xff]
  %v2067 = vld [vmem:[#allocation2 + $0x18] sm:$0xff]
  %v2068 = vld [vmem:[#allocation2 + $0x20] sm:$0xff]
  %v2069 = vld [vmem:[#allocation2 + $0x28] sm:$0xff]
  %v2070 = vld [vmem:[#allocation2 + $0x30] sm:$0xff]
  %v2071 = vld [vmem:[#allocation2 + $0x38] sm:$0xff]
  %v2072 = vld [vmem:[#allocation2 + $0x40] sm:$0xff]
  %v2073 = vld [vmem:[#allocation2 + $0x48] sm:$0xff]
  %v2074 = vld [vmem:[#allocation2 + $0x50] sm:$0xff]
  %v2075 = vld [vmem:[#allocation2 + $0x58] sm:$0xff]
  %v2076 = vld [vmem:[#allocation2 + $0x60] sm:$0xff]
  %v2077 = vld [vmem:[#allocation2 + $0x68] sm:$0xff]
  %v2078 = vld [vmem:[#allocation2 + $0x70] sm:$0xff]
  %v2079 = vld [vmem:[#allocation2 + $0x78] sm:$0xff]
  %v2080 = vld [vmem:[%s6] sm:$0x7]
  %v2081 = vld [vmem:[%s7] sm:$0x1]
  %v2083 = vperm.slane %v2081, 0
  %v2086 = vsel %vm899, %v2064, 0
  %v2089 = vsel %vm899, %v2065, 0
  %v2092 = vsel %vm899, %v2066, 0
  %v2095 = vsel %vm899, %v2067, 0
  %v2098 = vsel %vm899, %v2068, 0
  %v2101 = vsel %vm899, %v2069, 0
  %v2104 = vsel %vm899, %v2070, 0
  %v2107 = vsel %vm899, %v2071, 0
  %v2110 = vsel %vm899, %v2072, 0
  %v2113 = vsel %vm899, %v2073, 0
  %v2116 = vsel %vm899, %v2074, 0
  %v2119 = vsel %vm899, %v2075, 0
  %v2122 = vsel %vm899, %v2076, 0
  %v2125 = vsel %vm899, %v2077, 0
  %v2128 = vsel %vm899, %v2078, 0
  %v2131 = vsel %vm899, %v2079, 0
  %vm2133 = vcmask 1042432
  %v2135 = vsel %vm2133, %v2080, 0
  %2137 = vmatpush.msra.mxu0 0.0
  %2138 = vmatpush.msra.mxu0 0.0
  %2139 = vmatpush.msra.mxu0 0.0
  %2140 = vmatpush.msra.mxu0 0.0
  %2141 = vmatpush.msra.mxu0 0.0
  %2142 = vmatpush.msra.mxu0 0.0
  %2143 = vmatpush.msra.mxu0 0.0
  %2144 = vmatpush.msra.mxu0 0.0
  %2145 = vmatpush.msra.mxu0 0.0
  %2146 = vmatpush.msra.mxu0 0.0
  %2147 = vmatpush.msra.mxu0 0.0
  %2148 = vmatpush.msra.mxu0 0.0
  %2149 = vmatpush.msra.mxu0 0.0
  %2150 = vmatpush.msra.mxu0 0.0
  %2151 = vmatpush.msra.mxu0 0.0
  %v2152 = vand.u32 %v2135, 4294901760
  %2153 = vmatpush.msra.mxu0 %v2152
  %v2154 = vand.u32 %v2086, 4294901760
  %v2155 = vsub.f32 %v2086, %v2154
  %v2156 = vand.u32 %v2155, 4294901760
  %v2157 = vsub.f32 %v2155, %v2156
  %v2158 = vand.u32 %v2157, 4294901760
  %2159 = vmatmul.f32.gmra.mxu0 %v2158
  %v2160 = vpop.f32.mrf.mxu0
  %v2161 = vadd.f32 %v2083, %v2160
  %v2162 = vand.u32 %v2089, 4294901760
  %v2163 = vsub.f32 %v2089, %v2162
  %v2164 = vand.u32 %v2163, 4294901760
  %v2165 = vsub.f32 %v2163, %v2164
  %v2166 = vand.u32 %v2165, 4294901760
  %2167 = vmatmul.f32.gmra.mxu0 %v2166
  %v2168 = vpop.f32.mrf.mxu0
  %v2169 = vadd.f32 %v2083, %v2168
  %v2170 = vand.u32 %v2092, 4294901760
  %v2171 = vsub.f32 %v2092, %v2170
  %v2172 = vand.u32 %v2171, 4294901760
  %v2173 = vsub.f32 %v2171, %v2172
  %v2174 = vand.u32 %v2173, 4294901760
  %2175 = vmatmul.f32.gmra.mxu0 %v2174
  %v2176 = vpop.f32.mrf.mxu0
  %v2177 = vadd.f32 %v2083, %v2176
  %v2178 = vand.u32 %v2095, 4294901760
  %v2179 = vsub.f32 %v2095, %v2178
  %v2180 = vand.u32 %v2179, 4294901760
  %v2181 = vsub.f32 %v2179, %v2180
  %v2182 = vand.u32 %v2181, 4294901760
  %2183 = vmatmul.f32.gmra.mxu0 %v2182
  %v2184 = vpop.f32.mrf.mxu0
  %v2185 = vadd.f32 %v2083, %v2184
  %v2186 = vand.u32 %v2098, 4294901760
  %v2187 = vsub.f32 %v2098, %v2186
  %v2188 = vand.u32 %v2187, 4294901760
  %v2189 = vsub.f32 %v2187, %v2188
  %v2190 = vand.u32 %v2189, 4294901760
  %2191 = vmatmul.f32.gmra.mxu0 %v2190
  %v2192 = vpop.f32.mrf.mxu0
  %v2193 = vadd.f32 %v2083, %v2192
  %v2194 = vand.u32 %v2101, 4294901760
  %v2195 = vsub.f32 %v2101, %v2194
  %v2196 = vand.u32 %v2195, 4294901760
  %v2197 = vsub.f32 %v2195, %v2196
  %v2198 = vand.u32 %v2197, 4294901760
  %2199 = vmatmul.f32.gmra.mxu0 %v2198
  %v2200 = vpop.f32.mrf.mxu0
  %v2201 = vadd.f32 %v2083, %v2200
  %v2202 = vand.u32 %v2104, 4294901760
  %v2203 = vsub.f32 %v2104, %v2202
  %v2204 = vand.u32 %v2203, 4294901760
  %v2205 = vsub.f32 %v2203, %v2204
  %v2206 = vand.u32 %v2205, 4294901760
  %2207 = vmatmul.f32.gmra.mxu0 %v2206
  %v2208 = vpop.f32.mrf.mxu0
  %v2209 = vadd.f32 %v2083, %v2208
  %v2210 = vand.u32 %v2107, 4294901760
  %v2211 = vsub.f32 %v2107, %v2210
  %v2212 = vand.u32 %v2211, 4294901760
  %v2213 = vsub.f32 %v2211, %v2212
  %v2214 = vand.u32 %v2213, 4294901760
  %2215 = vmatmul.f32.gmra.mxu0 %v2214
  %v2216 = vpop.f32.mrf.mxu0
  %v2217 = vadd.f32 %v2083, %v2216
  %v2218 = vand.u32 %v2110, 4294901760
  %v2219 = vsub.f32 %v2110, %v2218
  %v2220 = vand.u32 %v2219, 4294901760
  %v2221 = vsub.f32 %v2219, %v2220
  %v2222 = vand.u32 %v2221, 4294901760
  %2223 = vmatmul.f32.gmra.mxu0 %v2222
  %v2224 = vpop.f32.mrf.mxu0
  %v2225 = vadd.f32 %v2083, %v2224
  %v2226 = vand.u32 %v2113, 4294901760
  %v2227 = vsub.f32 %v2113, %v2226
  %v2228 = vand.u32 %v2227, 4294901760
  %v2229 = vsub.f32 %v2227, %v2228
  %v2230 = vand.u32 %v2229, 4294901760
  %2231 = vmatmul.f32.gmra.mxu0 %v2230
  %v2232 = vpop.f32.mrf.mxu0
  %v2233 = vadd.f32 %v2083, %v2232
  %v2234 = vand.u32 %v2116, 4294901760
  %v2235 = vsub.f32 %v2116, %v2234
  %v2236 = vand.u32 %v2235, 4294901760
  %v2237 = vsub.f32 %v2235, %v2236
  %v2238 = vand.u32 %v2237, 4294901760
  %2239 = vmatmul.f32.gmra.mxu0 %v2238
  %v2240 = vpop.f32.mrf.mxu0
  %v2241 = vadd.f32 %v2083, %v2240
  %v2242 = vand.u32 %v2119, 4294901760
  %v2243 = vsub.f32 %v2119, %v2242
  %v2244 = vand.u32 %v2243, 4294901760
  %v2245 = vsub.f32 %v2243, %v2244
  %v2246 = vand.u32 %v2245, 4294901760
  %2247 = vmatmul.f32.gmra.mxu0 %v2246
  %v2248 = vpop.f32.mrf.mxu0
  %v2249 = vadd.f32 %v2083, %v2248
  %v2250 = vand.u32 %v2122, 4294901760
  %v2251 = vsub.f32 %v2122, %v2250
  %v2252 = vand.u32 %v2251, 4294901760
  %v2253 = vsub.f32 %v2251, %v2252
  %v2254 = vand.u32 %v2253, 4294901760
  %2255 = vmatmul.f32.gmra.mxu0 %v2254
  %v2256 = vpop.f32.mrf.mxu0
  %v2257 = vadd.f32 %v2083, %v2256
  %v2258 = vand.u32 %v2125, 4294901760
  %v2259 = vsub.f32 %v2125, %v2258
  %v2260 = vand.u32 %v2259, 4294901760
  %v2261 = vsub.f32 %v2259, %v2260
  %v2262 = vand.u32 %v2261, 4294901760
  %2263 = vmatmul.f32.gmra.mxu0 %v2262
  %v2264 = vpop.f32.mrf.mxu0
  %v2265 = vadd.f32 %v2083, %v2264
  %v2266 = vand.u32 %v2128, 4294901760
  %v2267 = vsub.f32 %v2128, %v2266
  %v2268 = vand.u32 %v2267, 4294901760
  %v2269 = vsub.f32 %v2267, %v2268
  %v2270 = vand.u32 %v2269, 4294901760
  %2271 = vmatmul.f32.gmra.mxu0 %v2270
  %v2272 = vpop.f32.mrf.mxu0
  %v2273 = vadd.f32 %v2083, %v2272
  %v2274 = vand.u32 %v2131, 4294901760
  %v2275 = vsub.f32 %v2131, %v2274
  %v2276 = vand.u32 %v2275, 4294901760
  %v2277 = vsub.f32 %v2275, %v2276
  %v2278 = vand.u32 %v2277, 4294901760
  %2279 = vmatmul.f32.gmra.mxu0 %v2278
  %v2280 = vpop.f32.mrf.mxu0
  %v2281 = vadd.f32 %v2083, %v2280
  %2282 = vdwg.mxu0
  %2283 = vmatpush.msra.mxu0 0.0
  %2284 = vmatpush.msra.mxu0 0.0
  %2285 = vmatpush.msra.mxu0 0.0
  %2286 = vmatpush.msra.mxu0 0.0
  %2287 = vmatpush.msra.mxu0 0.0
  %2288 = vmatpush.msra.mxu0 0.0
  %2289 = vmatpush.msra.mxu0 0.0
  %2290 = vmatpush.msra.mxu0 0.0
  %2291 = vmatpush.msra.mxu0 0.0
  %2292 = vmatpush.msra.mxu0 0.0
  %2293 = vmatpush.msra.mxu0 0.0
  %2294 = vmatpush.msra.mxu0 0.0
  %2295 = vmatpush.msra.mxu0 0.0
  %2296 = vmatpush.msra.mxu0 0.0
  %2297 = vmatpush.msra.mxu0 0.0
  %v2298 = vand.u32 %v2135, 4294901760
  %v2299 = vsub.f32 %v2135, %v2298
  %v2300 = vand.u32 %v2299, 4294901760
  %v2301 = vsub.f32 %v2299, %v2300
  %v2302 = vand.u32 %v2301, 4294901760
  %2303 = vmatpush.msra.mxu0 %v2302
  %v2304 = vand.u32 %v2086, 4294901760
  %2305 = vmatmul.f32.gmra.mxu0 %v2304
  %v2306 = vpop.f32.mrf.mxu0
  %v2307 = vadd.f32 %v2161, %v2306
  %v2308 = vand.u32 %v2089, 4294901760
  %2309 = vmatmul.f32.gmra.mxu0 %v2308
  %v2310 = vpop.f32.mrf.mxu0
  %v2311 = vadd.f32 %v2169, %v2310
  %v2312 = vand.u32 %v2092, 4294901760
  %2313 = vmatmul.f32.gmra.mxu0 %v2312
  %v2314 = vpop.f32.mrf.mxu0
  %v2315 = vadd.f32 %v2177, %v2314
  %v2316 = vand.u32 %v2095, 4294901760
  %2317 = vmatmul.f32.gmra.mxu0 %v2316
  %v2318 = vpop.f32.mrf.mxu0
  %v2319 = vadd.f32 %v2185, %v2318
  %v2320 = vand.u32 %v2098, 4294901760
  %2321 = vmatmul.f32.gmra.mxu0 %v2320
  %v2322 = vpop.f32.mrf.mxu0
  %v2323 = vadd.f32 %v2193, %v2322
  %v2324 = vand.u32 %v2101, 4294901760
  %2325 = vmatmul.f32.gmra.mxu0 %v2324
  %v2326 = vpop.f32.mrf.mxu0
  %v2327 = vadd.f32 %v2201, %v2326
  %v2328 = vand.u32 %v2104, 4294901760
  %2329 = vmatmul.f32.gmra.mxu0 %v2328
  %v2330 = vpop.f32.mrf.mxu0
  %v2331 = vadd.f32 %v2209, %v2330
  %v2332 = vand.u32 %v2107, 4294901760
  %2333 = vmatmul.f32.gmra.mxu0 %v2332
  %v2334 = vpop.f32.mrf.mxu0
  %v2335 = vadd.f32 %v2217, %v2334
  %v2336 = vand.u32 %v2110, 4294901760
  %2337 = vmatmul.f32.gmra.mxu0 %v2336
  %v2338 = vpop.f32.mrf.mxu0
  %v2339 = vadd.f32 %v2225, %v2338
  %v2340 = vand.u32 %v2113, 4294901760
  %2341 = vmatmul.f32.gmra.mxu0 %v2340
  %v2342 = vpop.f32.mrf.mxu0
  %v2343 = vadd.f32 %v2233, %v2342
  %v2344 = vand.u32 %v2116, 4294901760
  %2345 = vmatmul.f32.gmra.mxu0 %v2344
  %v2346 = vpop.f32.mrf.mxu0
  %v2347 = vadd.f32 %v2241, %v2346
  %v2348 = vand.u32 %v2119, 4294901760
  %2349 = vmatmul.f32.gmra.mxu0 %v2348
  %v2350 = vpop.f32.mrf.mxu0
  %v2351 = vadd.f32 %v2249, %v2350
  %v2352 = vand.u32 %v2122, 4294901760
  %2353 = vmatmul.f32.gmra.mxu0 %v2352
  %v2354 = vpop.f32.mrf.mxu0
  %v2355 = vadd.f32 %v2257, %v2354
  %v2356 = vand.u32 %v2125, 4294901760
  %2357 = vmatmul.f32.gmra.mxu0 %v2356
  %v2358 = vpop.f32.mrf.mxu0
  %v2359 = vadd.f32 %v2265, %v2358
  %v2360 = vand.u32 %v2128, 4294901760
  %2361 = vmatmul.f32.gmra.mxu0 %v2360
  %v2362 = vpop.f32.mrf.mxu0
  %v2363 = vadd.f32 %v2273, %v2362
  %v2364 = vand.u32 %v2131, 4294901760
  %2365 = vmatmul.f32.gmra.mxu0 %v2364
  %v2366 = vpop.f32.mrf.mxu0
  %v2367 = vadd.f32 %v2281, %v2366
  %2368 = vdwg.mxu0
  %2369 = vmatpush.msra.mxu0 0.0
  %2370 = vmatpush.msra.mxu0 0.0
  %2371 = vmatpush.msra.mxu0 0.0
  %2372 = vmatpush.msra.mxu0 0.0
  %2373 = vmatpush.msra.mxu0 0.0
  %2374 = vmatpush.msra.mxu0 0.0
  %2375 = vmatpush.msra.mxu0 0.0
  %2376 = vmatpush.msra.mxu0 0.0
  %2377 = vmatpush.msra.mxu0 0.0
  %2378 = vmatpush.msra.mxu0 0.0
  %2379 = vmatpush.msra.mxu0 0.0
  %2380 = vmatpush.msra.mxu0 0.0
  %2381 = vmatpush.msra.mxu0 0.0
  %2382 = vmatpush.msra.mxu0 0.0
  %2383 = vmatpush.msra.mxu0 0.0
  %v2384 = vand.u32 %v2135, 4294901760
  %v2385 = vsub.f32 %v2135, %v2384
  %2386 = vmatpush.msra.mxu0 %v2385
  %v2387 = vand.u32 %v2086, 4294901760
  %v2388 = vsub.f32 %v2086, %v2387
  %2389 = vmatmul.f32.gmra.mxu0 %v2388
  %v2390 = vpop.f32.mrf.mxu0
  %v2391 = vadd.f32 %v2307, %v2390
  %v2392 = vand.u32 %v2089, 4294901760
  %v2393 = vsub.f32 %v2089, %v2392
  %2394 = vmatmul.f32.gmra.mxu0 %v2393
  %v2395 = vpop.f32.mrf.mxu0
  %v2396 = vadd.f32 %v2311, %v2395
  %v2397 = vand.u32 %v2092, 4294901760
  %v2398 = vsub.f32 %v2092, %v2397
  %2399 = vmatmul.f32.gmra.mxu0 %v2398
  %v2400 = vpop.f32.mrf.mxu0
  %v2401 = vadd.f32 %v2315, %v2400
  %v2402 = vand.u32 %v2095, 4294901760
  %v2403 = vsub.f32 %v2095, %v2402
  %2404 = vmatmul.f32.gmra.mxu0 %v2403
  %v2405 = vpop.f32.mrf.mxu0
  %v2406 = vadd.f32 %v2319, %v2405
  %v2407 = vand.u32 %v2098, 4294901760
  %v2408 = vsub.f32 %v2098, %v2407
  %2409 = vmatmul.f32.gmra.mxu0 %v2408
  %v2410 = vpop.f32.mrf.mxu0
  %v2411 = vadd.f32 %v2323, %v2410
  %v2412 = vand.u32 %v2101, 4294901760
  %v2413 = vsub.f32 %v2101, %v2412
  %2414 = vmatmul.f32.gmra.mxu0 %v2413
  %v2415 = vpop.f32.mrf.mxu0
  %v2416 = vadd.f32 %v2327, %v2415
  %v2417 = vand.u32 %v2104, 4294901760
  %v2418 = vsub.f32 %v2104, %v2417
  %2419 = vmatmul.f32.gmra.mxu0 %v2418
  %v2420 = vpop.f32.mrf.mxu0
  %v2421 = vadd.f32 %v2331, %v2420
  %v2422 = vand.u32 %v2107, 4294901760
  %v2423 = vsub.f32 %v2107, %v2422
  %2424 = vmatmul.f32.gmra.mxu0 %v2423
  %v2425 = vpop.f32.mrf.mxu0
  %v2426 = vadd.f32 %v2335, %v2425
  %v2427 = vand.u32 %v2110, 4294901760
  %v2428 = vsub.f32 %v2110, %v2427
  %2429 = vmatmul.f32.gmra.mxu0 %v2428
  %v2430 = vpop.f32.mrf.mxu0
  %v2431 = vadd.f32 %v2339, %v2430
  %v2432 = vand.u32 %v2113, 4294901760
  %v2433 = vsub.f32 %v2113, %v2432
  %2434 = vmatmul.f32.gmra.mxu0 %v2433
  %v2435 = vpop.f32.mrf.mxu0
  %v2436 = vadd.f32 %v2343, %v2435
  %v2437 = vand.u32 %v2116, 4294901760
  %v2438 = vsub.f32 %v2116, %v2437
  %2439 = vmatmul.f32.gmra.mxu0 %v2438
  %v2440 = vpop.f32.mrf.mxu0
  %v2441 = vadd.f32 %v2347, %v2440
  %v2442 = vand.u32 %v2119, 4294901760
  %v2443 = vsub.f32 %v2119, %v2442
  %2444 = vmatmul.f32.gmra.mxu0 %v2443
  %v2445 = vpop.f32.mrf.mxu0
  %v2446 = vadd.f32 %v2351, %v2445
  %v2447 = vand.u32 %v2122, 4294901760
  %v2448 = vsub.f32 %v2122, %v2447
  %2449 = vmatmul.f32.gmra.mxu0 %v2448
  %v2450 = vpop.f32.mrf.mxu0
  %v2451 = vadd.f32 %v2355, %v2450
  %v2452 = vand.u32 %v2125, 4294901760
  %v2453 = vsub.f32 %v2125, %v2452
  %2454 = vmatmul.f32.gmra.mxu0 %v2453
  %v2455 = vpop.f32.mrf.mxu0
  %v2456 = vadd.f32 %v2359, %v2455
  %v2457 = vand.u32 %v2128, 4294901760
  %v2458 = vsub.f32 %v2128, %v2457
  %2459 = vmatmul.f32.gmra.mxu0 %v2458
  %v2460 = vpop.f32.mrf.mxu0
  %v2461 = vadd.f32 %v2363, %v2460
  %v2462 = vand.u32 %v2131, 4294901760
  %v2463 = vsub.f32 %v2131, %v2462
  %2464 = vmatmul.f32.gmra.mxu0 %v2463
  %v2465 = vpop.f32.mrf.mxu0
  %v2466 = vadd.f32 %v2367, %v2465
  %2467 = vdwg.mxu0
  %2468 = vmatpush.msra.mxu0 0.0
  %2469 = vmatpush.msra.mxu0 0.0
  %2470 = vmatpush.msra.mxu0 0.0
  %2471 = vmatpush.msra.mxu0 0.0
  %2472 = vmatpush.msra.mxu0 0.0
  %2473 = vmatpush.msra.mxu0 0.0
  %2474 = vmatpush.msra.mxu0 0.0
  %2475 = vmatpush.msra.mxu0 0.0
  %2476 = vmatpush.msra.mxu0 0.0
  %2477 = vmatpush.msra.mxu0 0.0
  %2478 = vmatpush.msra.mxu0 0.0
  %2479 = vmatpush.msra.mxu0 0.0
  %2480 = vmatpush.msra.mxu0 0.0
  %2481 = vmatpush.msra.mxu0 0.0
  %2482 = vmatpush.msra.mxu0 0.0
  %v2483 = vand.u32 %v2135, 4294901760
  %2484 = vmatpush.msra.mxu0 %v2483
  %v2485 = vand.u32 %v2086, 4294901760
  %v2486 = vsub.f32 %v2086, %v2485
  %v2487 = vand.u32 %v2486, 4294901760
  %2488 = vmatmul.f32.gmra.mxu0 %v2487
  %v2489 = vpop.f32.mrf.mxu0
  %v2490 = vadd.f32 %v2391, %v2489
  %v2491 = vand.u32 %v2089, 4294901760
  %v2492 = vsub.f32 %v2089, %v2491
  %v2493 = vand.u32 %v2492, 4294901760
  %2494 = vmatmul.f32.gmra.mxu0 %v2493
  %v2495 = vpop.f32.mrf.mxu0
  %v2496 = vadd.f32 %v2396, %v2495
  %v2497 = vand.u32 %v2092, 4294901760
  %v2498 = vsub.f32 %v2092, %v2497
  %v2499 = vand.u32 %v2498, 4294901760
  %2500 = vmatmul.f32.gmra.mxu0 %v2499
  %v2501 = vpop.f32.mrf.mxu0
  %v2502 = vadd.f32 %v2401, %v2501
  %v2503 = vand.u32 %v2095, 4294901760
  %v2504 = vsub.f32 %v2095, %v2503
  %v2505 = vand.u32 %v2504, 4294901760
  %2506 = vmatmul.f32.gmra.mxu0 %v2505
  %v2507 = vpop.f32.mrf.mxu0
  %v2508 = vadd.f32 %v2406, %v2507
  %v2509 = vand.u32 %v2098, 4294901760
  %v2510 = vsub.f32 %v2098, %v2509
  %v2511 = vand.u32 %v2510, 4294901760
  %2512 = vmatmul.f32.gmra.mxu0 %v2511
  %v2513 = vpop.f32.mrf.mxu0
  %v2514 = vadd.f32 %v2411, %v2513
  %v2515 = vand.u32 %v2101, 4294901760
  %v2516 = vsub.f32 %v2101, %v2515
  %v2517 = vand.u32 %v2516, 4294901760
  %2518 = vmatmul.f32.gmra.mxu0 %v2517
  %v2519 = vpop.f32.mrf.mxu0
  %v2520 = vadd.f32 %v2416, %v2519
  %v2521 = vand.u32 %v2104, 4294901760
  %v2522 = vsub.f32 %v2104, %v2521
  %v2523 = vand.u32 %v2522, 4294901760
  %2524 = vmatmul.f32.gmra.mxu0 %v2523
  %v2525 = vpop.f32.mrf.mxu0
  %v2526 = vadd.f32 %v2421, %v2525
  %v2527 = vand.u32 %v2107, 4294901760
  %v2528 = vsub.f32 %v2107, %v2527
  %v2529 = vand.u32 %v2528, 4294901760
  %2530 = vmatmul.f32.gmra.mxu0 %v2529
  %v2531 = vpop.f32.mrf.mxu0
  %v2532 = vadd.f32 %v2426, %v2531
  %v2533 = vand.u32 %v2110, 4294901760
  %v2534 = vsub.f32 %v2110, %v2533
  %v2535 = vand.u32 %v2534, 4294901760
  %2536 = vmatmul.f32.gmra.mxu0 %v2535
  %v2537 = vpop.f32.mrf.mxu0
  %v2538 = vadd.f32 %v2431, %v2537
  %v2539 = vand.u32 %v2113, 4294901760
  %v2540 = vsub.f32 %v2113, %v2539
  %v2541 = vand.u32 %v2540, 4294901760
  %2542 = vmatmul.f32.gmra.mxu0 %v2541
  %v2543 = vpop.f32.mrf.mxu0
  %v2544 = vadd.f32 %v2436, %v2543
  %v2545 = vand.u32 %v2116, 4294901760
  %v2546 = vsub.f32 %v2116, %v2545
  %v2547 = vand.u32 %v2546, 4294901760
  %2548 = vmatmul.f32.gmra.mxu0 %v2547
  %v2549 = vpop.f32.mrf.mxu0
  %v2550 = vadd.f32 %v2441, %v2549
  %v2551 = vand.u32 %v2119, 4294901760
  %v2552 = vsub.f32 %v2119, %v2551
  %v2553 = vand.u32 %v2552, 4294901760
  %2554 = vmatmul.f32.gmra.mxu0 %v2553
  %v2555 = vpop.f32.mrf.mxu0
  %v2556 = vadd.f32 %v2446, %v2555
  %v2557 = vand.u32 %v2122, 4294901760
  %v2558 = vsub.f32 %v2122, %v2557
  %v2559 = vand.u32 %v2558, 4294901760
  %2560 = vmatmul.f32.gmra.mxu0 %v2559
  %v2561 = vpop.f32.mrf.mxu0
  %v2562 = vadd.f32 %v2451, %v2561
  %v2563 = vand.u32 %v2125, 4294901760
  %v2564 = vsub.f32 %v2125, %v2563
  %v2565 = vand.u32 %v2564, 4294901760
  %2566 = vmatmul.f32.gmra.mxu0 %v2565
  %v2567 = vpop.f32.mrf.mxu0
  %v2568 = vadd.f32 %v2456, %v2567
  %v2569 = vand.u32 %v2128, 4294901760
  %v2570 = vsub.f32 %v2128, %v2569
  %v2571 = vand.u32 %v2570, 4294901760
  %2572 = vmatmul.f32.gmra.mxu0 %v2571
  %v2573 = vpop.f32.mrf.mxu0
  %v2574 = vadd.f32 %v2461, %v2573
  %v2575 = vand.u32 %v2131, 4294901760
  %v2576 = vsub.f32 %v2131, %v2575
  %v2577 = vand.u32 %v2576, 4294901760
  %2578 = vmatmul.f32.gmra.mxu0 %v2577
  %v2579 = vpop.f32.mrf.mxu0
  %v2580 = vadd.f32 %v2466, %v2579
  %2581 = vdwg.mxu0
  %2582 = vmatpush.msra.mxu0 0.0
  %2583 = vmatpush.msra.mxu0 0.0
  %2584 = vmatpush.msra.mxu0 0.0
  %2585 = vmatpush.msra.mxu0 0.0
  %2586 = vmatpush.msra.mxu0 0.0
  %2587 = vmatpush.msra.mxu0 0.0
  %2588 = vmatpush.msra.mxu0 0.0
  %2589 = vmatpush.msra.mxu0 0.0
  %2590 = vmatpush.msra.mxu0 0.0
  %2591 = vmatpush.msra.mxu0 0.0
  %2592 = vmatpush.msra.mxu0 0.0
  %2593 = vmatpush.msra.mxu0 0.0
  %2594 = vmatpush.msra.mxu0 0.0
  %2595 = vmatpush.msra.mxu0 0.0
  %2596 = vmatpush.msra.mxu0 0.0
  %v2597 = vand.u32 %v2135, 4294901760
  %v2598 = vsub.f32 %v2135, %v2597
  %v2599 = vand.u32 %v2598, 4294901760
  %2600 = vmatpush.msra.mxu0 %v2599
  %v2601 = vand.u32 %v2086, 4294901760
  %2602 = vmatmul.f32.gmra.mxu0 %v2601
  %v2603 = vpop.f32.mrf.mxu0
  %v2604 = vadd.f32 %v2490, %v2603
  %v2605 = vand.u32 %v2089, 4294901760
  %2606 = vmatmul.f32.gmra.mxu0 %v2605
  %v2607 = vpop.f32.mrf.mxu0
  %v2608 = vadd.f32 %v2496, %v2607
  %v2609 = vand.u32 %v2092, 4294901760
  %2610 = vmatmul.f32.gmra.mxu0 %v2609
  %v2611 = vpop.f32.mrf.mxu0
  %v2612 = vadd.f32 %v2502, %v2611
  %v2613 = vand.u32 %v2095, 4294901760
  %2614 = vmatmul.f32.gmra.mxu0 %v2613
  %v2615 = vpop.f32.mrf.mxu0
  %v2616 = vadd.f32 %v2508, %v2615
  %v2617 = vand.u32 %v2098, 4294901760
  %2618 = vmatmul.f32.gmra.mxu0 %v2617
  %v2619 = vpop.f32.mrf.mxu0
  %v2620 = vadd.f32 %v2514, %v2619
  %v2621 = vand.u32 %v2101, 4294901760
  %2622 = vmatmul.f32.gmra.mxu0 %v2621
  %v2623 = vpop.f32.mrf.mxu0
  %v2624 = vadd.f32 %v2520, %v2623
  %v2625 = vand.u32 %v2104, 4294901760
  %2626 = vmatmul.f32.gmra.mxu0 %v2625
  %v2627 = vpop.f32.mrf.mxu0
  %v2628 = vadd.f32 %v2526, %v2627
  %v2629 = vand.u32 %v2107, 4294901760
  %2630 = vmatmul.f32.gmra.mxu0 %v2629
  %v2631 = vpop.f32.mrf.mxu0
  %v2632 = vadd.f32 %v2532, %v2631
  %v2633 = vand.u32 %v2110, 4294901760
  %2634 = vmatmul.f32.gmra.mxu0 %v2633
  %v2635 = vpop.f32.mrf.mxu0
  %v2636 = vadd.f32 %v2538, %v2635
  %v2637 = vand.u32 %v2113, 4294901760
  %2638 = vmatmul.f32.gmra.mxu0 %v2637
  %v2639 = vpop.f32.mrf.mxu0
  %v2640 = vadd.f32 %v2544, %v2639
  %v2641 = vand.u32 %v2116, 4294901760
  %2642 = vmatmul.f32.gmra.mxu0 %v2641
  %v2643 = vpop.f32.mrf.mxu0
  %v2644 = vadd.f32 %v2550, %v2643
  %v2645 = vand.u32 %v2119, 4294901760
  %2646 = vmatmul.f32.gmra.mxu0 %v2645
  %v2647 = vpop.f32.mrf.mxu0
  %v2648 = vadd.f32 %v2556, %v2647
  %v2649 = vand.u32 %v2122, 4294901760
  %2650 = vmatmul.f32.gmra.mxu0 %v2649
  %v2651 = vpop.f32.mrf.mxu0
  %v2652 = vadd.f32 %v2562, %v2651
  %v2653 = vand.u32 %v2125, 4294901760
  %2654 = vmatmul.f32.gmra.mxu0 %v2653
  %v2655 = vpop.f32.mrf.mxu0
  %v2656 = vadd.f32 %v2568, %v2655
  %v2657 = vand.u32 %v2128, 4294901760
  %2658 = vmatmul.f32.gmra.mxu0 %v2657
  %v2659 = vpop.f32.mrf.mxu0
  %v2660 = vadd.f32 %v2574, %v2659
  %v2661 = vand.u32 %v2131, 4294901760
  %2662 = vmatmul.f32.gmra.mxu0 %v2661
  %v2663 = vpop.f32.mrf.mxu0
  %v2664 = vadd.f32 %v2580, %v2663
  %2665 = vdwg.mxu0
  %2666 = vmatpush.msra.mxu0 0.0
  %2667 = vmatpush.msra.mxu0 0.0
  %2668 = vmatpush.msra.mxu0 0.0
  %2669 = vmatpush.msra.mxu0 0.0
  %2670 = vmatpush.msra.mxu0 0.0
  %2671 = vmatpush.msra.mxu0 0.0
  %2672 = vmatpush.msra.mxu0 0.0
  %2673 = vmatpush.msra.mxu0 0.0
  %2674 = vmatpush.msra.mxu0 0.0
  %2675 = vmatpush.msra.mxu0 0.0
  %2676 = vmatpush.msra.mxu0 0.0
  %2677 = vmatpush.msra.mxu0 0.0
  %2678 = vmatpush.msra.mxu0 0.0
  %2679 = vmatpush.msra.mxu0 0.0
  %2680 = vmatpush.msra.mxu0 0.0
  %v2681 = vand.u32 %v2135, 4294901760
  %2682 = vmatpush.msra.mxu0 %v2681
  %v2683 = vand.u32 %v2086, 4294901760
  %2684 = vmatmul.f32.gmra.mxu0 %v2683
  %v2685 = vpop.f32.mrf.mxu0
  %v2686 = vadd.f32 %v2604, %v2685
  %v2687 = vand.u32 %v2089, 4294901760
  %2688 = vmatmul.f32.gmra.mxu0 %v2687
  %v2689 = vpop.f32.mrf.mxu0
  %v2690 = vadd.f32 %v2608, %v2689
  %v2691 = vand.u32 %v2092, 4294901760
  %2692 = vmatmul.f32.gmra.mxu0 %v2691
  %v2693 = vpop.f32.mrf.mxu0
  %v2694 = vadd.f32 %v2612, %v2693
  %v2695 = vand.u32 %v2095, 4294901760
  %2696 = vmatmul.f32.gmra.mxu0 %v2695
  %v2697 = vpop.f32.mrf.mxu0
  %v2698 = vadd.f32 %v2616, %v2697
  %v2699 = vand.u32 %v2098, 4294901760
  %2700 = vmatmul.f32.gmra.mxu0 %v2699
  %v2701 = vpop.f32.mrf.mxu0
  %v2702 = vadd.f32 %v2620, %v2701
  %v2703 = vand.u32 %v2101, 4294901760
  %2704 = vmatmul.f32.gmra.mxu0 %v2703
  %v2705 = vpop.f32.mrf.mxu0
  %v2706 = vadd.f32 %v2624, %v2705
  %v2707 = vand.u32 %v2104, 4294901760
  %2708 = vmatmul.f32.gmra.mxu0 %v2707
  %v2709 = vpop.f32.mrf.mxu0
  %v2710 = vadd.f32 %v2628, %v2709
  %v2711 = vand.u32 %v2107, 4294901760
  %2712 = vmatmul.f32.gmra.mxu0 %v2711
  %v2713 = vpop.f32.mrf.mxu0
  %v2714 = vadd.f32 %v2632, %v2713
  %v2715 = vand.u32 %v2110, 4294901760
  %2716 = vmatmul.f32.gmra.mxu0 %v2715
  %v2717 = vpop.f32.mrf.mxu0
  %v2718 = vadd.f32 %v2636, %v2717
  %v2719 = vand.u32 %v2113, 4294901760
  %2720 = vmatmul.f32.gmra.mxu0 %v2719
  %v2721 = vpop.f32.mrf.mxu0
  %v2722 = vadd.f32 %v2640, %v2721
  %v2723 = vand.u32 %v2116, 4294901760
  %2724 = vmatmul.f32.gmra.mxu0 %v2723
  %v2725 = vpop.f32.mrf.mxu0
  %v2726 = vadd.f32 %v2644, %v2725
  %v2727 = vand.u32 %v2119, 4294901760
  %2728 = vmatmul.f32.gmra.mxu0 %v2727
  %v2729 = vpop.f32.mrf.mxu0
  %v2730 = vadd.f32 %v2648, %v2729
  %v2731 = vand.u32 %v2122, 4294901760
  %2732 = vmatmul.f32.gmra.mxu0 %v2731
  %v2733 = vpop.f32.mrf.mxu0
  %v2734 = vadd.f32 %v2652, %v2733
  %v2735 = vand.u32 %v2125, 4294901760
  %2736 = vmatmul.f32.gmra.mxu0 %v2735
  %v2737 = vpop.f32.mrf.mxu0
  %v2738 = vadd.f32 %v2656, %v2737
  %v2739 = vand.u32 %v2128, 4294901760
  %2740 = vmatmul.f32.gmra.mxu0 %v2739
  %v2741 = vpop.f32.mrf.mxu0
  %v2742 = vadd.f32 %v2660, %v2741
  %v2743 = vand.u32 %v2131, 4294901760
  %2744 = vmatmul.f32.gmra.mxu0 %v2743
  %v2745 = vpop.f32.mrf.mxu0
  %v2746 = vadd.f32 %v2664, %v2745
  %2747 = vdwg.mxu0
  %vm2748 = vcmask 15360
  %2749 = vst.msk [vmem:[%s8] sm:$0xff] %vm2748, %v2686
  %2750 = vst.msk [vmem:[%s8 + $0x8] sm:$0xff] %vm2748, %v2690
  %2751 = vst.msk [vmem:[%s8 + $0x10] sm:$0xff] %vm2748, %v2694
  %2752 = vst.msk [vmem:[%s8 + $0x18] sm:$0xff] %vm2748, %v2698
  %2753 = vst.msk [vmem:[%s8 + $0x20] sm:$0xff] %vm2748, %v2702
  %2754 = vst.msk [vmem:[%s8 + $0x28] sm:$0xff] %vm2748, %v2706
  %2755 = vst.msk [vmem:[%s8 + $0x30] sm:$0xff] %vm2748, %v2710
  %2756 = vst.msk [vmem:[%s8 + $0x38] sm:$0xff] %vm2748, %v2714
  %2757 = vst.msk [vmem:[%s8 + $0x40] sm:$0xff] %vm2748, %v2718
  %2758 = vst.msk [vmem:[%s8 + $0x48] sm:$0xff] %vm2748, %v2722
  %2759 = vst.msk [vmem:[%s8 + $0x50] sm:$0xff] %vm2748, %v2726
  %2760 = vst.msk [vmem:[%s8 + $0x58] sm:$0xff] %vm2748, %v2730
  %2761 = vst.msk [vmem:[%s8 + $0x60] sm:$0xff] %vm2748, %v2734
  %2762 = vst.msk [vmem:[%s8 + $0x68] sm:$0xff] %vm2748, %v2738
  %2763 = vst.msk [vmem:[%s8 + $0x70] sm:$0xff] %vm2748, %v2742
  %2764 = vst.msk [vmem:[%s8 + $0x78] sm:$0xff] %vm2748, %v2746
  // Predicated region
  $region34: #{bidirectional_lstm_forward.1} parent=0 // pred_check
    _
  $region35: #{bidirectional_lstm_forward.1} parent=0 // pred_check_branch
    %2766 = sbr.rel (0) target = $region37
  $region36: #{bidirectional_lstm_forward.1} parent=0 // pred_region
    _
  $region37: #{bidirectional_lstm_forward.1} parent=0 // pred_fallthru
    _
  // Predicated region
  $region38: #{bidirectional_lstm_forward.1} parent=0 // pred_check
    _
  $region39: #{bidirectional_lstm_forward.1} parent=0 // pred_check_branch
    %2768 = sbr.rel (0) target = $region41
  $region40: #{bidirectional_lstm_forward.1} parent=0 // pred_region
    _
  $region41: #{bidirectional_lstm_forward.1} parent=0 // pred_fallthru
    _

</llo_original>
